<compile_context>
chip_gen: v6e
topology: v6e:2x2x1
jax: 0.10.0
libtpu: 0.0.40
codegen_flags: <defaults>
</compile_context>

<pallas_src>
import functools

import jax
import jax.numpy as jnp
from jax.experimental import pallas as pl
from jax.experimental.pallas import tpu as pltpu

STATE_DIM = 384
HIDDEN = 512
ACTION_COUNT = 8
BATCH = 8
HEAD_PAD = 128  # lane-padded width of the fused (Q,V) output projection


def _round_up(x, m):
    return ((x + m - 1) // m) * m


def _dueling_kernel(x_ref,
                    w1_ref, b1_ref, w2_ref, b2_ref,
                    wqv1_ref, bqv1_ref, wqv2_ref, bqv2_ref,
                    out_ref, *, action_count):
    bf16 = jnp.bfloat16
    x = x_ref[...].astype(bf16)

    # trunk MLP: 384 -> 512 -> 512, ReLU (bf16 weights, f32 accumulate)
    h1 = jnp.maximum(
        jnp.dot(x, w1_ref[...], preferred_element_type=jnp.float32)
        + b1_ref[...], 0.0)
    h2 = jnp.maximum(
        jnp.dot(h1.astype(bf16), w2_ref[...], preferred_element_type=jnp.float32)
        + b2_ref[...], 0.0)

    # fused head hidden layer: one (512, 1024) matmul = [Q-hidden | V-hidden]
    qvh = jnp.maximum(
        jnp.dot(h2.astype(bf16), wqv1_ref[...], preferred_element_type=jnp.float32)
        + bqv1_ref[...], 0.0)

    # fused, lane-padded output projection: block-diagonal (1024, 128)
    #   cols 0..A-1 = Q logits, col A = V, remaining lanes are zero padding.
    qv = (jnp.dot(qvh.astype(bf16), wqv2_ref[...],
                  preferred_element_type=jnp.float32)
          + bqv2_ref[...])

    q = qv[:, :action_count]
    v = qv[:, action_count:action_count + 1]

    # dueling combine: q - q.mean(dim=1, keepdim=True) + v
    out_ref[...] = q - jnp.mean(q, axis=-1, keepdims=True) + v


@functools.partial(jax.jit, static_argnames=("action_count", "batch_block"))
def q_network_forward(curr_enc, packed, action_count=ACTION_COUNT,
                      batch_block=128):
    """Runs the fused dueling-head kernel. curr_enc: (B, 384) float32."""
    b, d = curr_enc.shape
    assert d == STATE_DIM

    # batch block: up to 128 rows per grid step, sublane (8) aligned
    bb = min(batch_block, _round_up(b, 8))
    b_pad = _round_up(b, bb)
    x = curr_enc
    if b_pad != b:
        x = jnp.pad(x, ((0, b_pad - b), (0, 0)))

    head_pad = packed["wqv2"].shape[1]
    const = lambda i: (0, 0)  # weights: same block every grid step -> VMEM-resident

    grid_spec = pltpu.PrefetchScalarGridSpec(
        num_scalar_prefetch=0,
        grid=(b_pad // bb,),
        in_specs=[
            pl.BlockSpec((bb, STATE_DIM), lambda i: (i, 0)),      # activations
            pl.BlockSpec((STATE_DIM, HIDDEN), const),             # w1 (bf16)
            pl.BlockSpec((1, HIDDEN), const),                     # b1 (f32)
            pl.BlockSpec((HIDDEN, HIDDEN), const),                # w2 (bf16)
            pl.BlockSpec((1, HIDDEN), const),                     # b2
            pl.BlockSpec((HIDDEN, 2 * HIDDEN), const),            # wqv1 (bf16)
            pl.BlockSpec((1, 2 * HIDDEN), const),                 # bqv1
            pl.BlockSpec((2 * HIDDEN, head_pad), const),          # wqv2 (bf16)
            pl.BlockSpec((1, head_pad), const),                   # bqv2
        ],
        out_specs=pl.BlockSpec((bb, action_count), lambda i: (i, 0)),
    )

    # memory-bound cost hint for the XLA scheduler
    k_sizes = (STATE_DIM * HIDDEN + HIDDEN * HIDDEN
               + HIDDEN * 2 * HIDDEN + 2 * HIDDEN * head_pad)
    flops = 2 * b_pad * k_sizes
    weight_bytes = 2 * k_sizes                                    # bf16
    bias_bytes = 4 * (HIDDEN + HIDDEN + 2 * HIDDEN + head_pad)    # f32
    act_bytes = 4 * b_pad * (STATE_DIM + action_count)

    out = pl.pallas_call(
        functools.partial(_dueling_kernel, action_count=action_count),
        out_shape=jax.ShapeDtypeStruct((b_pad, action_count), jnp.float32),
        grid_spec=grid_spec,
        compiler_params=pltpu.CompilerParams(
            dimension_semantics=("parallel",),
            vmem_limit_bytes=16 * 1024 * 1024,
        ),
        cost_estimate=pl.CostEstimate(
            flops=flops, transcendentals=0,
            bytes_accessed=weight_bytes + bias_bytes + act_bytes),
    )(x, packed["w1"], packed["b1"], packed["w2"], packed["b2"],
      packed["wqv1"], packed["bqv1"], packed["wqv2"], packed["bqv2"])

    return out[:b]


def _linear_init(key, fan_in, fan_out):
    """Deterministic PyTorch-style (kaiming-uniform-ish) init."""
    kw, kb = jax.random.split(key)
    bound = 1.0 / jnp.sqrt(jnp.float32(fan_in))
    w = jax.random.uniform(kw, (fan_in, fan_out), jnp.float32, -bound, bound)
    b = jax.random.uniform(kb, (1, fan_out), jnp.float32, -bound, bound)
    return w, b


def init_params(key, action_count=ACTION_COUNT):
    keys = jax.random.split(key, 6)
    w1, b1 = _linear_init(keys[0], STATE_DIM, HIDDEN)
    w2, b2 = _linear_init(keys[1], HIDDEN, HIDDEN)
    wq1, bq1 = _linear_init(keys[2], HIDDEN, HIDDEN)
    wq2, bq2 = _linear_init(keys[3], HIDDEN, action_count)
    wv1, bv1 = _linear_init(keys[4], HIDDEN, HIDDEN)
    wv2, bv2 = _linear_init(keys[5], HIDDEN, 1)
    return dict(w1=w1, b1=b1, w2=w2, b2=b2,
                wq1=wq1, bq1=bq1, wq2=wq2, bq2=bq2,
                wv1=wv1, bv1=bv1, wv2=wv2, bv2=bv2)


def pack_params(params, action_count=ACTION_COUNT, head_pad=HEAD_PAD):
    """bf16 weights + fused head matrices (f32 biases for exact bias-add)."""
    bf16, f32 = jnp.bfloat16, jnp.float32
    # fused head hidden layer: [wq1 | wv1] -> (512, 1024)
    wqv1 = jnp.concatenate([params["wq1"], params["wv1"]], axis=1)
    bqv1 = jnp.concatenate([params["bq1"], params["bv1"]], axis=1)
    # fused, lane-padded output projection: block-diagonal (1024, 128)
    a = action_count
    wqv2 = jnp.zeros((2 * HIDDEN, head_pad), f32)
    wqv2 = wqv2.at[:HIDDEN, :a].set(params["wq2"])
    wqv2 = wqv2.at[HIDDEN:, a:a + 1].set(params["wv2"])
    bqv2 = jnp.zeros((1, head_pad), f32)
    bqv2 = bqv2.at[:, :a].set(params["bq2"])
    bqv2 = bqv2.at[:, a:a + 1].set(params["bv2"])
    return dict(
        w1=params["w1"].astype(bf16), b1=params["b1"].astype(f32),
        w2=params["w2"].astype(bf16), b2=params["b2"].astype(f32),
        wqv1=wqv1.astype(bf16), bqv1=bqv1.astype(f32),
        wqv2=wqv2.astype(bf16), bqv2=bqv2.astype(f32),
    )


def q_network_reference_packed(x, packed, action_count=ACTION_COUNT):
    """Pure-JAX reference of the exact bf16-weight / f32-accumulate compute."""
    bf16 = jnp.bfloat16

    def mm(a, w):
        return jnp.dot(a.astype(bf16), w, preferred_element_type=jnp.float32)

    h1 = jnp.maximum(mm(x, packed["w1"]) + packed["b1"], 0.0)
    h2 = jnp.maximum(mm(h1, packed["w2"]) + packed["b2"], 0.0)
    qvh = jnp.maximum(mm(h2, packed["wqv1"]) + packed["bqv1"], 0.0)
    qv = mm(qvh, packed["wqv2"]) + packed["bqv2"]
    q = qv[:, :action_count]
    v = qv[:, action_count:action_count + 1]
    return q - jnp.mean(q, axis=-1, keepdims=True) + v


def q_network_reference_f32(x, p):
    """Pure-JAX f32 reference of the dueling head (tianshou Net semantics)."""
    h1 = jnp.maximum(x @ p["w1"] + p["b1"], 0.0)
    h2 = jnp.maximum(h1 @ p["w2"] + p["b2"], 0.0)
    qh = jnp.maximum(h2 @ p["wq1"] + p["bq1"], 0.0)
    q = qh @ p["wq2"] + p["bq2"]
    vh = jnp.maximum(h2 @ p["wv1"] + p["bv1"], 0.0)
    v = vh @ p["wv2"] + p["bv2"]
    return q - jnp.mean(q, axis=-1, keepdims=True) + v


if __name__ == "__main__":
    key = jax.random.PRNGKey(0)
    k_params, k_x = jax.random.split(key)

    params = init_params(k_params, ACTION_COUNT)
    packed = pack_params(params, ACTION_COUNT)
    # `curr_enc` stands in for ViTTrailEncoder(obs): (B, 384) features.
    curr_enc = jax.random.normal(k_x, (BATCH, STATE_DIM), jnp.float32)

    out = q_network_forward(curr_enc, packed, action_count=ACTION_COUNT)
    out = jax.block_until_ready(out)
    assert out.shape == (BATCH, ACTION_COUNT)

    # tight check vs. a reference that mirrors the bf16/f32 kernel arithmetic
    ref_bf16 = q_network_reference_packed(curr_enc, packed, ACTION_COUNT)
    assert jnp.allclose(out, ref_bf16, atol=2e-2, rtol=2e-2), "mismatch vs bf16 ref"

    # looser semantic check vs. the original f32 module math
    ref_f32 = q_network_reference_f32(curr_enc, params)
    assert jnp.allclose(out, ref_f32, atol=1e-1, rtol=1e-1), "mismatch vs f32 ref"

    print("KERNEL_OK")
</pallas_src>

<mosaic_0001>
module attributes {stable_mosaic.version = 11 : i64} {
  func.func @_dueling_kernel(%arg0: i32, %arg1: memref<8x384xf32, #tpu.memory_space<vmem>>, %arg2: memref<384x512xbf16, #tpu.memory_space<vmem>>, %arg3: memref<1x512xf32, #tpu.memory_space<vmem>>, %arg4: memref<512x512xbf16, #tpu.memory_space<vmem>>, %arg5: memref<1x512xf32, #tpu.memory_space<vmem>>, %arg6: memref<512x1024xbf16, #tpu.memory_space<vmem>>, %arg7: memref<1x1024xf32, #tpu.memory_space<vmem>>, %arg8: memref<1024x128xbf16, #tpu.memory_space<vmem>>, %arg9: memref<1x128xf32, #tpu.memory_space<vmem>>, %arg10: memref<8x8xf32, #tpu.memory_space<vmem>>) attributes {dimension_semantics = [#tpu.dimension_semantics<parallel>], iteration_bounds = array<i64: 1>, scalar_prefetch = 0 : i64, scratch_operands = 0 : i64, tpu.core_type = #tpu.core_type<tc>, window_params = [{transform_indices = @transform_0, window_bounds = array<i64: 8, 384>}, {pipeline_mode = #tpu.pipeline_mode<synchronous>, transform_indices = @transform_1, window_bounds = array<i64: 384, 512>}, {pipeline_mode = #tpu.pipeline_mode<synchronous>, transform_indices = @transform_2, window_bounds = array<i64: 1, 512>}, {pipeline_mode = #tpu.pipeline_mode<synchronous>, transform_indices = @transform_3, window_bounds = array<i64: 512, 512>}, {pipeline_mode = #tpu.pipeline_mode<synchronous>, transform_indices = @transform_4, window_bounds = array<i64: 1, 512>}, {pipeline_mode = #tpu.pipeline_mode<synchronous>, transform_indices = @transform_5, window_bounds = array<i64: 512, 1024>}, {pipeline_mode = #tpu.pipeline_mode<synchronous>, transform_indices = @transform_6, window_bounds = array<i64: 1, 1024>}, {pipeline_mode = #tpu.pipeline_mode<synchronous>, transform_indices = @transform_7, window_bounds = array<i64: 1024, 128>}, {pipeline_mode = #tpu.pipeline_mode<synchronous>, transform_indices = @transform_8, window_bounds = array<i64: 1, 128>}, {transform_indices = @transform_9, window_bounds = array<i64: 8, 8>}]} {
    %c0 = arith.constant 0 : index
    %c0_0 = arith.constant 0 : index
    %0 = vector.load %arg1[%c0, %c0_0] : memref<8x384xf32, #tpu.memory_space<vmem>>, vector<8x384xf32>
    %1 = arith.truncf %0 : vector<8x384xf32> to vector<8x384xbf16>
    %c0_1 = arith.constant 0 : index
    %c0_2 = arith.constant 0 : index
    %2 = vector.load %arg2[%c0_1, %c0_2] : memref<384x512xbf16, #tpu.memory_space<vmem>>, vector<384x512xbf16>
    %cst = arith.constant dense<0.000000e+00> : vector<8x512xf32>
    %3 = tpu.matmul %1, %2, %cst {dimension_numbers = #tpu.dot_dimension_numbers<[1], [0], [0], [1], [0, 0, 1, 1], [], []>} : vector<8x384xbf16>, vector<384x512xbf16>, vector<8x512xf32> -> vector<8x512xf32>
    %c0_3 = arith.constant 0 : index
    %c0_4 = arith.constant 0 : index
    %4 = vector.load %arg3[%c0_3, %c0_4] : memref<1x512xf32, #tpu.memory_space<vmem>>, vector<1x512xf32>
    %5 = vector.broadcast %4 : vector<1x512xf32> to vector<8x512xf32>
    %6 = arith.addf %3, %5 : vector<8x512xf32>
    %cst_5 = arith.constant 0.000000e+00 : f32
    %7 = vector.broadcast %cst_5 : f32 to vector<8x512xf32>
    %8 = arith.maximumf %6, %7 : vector<8x512xf32>
    %9 = arith.truncf %8 : vector<8x512xf32> to vector<8x512xbf16>
    %c0_6 = arith.constant 0 : index
    %c0_7 = arith.constant 0 : index
    %10 = vector.load %arg4[%c0_6, %c0_7] : memref<512x512xbf16, #tpu.memory_space<vmem>>, vector<512x512xbf16>
    %cst_8 = arith.constant dense<0.000000e+00> : vector<8x512xf32>
    %11 = tpu.matmul %9, %10, %cst_8 {dimension_numbers = #tpu.dot_dimension_numbers<[1], [0], [0], [1], [0, 0, 1, 1], [], []>} : vector<8x512xbf16>, vector<512x512xbf16>, vector<8x512xf32> -> vector<8x512xf32>
    %c0_9 = arith.constant 0 : index
    %c0_10 = arith.constant 0 : index
    %12 = vector.load %arg5[%c0_9, %c0_10] : memref<1x512xf32, #tpu.memory_space<vmem>>, vector<1x512xf32>
    %13 = vector.broadcast %12 : vector<1x512xf32> to vector<8x512xf32>
    %14 = arith.addf %11, %13 : vector<8x512xf32>
    %cst_11 = arith.constant 0.000000e+00 : f32
    %15 = vector.broadcast %cst_11 : f32 to vector<8x512xf32>
    %16 = arith.maximumf %14, %15 : vector<8x512xf32>
    %17 = arith.truncf %16 : vector<8x512xf32> to vector<8x512xbf16>
    %c0_12 = arith.constant 0 : index
    %c0_13 = arith.constant 0 : index
    %18 = vector.load %arg6[%c0_12, %c0_13] : memref<512x1024xbf16, #tpu.memory_space<vmem>>, vector<512x1024xbf16>
    %cst_14 = arith.constant dense<0.000000e+00> : vector<8x1024xf32>
    %19 = tpu.matmul %17, %18, %cst_14 {dimension_numbers = #tpu.dot_dimension_numbers<[1], [0], [0], [1], [0, 0, 1, 1], [], []>} : vector<8x512xbf16>, vector<512x1024xbf16>, vector<8x1024xf32> -> vector<8x1024xf32>
    %c0_15 = arith.constant 0 : index
    %c0_16 = arith.constant 0 : index
    %20 = vector.load %arg7[%c0_15, %c0_16] : memref<1x1024xf32, #tpu.memory_space<vmem>>, vector<1x1024xf32>
    %21 = vector.broadcast %20 : vector<1x1024xf32> to vector<8x1024xf32>
    %22 = arith.addf %19, %21 : vector<8x1024xf32>
    %cst_17 = arith.constant 0.000000e+00 : f32
    %23 = vector.broadcast %cst_17 : f32 to vector<8x1024xf32>
    %24 = arith.maximumf %22, %23 : vector<8x1024xf32>
    %25 = arith.truncf %24 : vector<8x1024xf32> to vector<8x1024xbf16>
    %c0_18 = arith.constant 0 : index
    %c0_19 = arith.constant 0 : index
    %26 = vector.load %arg8[%c0_18, %c0_19] : memref<1024x128xbf16, #tpu.memory_space<vmem>>, vector<1024x128xbf16>
    %cst_20 = arith.constant dense<0.000000e+00> : vector<8x128xf32>
    %27 = tpu.matmul %25, %26, %cst_20 {dimension_numbers = #tpu.dot_dimension_numbers<[1], [0], [0], [1], [0, 0, 1, 1], [], []>} : vector<8x1024xbf16>, vector<1024x128xbf16>, vector<8x128xf32> -> vector<8x128xf32>
    %c0_21 = arith.constant 0 : index
    %c0_22 = arith.constant 0 : index
    %28 = vector.load %arg9[%c0_21, %c0_22] : memref<1x128xf32, #tpu.memory_space<vmem>>, vector<1x128xf32>
    %29 = vector.broadcast %28 : vector<1x128xf32> to vector<8x128xf32>
    %30 = arith.addf %27, %29 : vector<8x128xf32>
    %31 = vector.extract_strided_slice %30 {offsets = [0, 0], sizes = [8, 8], strides = [1, 1]} : vector<8x128xf32> to vector<8x8xf32>
    %32 = vector.extract_strided_slice %30 {offsets = [0, 8], sizes = [8, 1], strides = [1, 1]} : vector<8x128xf32> to vector<8x1xf32>
    %cst_23 = arith.constant dense<0.000000e+00> : vector<8xf32>
    %33 = vector.multi_reduction <add>, %31, %cst_23 [1] : vector<8x8xf32> to vector<8xf32>
    %34 = vector.shape_cast %33 : vector<8xf32> to vector<8x1xf32>
    %cst_24 = arith.constant 8.000000e+00 : f32
    %35 = vector.broadcast %cst_24 : f32 to vector<8x1xf32>
    %36 = arith.divf %34, %35 : vector<8x1xf32>
    %37 = vector.broadcast %36 : vector<8x1xf32> to vector<8x8xf32>
    %38 = arith.subf %31, %37 : vector<8x8xf32>
    %39 = vector.broadcast %32 : vector<8x1xf32> to vector<8x8xf32>
    %40 = arith.addf %38, %39 : vector<8x8xf32>
    %c0_25 = arith.constant 0 : index
    %c0_26 = arith.constant 0 : index
    %41 = vector.load %arg10[%c0_25, %c0_26] : memref<8x8xf32, #tpu.memory_space<vmem>>, vector<8x8xf32>
    tpu.vector_store %arg10[%c0_25, %c0_26], %40 {strides = array<i32>} : memref<8x8xf32, #tpu.memory_space<vmem>>, vector<8x8xf32>,
    return
  }
  func.func @transform_0(%arg0: i32) -> (i32, i32) {
    %c0_i32 = arith.constant 0 : i32
    %c0_i32_0 = arith.constant 0 : i32
    return %arg0, %c0_i32 : i32, i32
  }
  func.func @transform_1(%arg0: i32) -> (i32, i32) {
    %c0_i32 = arith.constant 0 : i32
    %c0_i32_0 = arith.constant 0 : i32
    %c0_i32_1 = arith.constant 0 : i32
    return %c0_i32, %c0_i32_0 : i32, i32
  }
  func.func @transform_2(%arg0: i32) -> (i32, i32) {
    %c0_i32 = arith.constant 0 : i32
    %c0_i32_0 = arith.constant 0 : i32
    %c0_i32_1 = arith.constant 0 : i32
    return %c0_i32, %c0_i32_0 : i32, i32
  }
  func.func @transform_3(%arg0: i32) -> (i32, i32) {
    %c0_i32 = arith.constant 0 : i32
    %c0_i32_0 = arith.constant 0 : i32
    %c0_i32_1 = arith.constant 0 : i32
    return %c0_i32, %c0_i32_0 : i32, i32
  }
  func.func @transform_4(%arg0: i32) -> (i32, i32) {
    %c0_i32 = arith.constant 0 : i32
    %c0_i32_0 = arith.constant 0 : i32
    %c0_i32_1 = arith.constant 0 : i32
    return %c0_i32, %c0_i32_0 : i32, i32
  }
  func.func @transform_5(%arg0: i32) -> (i32, i32) {
    %c0_i32 = arith.constant 0 : i32
    %c0_i32_0 = arith.constant 0 : i32
    %c0_i32_1 = arith.constant 0 : i32
    return %c0_i32, %c0_i32_0 : i32, i32
  }
  func.func @transform_6(%arg0: i32) -> (i32, i32) {
    %c0_i32 = arith.constant 0 : i32
    %c0_i32_0 = arith.constant 0 : i32
    %c0_i32_1 = arith.constant 0 : i32
    return %c0_i32, %c0_i32_0 : i32, i32
  }
  func.func @transform_7(%arg0: i32) -> (i32, i32) {
    %c0_i32 = arith.constant 0 : i32
    %c0_i32_0 = arith.constant 0 : i32
    %c0_i32_1 = arith.constant 0 : i32
    return %c0_i32, %c0_i32_0 : i32, i32
  }
  func.func @transform_8(%arg0: i32) -> (i32, i32) {
    %c0_i32 = arith.constant 0 : i32
    %c0_i32_0 = arith.constant 0 : i32
    %c0_i32_1 = arith.constant 0 : i32
    return %c0_i32, %c0_i32_0 : i32, i32
  }
  func.func @transform_9(%arg0: i32) -> (i32, i32) {
    %c0_i32 = arith.constant 0 : i32
    %c0_i32_0 = arith.constant 0 : i32
    return %arg0, %c0_i32 : i32, i32
  }
}

</mosaic_0001>

<llo_original>
// kernel: q_network_forward.1
$region0: #{q_network_forward.1}
  #allocation0 [shape = 'u32[]', space=smem, size = 0x4, offset = 0x4, fixed_abs, tag = 'smem constant byte address 0x4 - core index']
  #allocation1 [shape = 'u32[144,128]{1,0:T(1,128)}', space=vmem, size = 0x12000, scoped, tag = 'internal scratch']
  %s0 = inlined_call_operand.hbm [shape: f32[8,384], index: 0, kind: input, shape index: {}]
  %s1 = inlined_call_operand.hbm [shape: bf16[384,512], index: 1, kind: input, shape index: {}]
  %s2 = inlined_call_operand.hbm [shape: f32[1,512], index: 2, kind: input, shape index: {}]
  %s3 = inlined_call_operand.hbm [shape: bf16[512,512], index: 3, kind: input, shape index: {}]
  %s4 = inlined_call_operand.hbm [shape: f32[1,512], index: 4, kind: input, shape index: {}]
  %s5 = inlined_call_operand.hbm [shape: bf16[512,1024], index: 5, kind: input, shape index: {}]
  %s6 = inlined_call_operand.hbm [shape: f32[1,1024], index: 6, kind: input, shape index: {}]
  %s7 = inlined_call_operand.hbm [shape: bf16[1024,128], index: 7, kind: input, shape index: {}]
  %s8 = inlined_call_operand.vmem [shape: f32[1,128], index: 8, kind: input, shape index: {}]
  %s9 = inlined_call_operand.hbm [shape: f32[8,8], index: 9, kind: output, shape index: {}]
  %s10 = sld [smem:[#allocation0]]
  $region78: #{q_network_forward.1} parent=0
    _
  %s12 = ssub.s32 1, %s10
  %s13 = scalar_select 0, %s12, %s10
  $region1: #{q_network_forward.1} parent=0
    #allocation2 [shape = 'u8[12288]{0}', space=vmem, size = 0x3000, scoped, tag = 'input window, operand 0, single buffered']
    #allocation3 [shape = 's32[1]{0}', space=sflag, size = 0x4, scoped, tag = 'scoped memory for q_network_forward.1']
    #allocation4 [shape = 's32[1]{0}', space=sflag, size = 0x4, scoped, tag = 'scoped memory for q_network_forward.1']
    #allocation5 [shape = 'u8[393216]{0}', space=vmem, size = 0x60000, scoped, tag = 'input window, operand 1, single buffered']
    #allocation6 [shape = 's32[1]{0}', space=sflag, size = 0x4, scoped, tag = 'scoped memory for q_network_forward.1']
    #allocation7 [shape = 'u8[2048]{0}', space=vmem, size = 0x800, scoped, tag = 'input window, operand 2, single buffered']
    #allocation8 [shape = 'u8[524288]{0}', space=vmem, size = 0x80000, scoped, tag = 'input window, operand 3, single buffered']
    #allocation9 [shape = 's32[1]{0}', space=sflag, size = 0x4, scoped, tag = 'scoped memory for q_network_forward.1']
    #allocation10 [shape = 'u8[2048]{0}', space=vmem, size = 0x800, scoped, tag = 'input window, operand 4, single buffered']
    #allocation11 [shape = 'u8[1048576]{0}', space=vmem, size = 0x100000, scoped, tag = 'input window, operand 5, single buffered']
    #allocation12 [shape = 's32[1]{0}', space=sflag, size = 0x4, scoped, tag = 'scoped memory for q_network_forward.1']
    #allocation13 [shape = 'u8[4096]{0}', space=vmem, size = 0x1000, scoped, tag = 'input window, operand 6, single buffered']
    #allocation14 [shape = 'u8[262144]{0}', space=vmem, size = 0x40000, scoped, tag = 'input window, operand 7, single buffered']
    #allocation15 [shape = 's32[1]{0}', space=sflag, size = 0x4, scoped, tag = 'scoped memory for q_network_forward.1']
    #allocation16 [shape = 'u8[4096]{0}', space=vmem, size = 0x1000, scoped, tag = 'output window, operand 0, single buffered']
    %14 = vsyncpa [#allocation3], 0
    %15 = vsyncpa [#allocation6], 0
    %16 = vsyncpa [#allocation9], 0
    %17 = vsyncpa [#allocation12], 0
    %18 = vsyncpa [#allocation15], 0
    %19 = vsyncpa [#allocation4], 0
    // Predicated region
    $region2: #{q_network_forward.1} parent=1 // pred_check
      _
    $region3: #{q_network_forward.1} parent=1 // pred_check_branch
      %21 = sbr.rel (0) target = $region5
    $region4: #{q_network_forward.1} parent=1 // pred_region
      %s23 = ssub.s32 384, 384
      %24 = vsyncadd [#allocation3], %s23
      %s26 = sshll.u32 [#allocation2], 4
      %s27 = int_to_ptr.vmem [resolvable:$true] %s26
      %29 = dma.hbm_to_vmem [thread:$0]  %s0, 384, %s27, [#allocation3]
    $region5: #{q_network_forward.1} parent=1 // pred_fallthru
      _
    // Predicated region
    $region6: #{q_network_forward.1} parent=1 // pred_check
      _
    $region7: #{q_network_forward.1} parent=1 // pred_check_branch
      %31 = sbr.rel (0) target = $region9
    $region8: #{q_network_forward.1} parent=1 // pred_region
      %s33 = ssub.s32 12288, 12288
      %34 = vsyncadd [#allocation6], %s33
      %s35 = sshll.u32 [#allocation5], 4
      %s36 = int_to_ptr.vmem [resolvable:$true] %s35
      %41 = dma.hbm_to_vmem [thread:$0]  %s1, 12288, %s36, [#allocation6], 256, 256, 16
    $region9: #{q_network_forward.1} parent=1 // pred_fallthru
      _
    // Predicated region
    $region10: #{q_network_forward.1} parent=1 // pred_check
      _
    $region11: #{q_network_forward.1} parent=1 // pred_check_branch
      %43 = sbr.rel (0) target = $region13
    $region12: #{q_network_forward.1} parent=1 // pred_region
      %s45 = ssub.s32 64, 64
      %46 = vsyncadd [#allocation6], %s45
      %s48 = sshll.u32 [#allocation7], 4
      %s49 = int_to_ptr.vmem [resolvable:$true] %s48
      %51 = dma.hbm_to_vmem [thread:$0]  %s2, 64, %s49, [#allocation6]
    $region13: #{q_network_forward.1} parent=1 // pred_fallthru
      _
    // Predicated region
    $region14: #{q_network_forward.1} parent=1 // pred_check
      _
    $region15: #{q_network_forward.1} parent=1 // pred_check_branch
      %53 = sbr.rel (0) target = $region17
    $region16: #{q_network_forward.1} parent=1 // pred_region
      %s55 = ssub.s32 16384, 16384
      %56 = vsyncadd [#allocation9], %s55
      %s57 = sshll.u32 [#allocation8], 4
      %s58 = int_to_ptr.vmem [resolvable:$true] %s57
      %63 = dma.hbm_to_vmem [thread:$0]  %s3, 16384, %s58, [#allocation9], 256, 256, 16
    $region17: #{q_network_forward.1} parent=1 // pred_fallthru
      _
    // Predicated region
    $region18: #{q_network_forward.1} parent=1 // pred_check
      _
    $region19: #{q_network_forward.1} parent=1 // pred_check_branch
      %65 = sbr.rel (0) target = $region21
    $region20: #{q_network_forward.1} parent=1 // pred_region
      %s67 = ssub.s32 64, 64
      %68 = vsyncadd [#allocation9], %s67
      %s70 = sshll.u32 [#allocation10], 4
      %s71 = int_to_ptr.vmem [resolvable:$true] %s70
      %73 = dma.hbm_to_vmem [thread:$0]  %s4, 64, %s71, [#allocation9]
    $region21: #{q_network_forward.1} parent=1 // pred_fallthru
      _
    // Predicated region
    $region22: #{q_network_forward.1} parent=1 // pred_check
      _
    $region23: #{q_network_forward.1} parent=1 // pred_check_branch
      %75 = sbr.rel (0) target = $region25
    $region24: #{q_network_forward.1} parent=1 // pred_region
      %s77 = ssub.s32 32768, 32768
      %78 = vsyncadd [#allocation12], %s77
      %s79 = sshll.u32 [#allocation11], 4
      %s80 = int_to_ptr.vmem [resolvable:$true] %s79
      %85 = dma.hbm_to_vmem [thread:$0]  %s5, 32768, %s80, [#allocation12], 512, 512, 32
    $region25: #{q_network_forward.1} parent=1 // pred_fallthru
      _
    // Predicated region
    $region26: #{q_network_forward.1} parent=1 // pred_check
      _
    $region27: #{q_network_forward.1} parent=1 // pred_check_branch
      %87 = sbr.rel (0) target = $region29
    $region28: #{q_network_forward.1} parent=1 // pred_region
      %s89 = ssub.s32 128, 128
      %90 = vsyncadd [#allocation12], %s89
      %s92 = sshll.u32 [#allocation13], 4
      %s93 = int_to_ptr.vmem [resolvable:$true] %s92
      %95 = dma.hbm_to_vmem [thread:$0]  %s6, 128, %s93, [#allocation12]
    $region29: #{q_network_forward.1} parent=1 // pred_fallthru
      _
    // Predicated region
    $region30: #{q_network_forward.1} parent=1 // pred_check
      _
    $region31: #{q_network_forward.1} parent=1 // pred_check_branch
      %97 = sbr.rel (0) target = $region33
    $region32: #{q_network_forward.1} parent=1 // pred_region
      %s99 = ssub.s32 8192, 8192
      %100 = vsyncadd [#allocation15], %s99
      %s101 = sshll.u32 [#allocation14], 4
      %s102 = int_to_ptr.vmem [resolvable:$true] %s101
      %107 = dma.hbm_to_vmem [thread:$0]  %s7, 8192, %s102, [#allocation15], 64, 64, 4
    $region33: #{q_network_forward.1} parent=1 // pred_fallthru
      _
    // Predicated region
    $region34: #{q_network_forward.1} parent=1 // pred_check
      _
    $region35: #{q_network_forward.1} parent=1 // pred_check_branch
      %109 = sbr.rel (0) target = $region37
    $region36: #{q_network_forward.1} parent=1 // pred_region
      _
    $region37: #{q_network_forward.1} parent=1 // pred_fallthru
      _
    // Predicated region
    $region38: #{q_network_forward.1} parent=1 // pred_check
      _
    $region39: #{q_network_forward.1} parent=1 // pred_check_branch
      %111 = sbr.rel (0) target = $region41
    $region40: #{q_network_forward.1} parent=1 // pred_region
      %112 = dma.done [#allocation3], 384
    $region41: #{q_network_forward.1} parent=1 // pred_fallthru
      _
    // Predicated region
    $region42: #{q_network_forward.1} parent=1 // pred_check
      _
    $region43: #{q_network_forward.1} parent=1 // pred_check_branch
      %114 = sbr.rel (0) target = $region45
    $region44: #{q_network_forward.1} parent=1 // pred_region
      %115 = dma.done [#allocation6], 12288
    $region45: #{q_network_forward.1} parent=1 // pred_fallthru
      _
    // Predicated region
    $region46: #{q_network_forward.1} parent=1 // pred_check
      _
    $region47: #{q_network_forward.1} parent=1 // pred_check_branch
      %117 = sbr.rel (0) target = $region49
    $region48: #{q_network_forward.1} parent=1 // pred_region
      %118 = dma.done [#allocation6], 64
    $region49: #{q_network_forward.1} parent=1 // pred_fallthru
      _
    // Predicated region
    $region50: #{q_network_forward.1} parent=1 // pred_check
      _
    $region51: #{q_network_forward.1} parent=1 // pred_check_branch
      %120 = sbr.rel (0) target = $region53
    $region52: #{q_network_forward.1} parent=1 // pred_region
      %121 = dma.done [#allocation9], 16384
    $region53: #{q_network_forward.1} parent=1 // pred_fallthru
      _
    // Predicated region
    $region54: #{q_network_forward.1} parent=1 // pred_check
      _
    $region55: #{q_network_forward.1} parent=1 // pred_check_branch
      %123 = sbr.rel (0) target = $region57
    $region56: #{q_network_forward.1} parent=1 // pred_region
      %124 = dma.done [#allocation9], 64
    $region57: #{q_network_forward.1} parent=1 // pred_fallthru
      _
    // Predicated region
    $region58: #{q_network_forward.1} parent=1 // pred_check
      _
    $region59: #{q_network_forward.1} parent=1 // pred_check_branch
      %126 = sbr.rel (0) target = $region61
    $region60: #{q_network_forward.1} parent=1 // pred_region
      %127 = dma.done [#allocation12], 32768
    $region61: #{q_network_forward.1} parent=1 // pred_fallthru
      _
    // Predicated region
    $region62: #{q_network_forward.1} parent=1 // pred_check
      _
    $region63: #{q_network_forward.1} parent=1 // pred_check_branch
      %129 = sbr.rel (0) target = $region65
    $region64: #{q_network_forward.1} parent=1 // pred_region
      %130 = dma.done [#allocation12], 128
    $region65: #{q_network_forward.1} parent=1 // pred_fallthru
      _
    // Predicated region
    $region66: #{q_network_forward.1} parent=1 // pred_check
      _
    $region67: #{q_network_forward.1} parent=1 // pred_check_branch
      %132 = sbr.rel (0) target = $region69
    $region68: #{q_network_forward.1} parent=1 // pred_region
      %133 = dma.done [#allocation15], 8192
    $region69: #{q_network_forward.1} parent=1 // pred_fallthru
      _
    %v135 = vld [vmem:[#allocation2] sm:$0xff]
    %v136 = vld [vmem:[#allocation2 + $0x8] sm:$0xff]
    %v137 = vld [vmem:[#allocation2 + $0x10] sm:$0xff]
    %v138 = vpack.c.bf16 %v135, %v135
    %v139 = vpack.c.bf16 %v136, %v136
    %v140 = vpack.c.bf16 %v137, %v137
    %v141 = vld [vmem:[#allocation5] sm:$0xff]
    %v142 = vld [vmem:[#allocation5 + $0x8] sm:$0xff]
    %v143 = vld [vmem:[#allocation5 + $0x10] sm:$0xff]
    %v144 = vld [vmem:[#allocation5 + $0x18] sm:$0xff]
    %v145 = vld [vmem:[#allocation5 + $0x20] sm:$0xff]
    %v146 = vld [vmem:[#allocation5 + $0x28] sm:$0xff]
    %v147 = vld [vmem:[#allocation5 + $0x30] sm:$0xff]
    %v148 = vld [vmem:[#allocation5 + $0x38] sm:$0xff]
    %v149 = vld [vmem:[#allocation5 + $0x40] sm:$0xff]
    %v150 = vld [vmem:[#allocation5 + $0x48] sm:$0xff]
    %v151 = vld [vmem:[#allocation5 + $0x50] sm:$0xff]
    %v152 = vld [vmem:[#allocation5 + $0x58] sm:$0xff]
    %v153 = vld [vmem:[#allocation5 + $0x60] sm:$0xff]
    %v154 = vld [vmem:[#allocation5 + $0x68] sm:$0xff]
    %v155 = vld [vmem:[#allocation5 + $0x70] sm:$0xff]
    %v156 = vld [vmem:[#allocation5 + $0x78] sm:$0xff]
    %v157 = vld [vmem:[#allocation5 + $0x80] sm:$0xff]
    %v158 = vld [vmem:[#allocation5 + $0x88] sm:$0xff]
    %v159 = vld [vmem:[#allocation5 + $0x90] sm:$0xff]
    %v160 = vld [vmem:[#allocation5 + $0x98] sm:$0xff]
    %v161 = vld [vmem:[#allocation5 + $0xa0] sm:$0xff]
    %v162 = vld [vmem:[#allocation5 + $0xa8] sm:$0xff]
    %v163 = vld [vmem:[#allocation5 + $0xb0] sm:$0xff]
    %v164 = vld [vmem:[#allocation5 + $0xb8] sm:$0xff]
    %v165 = vld [vmem:[#allocation5 + $0xc0] sm:$0xff]
    %v166 = vld [vmem:[#allocation5 + $0xc8] sm:$0xff]
    %v167 = vld [vmem:[#allocation5 + $0xd0] sm:$0xff]
    %v168 = vld [vmem:[#allocation5 + $0xd8] sm:$0xff]
    %v169 = vld [vmem:[#allocation5 + $0xe0] sm:$0xff]
    %v170 = vld [vmem:[#allocation5 + $0xe8] sm:$0xff]
    %v171 = vld [vmem:[#allocation5 + $0xf0] sm:$0xff]
    %v172 = vld [vmem:[#allocation5 + $0xf8] sm:$0xff]
    %v173 = vld [vmem:[#allocation5 + $0x100] sm:$0xff]
    %v174 = vld [vmem:[#allocation5 + $0x108] sm:$0xff]
    %v175 = vld [vmem:[#allocation5 + $0x110] sm:$0xff]
    %v176 = vld [vmem:[#allocation5 + $0x118] sm:$0xff]
    %v177 = vld [vmem:[#allocation5 + $0x120] sm:$0xff]
    %v178 = vld [vmem:[#allocation5 + $0x128] sm:$0xff]
    %v179 = vld [vmem:[#allocation5 + $0x130] sm:$0xff]
    %v180 = vld [vmem:[#allocation5 + $0x138] sm:$0xff]
    %v181 = vld [vmem:[#allocation5 + $0x140] sm:$0xff]
    %v182 = vld [vmem:[#allocation5 + $0x148] sm:$0xff]
    %v183 = vld [vmem:[#allocation5 + $0x150] sm:$0xff]
    %v184 = vld [vmem:[#allocation5 + $0x158] sm:$0xff]
    %v185 = vld [vmem:[#allocation5 + $0x160] sm:$0xff]
    %v186 = vld [vmem:[#allocation5 + $0x168] sm:$0xff]
    %v187 = vld [vmem:[#allocation5 + $0x170] sm:$0xff]
    %v188 = vld [vmem:[#allocation5 + $0x178] sm:$0xff]
    %v189 = vld [vmem:[#allocation5 + $0x180] sm:$0xff]
    %v190 = vld [vmem:[#allocation5 + $0x188] sm:$0xff]
    %v191 = vld [vmem:[#allocation5 + $0x190] sm:$0xff]
    %v192 = vld [vmem:[#allocation5 + $0x198] sm:$0xff]
    %v193 = vld [vmem:[#allocation5 + $0x1a0] sm:$0xff]
    %v194 = vld [vmem:[#allocation5 + $0x1a8] sm:$0xff]
    %v195 = vld [vmem:[#allocation5 + $0x1b0] sm:$0xff]
    %v196 = vld [vmem:[#allocation5 + $0x1b8] sm:$0xff]
    %v197 = vld [vmem:[#allocation5 + $0x1c0] sm:$0xff]
    %v198 = vld [vmem:[#allocation5 + $0x1c8] sm:$0xff]
    %v199 = vld [vmem:[#allocation5 + $0x1d0] sm:$0xff]
    %v200 = vld [vmem:[#allocation5 + $0x1d8] sm:$0xff]
    %v201 = vld [vmem:[#allocation5 + $0x1e0] sm:$0xff]
    %v202 = vld [vmem:[#allocation5 + $0x1e8] sm:$0xff]
    %v203 = vld [vmem:[#allocation5 + $0x1f0] sm:$0xff]
    %v204 = vld [vmem:[#allocation5 + $0x1f8] sm:$0xff]
    %v205 = vld [vmem:[#allocation5 + $0x200] sm:$0xff]
    %v206 = vld [vmem:[#allocation5 + $0x208] sm:$0xff]
    %v207 = vld [vmem:[#allocation5 + $0x210] sm:$0xff]
    %v208 = vld [vmem:[#allocation5 + $0x218] sm:$0xff]
    %v209 = vld [vmem:[#allocation5 + $0x220] sm:$0xff]
    %v210 = vld [vmem:[#allocation5 + $0x228] sm:$0xff]
    %v211 = vld [vmem:[#allocation5 + $0x230] sm:$0xff]
    %v212 = vld [vmem:[#allocation5 + $0x238] sm:$0xff]
    %v213 = vld [vmem:[#allocation5 + $0x240] sm:$0xff]
    %v214 = vld [vmem:[#allocation5 + $0x248] sm:$0xff]
    %v215 = vld [vmem:[#allocation5 + $0x250] sm:$0xff]
    %v216 = vld [vmem:[#allocation5 + $0x258] sm:$0xff]
    %v217 = vld [vmem:[#allocation5 + $0x260] sm:$0xff]
    %v218 = vld [vmem:[#allocation5 + $0x268] sm:$0xff]
    %v219 = vld [vmem:[#allocation5 + $0x270] sm:$0xff]
    %v220 = vld [vmem:[#allocation5 + $0x278] sm:$0xff]
    %v221 = vld [vmem:[#allocation5 + $0x280] sm:$0xff]
    %v222 = vld [vmem:[#allocation5 + $0x288] sm:$0xff]
    %v223 = vld [vmem:[#allocation5 + $0x290] sm:$0xff]
    %v224 = vld [vmem:[#allocation5 + $0x298] sm:$0xff]
    %v225 = vld [vmem:[#allocation5 + $0x2a0] sm:$0xff]
    %v226 = vld [vmem:[#allocation5 + $0x2a8] sm:$0xff]
    %v227 = vld [vmem:[#allocation5 + $0x2b0] sm:$0xff]
    %v228 = vld [vmem:[#allocation5 + $0x2b8] sm:$0xff]
    %v229 = vld [vmem:[#allocation5 + $0x2c0] sm:$0xff]
    %v230 = vld [vmem:[#allocation5 + $0x2c8] sm:$0xff]
    %v231 = vld [vmem:[#allocation5 + $0x2d0] sm:$0xff]
    %v232 = vld [vmem:[#allocation5 + $0x2d8] sm:$0xff]
    %v233 = vld [vmem:[#allocation5 + $0x2e0] sm:$0xff]
    %v234 = vld [vmem:[#allocation5 + $0x2e8] sm:$0xff]
    %v235 = vld [vmem:[#allocation5 + $0x2f0] sm:$0xff]
    %v236 = vld [vmem:[#allocation5 + $0x2f8] sm:$0xff]
    %v237 = vld [vmem:[#allocation7] sm:$0xf]
    %v239 = vlaneseq
    %v240 = vshrl.u32 %v239, 7
    %v241 = vsub.s32 0, %v240
    %v242 = vrot.slane %v237, %v241
    %v243 = vlaneseq
    %v244 = vshrl.u32 %v243, 7
    %v245 = vsub.s32 1, %v244
    %v246 = vrot.slane %v237, %v245
    %v247 = vlaneseq
    %v248 = vshrl.u32 %v247, 7
    %v249 = vsub.s32 2, %v248
    %v250 = vrot.slane %v237, %v249
    %v251 = vlaneseq
    %v252 = vshrl.u32 %v251, 7
    %v253 = vsub.s32 3, %v252
    %v254 = vrot.slane %v237, %v253
    %v355 = vunpack.c.l.b16 %v141
    %v356 = vunpack.c.h.b16 %v141
    %v357 = vunpack.c.l.b16 %v142
    %v358 = vunpack.c.h.b16 %v142
    %v359 = vunpack.c.l.b16 %v143
    %v360 = vunpack.c.h.b16 %v143
    %v361 = vunpack.c.l.b16 %v144
    %v362 = vunpack.c.h.b16 %v144
    %v363 = vunpack.c.l.b16 %v145
    %v364 = vunpack.c.h.b16 %v145
    %v365 = vunpack.c.l.b16 %v146
    %v366 = vunpack.c.h.b16 %v146
    %v367 = vunpack.c.l.b16 %v147
    %v368 = vunpack.c.h.b16 %v147
    %v369 = vunpack.c.l.b16 %v148
    %v370 = vunpack.c.h.b16 %v148
    %v371 = vunpack.c.l.b16 %v149
    %v372 = vunpack.c.h.b16 %v149
    %v373 = vunpack.c.l.b16 %v150
    %v374 = vunpack.c.h.b16 %v150
    %v375 = vunpack.c.l.b16 %v151
    %v376 = vunpack.c.h.b16 %v151
    %v377 = vunpack.c.l.b16 %v152
    %v378 = vunpack.c.h.b16 %v152
    %v379 = vunpack.c.l.b16 %v153
    %v380 = vunpack.c.h.b16 %v153
    %v381 = vunpack.c.l.b16 %v154
    %v382 = vunpack.c.h.b16 %v154
    %v383 = vunpack.c.l.b16 %v155
    %v384 = vunpack.c.h.b16 %v155
    %v385 = vunpack.c.l.b16 %v156
    %v386 = vunpack.c.h.b16 %v156
    %v387 = vunpack.c.l.b16 %v157
    %v388 = vunpack.c.h.b16 %v157
    %v389 = vunpack.c.l.b16 %v158
    %v390 = vunpack.c.h.b16 %v158
    %v391 = vunpack.c.l.b16 %v159
    %v392 = vunpack.c.h.b16 %v159
    %v393 = vunpack.c.l.b16 %v160
    %v394 = vunpack.c.h.b16 %v160
    %v395 = vunpack.c.l.b16 %v161
    %v396 = vunpack.c.h.b16 %v161
    %v397 = vunpack.c.l.b16 %v162
    %v398 = vunpack.c.h.b16 %v162
    %v399 = vunpack.c.l.b16 %v163
    %v400 = vunpack.c.h.b16 %v163
    %v401 = vunpack.c.l.b16 %v164
    %v402 = vunpack.c.h.b16 %v164
    %v403 = vunpack.c.l.b16 %v165
    %v404 = vunpack.c.h.b16 %v165
    %v405 = vunpack.c.l.b16 %v166
    %v406 = vunpack.c.h.b16 %v166
    %v407 = vunpack.c.l.b16 %v167
    %v408 = vunpack.c.h.b16 %v167
    %v409 = vunpack.c.l.b16 %v168
    %v410 = vunpack.c.h.b16 %v168
    %v411 = vunpack.c.l.b16 %v169
    %v412 = vunpack.c.h.b16 %v169
    %v413 = vunpack.c.l.b16 %v170
    %v414 = vunpack.c.h.b16 %v170
    %v415 = vunpack.c.l.b16 %v171
    %v416 = vunpack.c.h.b16 %v171
    %v417 = vunpack.c.l.b16 %v172
    %v418 = vunpack.c.h.b16 %v172
    %v419 = vunpack.c.l.b16 %v173
    %v420 = vunpack.c.h.b16 %v173
    %v421 = vunpack.c.l.b16 %v174
    %v422 = vunpack.c.h.b16 %v174
    %v423 = vunpack.c.l.b16 %v175
    %v424 = vunpack.c.h.b16 %v175
    %v425 = vunpack.c.l.b16 %v176
    %v426 = vunpack.c.h.b16 %v176
    %v427 = vunpack.c.l.b16 %v177
    %v428 = vunpack.c.h.b16 %v177
    %v429 = vunpack.c.l.b16 %v178
    %v430 = vunpack.c.h.b16 %v178
    %v431 = vunpack.c.l.b16 %v179
    %v432 = vunpack.c.h.b16 %v179
    %v433 = vunpack.c.l.b16 %v180
    %v434 = vunpack.c.h.b16 %v180
    %v435 = vunpack.c.l.b16 %v181
    %v436 = vunpack.c.h.b16 %v181
    %v437 = vunpack.c.l.b16 %v182
    %v438 = vunpack.c.h.b16 %v182
    %v439 = vunpack.c.l.b16 %v183
    %v440 = vunpack.c.h.b16 %v183
    %v441 = vunpack.c.l.b16 %v184
    %v442 = vunpack.c.h.b16 %v184
    %v443 = vunpack.c.l.b16 %v185
    %v444 = vunpack.c.h.b16 %v185
    %v445 = vunpack.c.l.b16 %v186
    %v446 = vunpack.c.h.b16 %v186
    %v447 = vunpack.c.l.b16 %v187
    %v448 = vunpack.c.h.b16 %v187
    %v449 = vunpack.c.l.b16 %v188
    %v450 = vunpack.c.h.b16 %v188
    %v451 = vunpack.c.l.b16 %v189
    %v452 = vunpack.c.h.b16 %v189
    %v453 = vunpack.c.l.b16 %v190
    %v454 = vunpack.c.h.b16 %v190
    %v455 = vunpack.c.l.b16 %v191
    %v456 = vunpack.c.h.b16 %v191
    %v457 = vunpack.c.l.b16 %v192
    %v458 = vunpack.c.h.b16 %v192
    %v459 = vunpack.c.l.b16 %v193
    %v460 = vunpack.c.h.b16 %v193
    %v461 = vunpack.c.l.b16 %v194
    %v462 = vunpack.c.h.b16 %v194
    %v463 = vunpack.c.l.b16 %v195
    %v464 = vunpack.c.h.b16 %v195
    %v465 = vunpack.c.l.b16 %v196
    %v466 = vunpack.c.h.b16 %v196
    %v467 = vunpack.c.l.b16 %v197
    %v468 = vunpack.c.h.b16 %v197
    %v469 = vunpack.c.l.b16 %v198
    %v470 = vunpack.c.h.b16 %v198
    %v471 = vunpack.c.l.b16 %v199
    %v472 = vunpack.c.h.b16 %v199
    %v473 = vunpack.c.l.b16 %v200
    %v474 = vunpack.c.h.b16 %v200
    %v475 = vunpack.c.l.b16 %v201
    %v476 = vunpack.c.h.b16 %v201
    %v477 = vunpack.c.l.b16 %v202
    %v478 = vunpack.c.h.b16 %v202
    %v479 = vunpack.c.l.b16 %v203
    %v480 = vunpack.c.h.b16 %v203
    %v481 = vunpack.c.l.b16 %v204
    %v482 = vunpack.c.h.b16 %v204
    %v483 = vunpack.c.l.b16 %v205
    %v484 = vunpack.c.h.b16 %v205
    %v485 = vunpack.c.l.b16 %v206
    %v486 = vunpack.c.h.b16 %v206
    %v487 = vunpack.c.l.b16 %v207
    %v488 = vunpack.c.h.b16 %v207
    %v489 = vunpack.c.l.b16 %v208
    %v490 = vunpack.c.h.b16 %v208
    %v491 = vunpack.c.l.b16 %v209
    %v492 = vunpack.c.h.b16 %v209
    %v493 = vunpack.c.l.b16 %v210
    %v494 = vunpack.c.h.b16 %v210
    %v495 = vunpack.c.l.b16 %v211
    %v496 = vunpack.c.h.b16 %v211
    %v497 = vunpack.c.l.b16 %v212
    %v498 = vunpack.c.h.b16 %v212
    %v499 = vunpack.c.l.b16 %v213
    %v500 = vunpack.c.h.b16 %v213
    %v501 = vunpack.c.l.b16 %v214
    %v502 = vunpack.c.h.b16 %v214
    %v503 = vunpack.c.l.b16 %v215
    %v504 = vunpack.c.h.b16 %v215
    %v505 = vunpack.c.l.b16 %v216
    %v506 = vunpack.c.h.b16 %v216
    %v507 = vunpack.c.l.b16 %v217
    %v508 = vunpack.c.h.b16 %v217
    %v509 = vunpack.c.l.b16 %v218
    %v510 = vunpack.c.h.b16 %v218
    %v511 = vunpack.c.l.b16 %v219
    %v512 = vunpack.c.h.b16 %v219
    %v513 = vunpack.c.l.b16 %v220
    %v514 = vunpack.c.h.b16 %v220
    %v515 = vunpack.c.l.b16 %v221
    %v516 = vunpack.c.h.b16 %v221
    %v517 = vunpack.c.l.b16 %v222
    %v518 = vunpack.c.h.b16 %v222
    %v519 = vunpack.c.l.b16 %v223
    %v520 = vunpack.c.h.b16 %v223
    %v521 = vunpack.c.l.b16 %v224
    %v522 = vunpack.c.h.b16 %v224
    %v523 = vunpack.c.l.b16 %v225
    %v524 = vunpack.c.h.b16 %v225
    %v525 = vunpack.c.l.b16 %v226
    %v526 = vunpack.c.h.b16 %v226
    %v527 = vunpack.c.l.b16 %v227
    %v528 = vunpack.c.h.b16 %v227
    %v529 = vunpack.c.l.b16 %v228
    %v530 = vunpack.c.h.b16 %v228
    %v531 = vunpack.c.l.b16 %v229
    %v532 = vunpack.c.h.b16 %v229
    %v533 = vunpack.c.l.b16 %v230
    %v534 = vunpack.c.h.b16 %v230
    %v535 = vunpack.c.l.b16 %v231
    %v536 = vunpack.c.h.b16 %v231
    %v537 = vunpack.c.l.b16 %v232
    %v538 = vunpack.c.h.b16 %v232
    %v539 = vunpack.c.l.b16 %v233
    %v540 = vunpack.c.h.b16 %v233
    %v541 = vunpack.c.l.b16 %v234
    %v542 = vunpack.c.h.b16 %v234
    %v543 = vunpack.c.l.b16 %v235
    %v544 = vunpack.c.h.b16 %v235
    %v545 = vunpack.c.l.b16 %v236
    %v546 = vunpack.c.h.b16 %v236
    %v547 = vpack.c.b16 %v359, %v355
    %v548 = vpack.c.b16 %v360, %v356
    %v549 = vpack.c.b16 %v361, %v357
    %v550 = vpack.c.b16 %v362, %v358
    %v551 = vpack.c.b16 %v367, %v363
    %v552 = vpack.c.b16 %v368, %v364
    %v553 = vpack.c.b16 %v369, %v365
    %v554 = vpack.c.b16 %v370, %v366
    %v555 = vpack.c.b16 %v375, %v371
    %v556 = vpack.c.b16 %v376, %v372
    %v557 = vpack.c.b16 %v377, %v373
    %v558 = vpack.c.b16 %v378, %v374
    %v559 = vpack.c.b16 %v383, %v379
    %v560 = vpack.c.b16 %v384, %v380
    %v561 = vpack.c.b16 %v385, %v381
    %v562 = vpack.c.b16 %v386, %v382
    %v563 = vpack.c.b16 %v391, %v387
    %v564 = vpack.c.b16 %v392, %v388
    %v565 = vpack.c.b16 %v393, %v389
    %v566 = vpack.c.b16 %v394, %v390
    %v567 = vpack.c.b16 %v399, %v395
    %v568 = vpack.c.b16 %v400, %v396
    %v569 = vpack.c.b16 %v401, %v397
    %v570 = vpack.c.b16 %v402, %v398
    %v571 = vpack.c.b16 %v407, %v403
    %v572 = vpack.c.b16 %v408, %v404
    %v573 = vpack.c.b16 %v409, %v405
    %v574 = vpack.c.b16 %v410, %v406
    %v575 = vpack.c.b16 %v415, %v411
    %v576 = vpack.c.b16 %v416, %v412
    %v577 = vpack.c.b16 %v417, %v413
    %v578 = vpack.c.b16 %v418, %v414
    %v579 = vpack.c.b16 %v423, %v419
    %v580 = vpack.c.b16 %v424, %v420
    %v581 = vpack.c.b16 %v425, %v421
    %v582 = vpack.c.b16 %v426, %v422
    %v583 = vpack.c.b16 %v431, %v427
    %v584 = vpack.c.b16 %v432, %v428
    %v585 = vpack.c.b16 %v433, %v429
    %v586 = vpack.c.b16 %v434, %v430
    %v587 = vpack.c.b16 %v439, %v435
    %v588 = vpack.c.b16 %v440, %v436
    %v589 = vpack.c.b16 %v441, %v437
    %v590 = vpack.c.b16 %v442, %v438
    %v591 = vpack.c.b16 %v447, %v443
    %v592 = vpack.c.b16 %v448, %v444
    %v593 = vpack.c.b16 %v449, %v445
    %v594 = vpack.c.b16 %v450, %v446
    %v595 = vpack.c.b16 %v455, %v451
    %v596 = vpack.c.b16 %v456, %v452
    %v597 = vpack.c.b16 %v457, %v453
    %v598 = vpack.c.b16 %v458, %v454
    %v599 = vpack.c.b16 %v463, %v459
    %v600 = vpack.c.b16 %v464, %v460
    %v601 = vpack.c.b16 %v465, %v461
    %v602 = vpack.c.b16 %v466, %v462
    %v603 = vpack.c.b16 %v471, %v467
    %v604 = vpack.c.b16 %v472, %v468
    %v605 = vpack.c.b16 %v473, %v469
    %v606 = vpack.c.b16 %v474, %v470
    %v607 = vpack.c.b16 %v479, %v475
    %v608 = vpack.c.b16 %v480, %v476
    %v609 = vpack.c.b16 %v481, %v477
    %v610 = vpack.c.b16 %v482, %v478
    %v611 = vpack.c.b16 %v487, %v483
    %v612 = vpack.c.b16 %v488, %v484
    %v613 = vpack.c.b16 %v489, %v485
    %v614 = vpack.c.b16 %v490, %v486
    %v615 = vpack.c.b16 %v495, %v491
    %v616 = vpack.c.b16 %v496, %v492
    %v617 = vpack.c.b16 %v497, %v493
    %v618 = vpack.c.b16 %v498, %v494
    %v619 = vpack.c.b16 %v503, %v499
    %v620 = vpack.c.b16 %v504, %v500
    %v621 = vpack.c.b16 %v505, %v501
    %v622 = vpack.c.b16 %v506, %v502
    %v623 = vpack.c.b16 %v511, %v507
    %v624 = vpack.c.b16 %v512, %v508
    %v625 = vpack.c.b16 %v513, %v509
    %v626 = vpack.c.b16 %v514, %v510
    %v627 = vpack.c.b16 %v519, %v515
    %v628 = vpack.c.b16 %v520, %v516
    %v629 = vpack.c.b16 %v521, %v517
    %v630 = vpack.c.b16 %v522, %v518
    %v631 = vpack.c.b16 %v527, %v523
    %v632 = vpack.c.b16 %v528, %v524
    %v633 = vpack.c.b16 %v529, %v525
    %v634 = vpack.c.b16 %v530, %v526
    %v635 = vpack.c.b16 %v535, %v531
    %v636 = vpack.c.b16 %v536, %v532
    %v637 = vpack.c.b16 %v537, %v533
    %v638 = vpack.c.b16 %v538, %v534
    %v639 = vpack.c.b16 %v543, %v539
    %v640 = vpack.c.b16 %v544, %v540
    %v641 = vpack.c.b16 %v545, %v541
    %v642 = vpack.c.b16 %v546, %v542
    %739 = vmatprep.subr.bf16.mxu0 %v576
    %740 = vmatpush1.bf16.msra.mxu0 %v575
    %741 = vmatprep.subr.bf16.mxu0 %v572
    %742 = vmatpush1.bf16.msra.mxu0 %v571
    %743 = vmatprep.subr.bf16.mxu0 %v568
    %744 = vmatpush1.bf16.msra.mxu0 %v567
    %745 = vmatprep.subr.bf16.mxu0 %v564
    %746 = vmatpush1.bf16.msra.mxu0 %v563
    %747 = vmatprep.subr.bf16.mxu0 %v560
    %748 = vmatpush1.bf16.msra.mxu0 %v559
    %749 = vmatprep.subr.bf16.mxu0 %v556
    %750 = vmatpush1.bf16.msra.mxu0 %v555
    %751 = vmatprep.subr.bf16.mxu0 %v552
    %752 = vmatpush1.bf16.msra.mxu0 %v551
    %753 = vmatprep.subr.bf16.mxu0 %v548
    %754 = vmatpush1.bf16.msra.mxu0 %v547
    %755 = vmatprep.subr.bf16.mxu0 %v608
    %756 = vmatpush2.bf16.msra.mxu0 %v607
    %757 = vmatprep.subr.bf16.mxu0 %v604
    %758 = vmatpush2.bf16.msra.mxu0 %v603
    %759 = vmatprep.subr.bf16.mxu0 %v600
    %760 = vmatpush2.bf16.msra.mxu0 %v599
    %761 = vmatprep.subr.bf16.mxu0 %v596
    %762 = vmatpush2.bf16.msra.mxu0 %v595
    %763 = vmatprep.subr.bf16.mxu0 %v592
    %764 = vmatpush2.bf16.msra.mxu0 %v591
    %765 = vmatprep.subr.bf16.mxu0 %v588
    %766 = vmatpush2.bf16.msra.mxu0 %v587
    %767 = vmatprep.subr.bf16.mxu0 %v584
    %768 = vmatpush2.bf16.msra.mxu0 %v583
    %769 = vmatprep.subr.bf16.mxu0 %v580
    %770 = vmatpush2.bf16.msra.mxu0 %v579
    %771 = vmatprep.mubr.bf16.mxu0 %v139
    %772 = vmatmul.mubr.bf16.gmra.mxu0 %v138
    %v773 = vpop.f32.mrf.mxu0
    %v774 = vadd.f32 %v242, %v773
    %v775 = vpop.f32.mrf.mxu0
    %v776 = vadd.f32 %v246, %v775
    %v777 = vpop.f32.mrf.mxu0
    %v778 = vpop.f32.mrf.mxu0
    %779 = vdwg.mxu0
    %780 = vmatprep.subr.bf16.mxu0 %v640
    %781 = vmatpush1.bf16.msra.mxu0 %v639
    %782 = vmatprep.subr.bf16.mxu0 %v636
    %783 = vmatpush1.bf16.msra.mxu0 %v635
    %784 = vmatprep.subr.bf16.mxu0 %v632
    %785 = vmatpush1.bf16.msra.mxu0 %v631
    %786 = vmatprep.subr.bf16.mxu0 %v628
    %787 = vmatpush1.bf16.msra.mxu0 %v627
    %788 = vmatprep.subr.bf16.mxu0 %v624
    %789 = vmatpush1.bf16.msra.mxu0 %v623
    %790 = vmatprep.subr.bf16.mxu0 %v620
    %791 = vmatpush1.bf16.msra.mxu0 %v619
    %792 = vmatprep.subr.bf16.mxu0 %v616
    %793 = vmatpush1.bf16.msra.mxu0 %v615
    %794 = vmatprep.subr.bf16.mxu0 %v612
    %795 = vmatpush1.bf16.msra.mxu0 %v611
    %796 = vmatprep.subr.bf16.mxu0 0
    %797 = vmatpush2.bf16.msra.mxu0 0
    %798 = vmatprep.subr.bf16.mxu0 0
    %799 = vmatpush2.bf16.msra.mxu0 0
    %800 = vmatprep.subr.bf16.mxu0 0
    %801 = vmatpush2.bf16.msra.mxu0 0
    %802 = vmatprep.subr.bf16.mxu0 0
    %803 = vmatpush2.bf16.msra.mxu0 0
    %804 = vmatprep.subr.bf16.mxu0 0
    %805 = vmatpush2.bf16.msra.mxu0 0
    %806 = vmatprep.subr.bf16.mxu0 0
    %807 = vmatpush2.bf16.msra.mxu0 0
    %808 = vmatprep.subr.bf16.mxu0 0
    %809 = vmatpush2.bf16.msra.mxu0 0
    %810 = vmatprep.subr.bf16.mxu0 0
    %811 = vmatpush2.bf16.msra.mxu0 0
    %812 = vmatprep.mubr.bf16.mxu0 0
    %813 = vmatmul.mubr.bf16.gmra.mxu0 %v140
    %v814 = vpop.f32.mrf.mxu0
    %v815 = vadd.f32 %v774, %v814
    %v816 = vpop.f32.mrf.mxu0
    %v817 = vadd.f32 %v776, %v816
    %v818 = vpop.f32.mrf.mxu0
    %v819 = vpop.f32.mrf.mxu0
    %820 = vdwg.mxu0
    %821 = vmatprep.subr.bf16.mxu0 %v578
    %822 = vmatpush1.bf16.msra.mxu0 %v577
    %823 = vmatprep.subr.bf16.mxu0 %v574
    %824 = vmatpush1.bf16.msra.mxu0 %v573
    %825 = vmatprep.subr.bf16.mxu0 %v570
    %826 = vmatpush1.bf16.msra.mxu0 %v569
    %827 = vmatprep.subr.bf16.mxu0 %v566
    %828 = vmatpush1.bf16.msra.mxu0 %v565
    %829 = vmatprep.subr.bf16.mxu0 %v562
    %830 = vmatpush1.bf16.msra.mxu0 %v561
    %831 = vmatprep.subr.bf16.mxu0 %v558
    %832 = vmatpush1.bf16.msra.mxu0 %v557
    %833 = vmatprep.subr.bf16.mxu0 %v554
    %834 = vmatpush1.bf16.msra.mxu0 %v553
    %835 = vmatprep.subr.bf16.mxu0 %v550
    %836 = vmatpush1.bf16.msra.mxu0 %v549
    %837 = vmatprep.subr.bf16.mxu0 %v610
    %838 = vmatpush2.bf16.msra.mxu0 %v609
    %839 = vmatprep.subr.bf16.mxu0 %v606
    %840 = vmatpush2.bf16.msra.mxu0 %v605
    %841 = vmatprep.subr.bf16.mxu0 %v602
    %842 = vmatpush2.bf16.msra.mxu0 %v601
    %843 = vmatprep.subr.bf16.mxu0 %v598
    %844 = vmatpush2.bf16.msra.mxu0 %v597
    %845 = vmatprep.subr.bf16.mxu0 %v594
    %846 = vmatpush2.bf16.msra.mxu0 %v593
    %847 = vmatprep.subr.bf16.mxu0 %v590
    %848 = vmatpush2.bf16.msra.mxu0 %v589
    %849 = vmatprep.subr.bf16.mxu0 %v586
    %850 = vmatpush2.bf16.msra.mxu0 %v585
    %851 = vmatprep.subr.bf16.mxu0 %v582
    %852 = vmatpush2.bf16.msra.mxu0 %v581
    %853 = vmatprep.mubr.bf16.mxu0 %v139
    %854 = vmatmul.mubr.bf16.gmra.mxu0 %v138
    %v855 = vpop.f32.mrf.mxu0
    %v856 = vadd.f32 %v250, %v855
    %v857 = vpop.f32.mrf.mxu0
    %v858 = vadd.f32 %v254, %v857
    %v859 = vpop.f32.mrf.mxu0
    %v860 = vpop.f32.mrf.mxu0
    %861 = vdwg.mxu0
    %862 = vmatprep.subr.bf16.mxu0 %v642
    %863 = vmatpush1.bf16.msra.mxu0 %v641
    %864 = vmatprep.subr.bf16.mxu0 %v638
    %865 = vmatpush1.bf16.msra.mxu0 %v637
    %866 = vmatprep.subr.bf16.mxu0 %v634
    %867 = vmatpush1.bf16.msra.mxu0 %v633
    %868 = vmatprep.subr.bf16.mxu0 %v630
    %869 = vmatpush1.bf16.msra.mxu0 %v629
    %870 = vmatprep.subr.bf16.mxu0 %v626
    %871 = vmatpush1.bf16.msra.mxu0 %v625
    %872 = vmatprep.subr.bf16.mxu0 %v622
    %873 = vmatpush1.bf16.msra.mxu0 %v621
    %874 = vmatprep.subr.bf16.mxu0 %v618
    %875 = vmatpush1.bf16.msra.mxu0 %v617
    %876 = vmatprep.subr.bf16.mxu0 %v614
    %877 = vmatpush1.bf16.msra.mxu0 %v613
    %878 = vmatprep.subr.bf16.mxu0 0
    %879 = vmatpush2.bf16.msra.mxu0 0
    %880 = vmatprep.subr.bf16.mxu0 0
    %881 = vmatpush2.bf16.msra.mxu0 0
    %882 = vmatprep.subr.bf16.mxu0 0
    %883 = vmatpush2.bf16.msra.mxu0 0
    %884 = vmatprep.subr.bf16.mxu0 0
    %885 = vmatpush2.bf16.msra.mxu0 0
    %886 = vmatprep.subr.bf16.mxu0 0
    %887 = vmatpush2.bf16.msra.mxu0 0
    %888 = vmatprep.subr.bf16.mxu0 0
    %889 = vmatpush2.bf16.msra.mxu0 0
    %890 = vmatprep.subr.bf16.mxu0 0
    %891 = vmatpush2.bf16.msra.mxu0 0
    %892 = vmatprep.subr.bf16.mxu0 0
    %893 = vmatpush2.bf16.msra.mxu0 0
    %894 = vmatprep.mubr.bf16.mxu0 0
    %895 = vmatmul.mubr.bf16.gmra.mxu0 %v140
    %v896 = vpop.f32.mrf.mxu0
    %v897 = vadd.f32 %v856, %v896
    %v898 = vpop.f32.mrf.mxu0
    %v899 = vadd.f32 %v858, %v898
    %v900 = vpop.f32.mrf.mxu0
    %v901 = vpop.f32.mrf.mxu0
    %902 = vdwg.mxu0
    %v903 = vmax.f32 %v815, 0.0
    %v904 = vmax.f32 %v817, 0.0
    %v905 = vmax.f32 %v897, 0.0
    %v906 = vmax.f32 %v899, 0.0
    %v907 = vpack.c.bf16 %v903, %v903
    %v908 = vpack.c.bf16 %v904, %v904
    %v909 = vpack.c.bf16 %v905, %v905
    %v910 = vpack.c.bf16 %v906, %v906
    %v911 = vld [vmem:[#allocation8] sm:$0xff]
    %v912 = vld [vmem:[#allocation8 + $0x8] sm:$0xff]
    %v913 = vld [vmem:[#allocation8 + $0x10] sm:$0xff]
    %v914 = vld [vmem:[#allocation8 + $0x18] sm:$0xff]
    %v915 = vld [vmem:[#allocation8 + $0x20] sm:$0xff]
    %v916 = vld [vmem:[#allocation8 + $0x28] sm:$0xff]
    %v917 = vld [vmem:[#allocation8 + $0x30] sm:$0xff]
    %v918 = vld [vmem:[#allocation8 + $0x38] sm:$0xff]
    %v919 = vld [vmem:[#allocation8 + $0x40] sm:$0xff]
    %v920 = vld [vmem:[#allocation8 + $0x48] sm:$0xff]
    %v921 = vld [vmem:[#allocation8 + $0x50] sm:$0xff]
    %v922 = vld [vmem:[#allocation8 + $0x58] sm:$0xff]
    %v923 = vld [vmem:[#allocation8 + $0x60] sm:$0xff]
    %v924 = vld [vmem:[#allocation8 + $0x68] sm:$0xff]
    %v925 = vld [vmem:[#allocation8 + $0x70] sm:$0xff]
    %v926 = vld [vmem:[#allocation8 + $0x78] sm:$0xff]
    %v927 = vld [vmem:[#allocation8 + $0x80] sm:$0xff]
    %v928 = vld [vmem:[#allocation8 + $0x88] sm:$0xff]
    %v929 = vld [vmem:[#allocation8 + $0x90] sm:$0xff]
    %v930 = vld [vmem:[#allocation8 + $0x98] sm:$0xff]
    %v931 = vld [vmem:[#allocation8 + $0xa0] sm:$0xff]
    %v932 = vld [vmem:[#allocation8 + $0xa8] sm:$0xff]
    %v933 = vld [vmem:[#allocation8 + $0xb0] sm:$0xff]
    %v934 = vld [vmem:[#allocation8 + $0xb8] sm:$0xff]
    %v935 = vld [vmem:[#allocation8 + $0xc0] sm:$0xff]
    %v936 = vld [vmem:[#allocation8 + $0xc8] sm:$0xff]
    %v937 = vld [vmem:[#allocation8 + $0xd0] sm:$0xff]
    %v938 = vld [vmem:[#allocation8 + $0xd8] sm:$0xff]
    %v939 = vld [vmem:[#allocation8 + $0xe0] sm:$0xff]
    %v940 = vld [vmem:[#allocation8 + $0xe8] sm:$0xff]
    %v941 = vld [vmem:[#allocation8 + $0xf0] sm:$0xff]
    %v942 = vld [vmem:[#allocation8 + $0xf8] sm:$0xff]
    %v943 = vld [vmem:[#allocation8 + $0x100] sm:$0xff]
    %v944 = vld [vmem:[#allocation8 + $0x108] sm:$0xff]
    %v945 = vld [vmem:[#allocation8 + $0x110] sm:$0xff]
    %v946 = vld [vmem:[#allocation8 + $0x118] sm:$0xff]
    %v947 = vld [vmem:[#allocation8 + $0x120] sm:$0xff]
    %v948 = vld [vmem:[#allocation8 + $0x128] sm:$0xff]
    %v949 = vld [vmem:[#allocation8 + $0x130] sm:$0xff]
    %v950 = vld [vmem:[#allocation8 + $0x138] sm:$0xff]
    %v951 = vld [vmem:[#allocation8 + $0x140] sm:$0xff]
    %v952 = vld [vmem:[#allocation8 + $0x148] sm:$0xff]
    %v953 = vld [vmem:[#allocation8 + $0x150] sm:$0xff]
    %v954 = vld [vmem:[#allocation8 + $0x158] sm:$0xff]
    %v955 = vld [vmem:[#allocation8 + $0x160] sm:$0xff]
    %v956 = vld [vmem:[#allocation8 + $0x168] sm:$0xff]
    %v957 = vld [vmem:[#allocation8 + $0x170] sm:$0xff]
    %v958 = vld [vmem:[#allocation8 + $0x178] sm:$0xff]
    %v959 = vld [vmem:[#allocation8 + $0x180] sm:$0xff]
    %v960 = vld [vmem:[#allocation8 + $0x188] sm:$0xff]
    %v961 = vld [vmem:[#allocation8 + $0x190] sm:$0xff]
    %v962 = vld [vmem:[#allocation8 + $0x198] sm:$0xff]
    %v963 = vld [vmem:[#allocation8 + $0x1a0] sm:$0xff]
    %v964 = vld [vmem:[#allocation8 + $0x1a8] sm:$0xff]
    %v965 = vld [vmem:[#allocation8 + $0x1b0] sm:$0xff]
    %v966 = vld [vmem:[#allocation8 + $0x1b8] sm:$0xff]
    %v967 = vld [vmem:[#allocation8 + $0x1c0] sm:$0xff]
    %v968 = vld [vmem:[#allocation8 + $0x1c8] sm:$0xff]
    %v969 = vld [vmem:[#allocation8 + $0x1d0] sm:$0xff]
    %v970 = vld [vmem:[#allocation8 + $0x1d8] sm:$0xff]
    %v971 = vld [vmem:[#allocation8 + $0x1e0] sm:$0xff]
    %v972 = vld [vmem:[#allocation8 + $0x1e8] sm:$0xff]
    %v973 = vld [vmem:[#allocation8 + $0x1f0] sm:$0xff]
    %v974 = vld [vmem:[#allocation8 + $0x1f8] sm:$0xff]
    %v975 = vld [vmem:[#allocation8 + $0x200] sm:$0xff]
    %v976 = vld [vmem:[#allocation8 + $0x208] sm:$0xff]
    %v977 = vld [vmem:[#allocation8 + $0x210] sm:$0xff]
    %v978 = vld [vmem:[#allocation8 + $0x218] sm:$0xff]
    %v979 = vld [vmem:[#allocation8 + $0x220] sm:$0xff]
    %v980 = vld [vmem:[#allocation8 + $0x228] sm:$0xff]
    %v981 = vld [vmem:[#allocation8 + $0x230] sm:$0xff]
    %v982 = vld [vmem:[#allocation8 + $0x238] sm:$0xff]
    %v983 = vld [vmem:[#allocation8 + $0x240] sm:$0xff]
    %v984 = vld [vmem:[#allocation8 + $0x248] sm:$0xff]
    %v985 = vld [vmem:[#allocation8 + $0x250] sm:$0xff]
    %v986 = vld [vmem:[#allocation8 + $0x258] sm:$0xff]
    %v987 = vld [vmem:[#allocation8 + $0x260] sm:$0xff]
    %v988 = vld [vmem:[#allocation8 + $0x268] sm:$0xff]
    %v989 = vld [vmem:[#allocation8 + $0x270] sm:$0xff]
    %v990 = vld [vmem:[#allocation8 + $0x278] sm:$0xff]
    %v991 = vld [vmem:[#allocation8 + $0x280] sm:$0xff]
    %v992 = vld [vmem:[#allocation8 + $0x288] sm:$0xff]
    %v993 = vld [vmem:[#allocation8 + $0x290] sm:$0xff]
    %v994 = vld [vmem:[#allocation8 + $0x298] sm:$0xff]
    %v995 = vld [vmem:[#allocation8 + $0x2a0] sm:$0xff]
    %v996 = vld [vmem:[#allocation8 + $0x2a8] sm:$0xff]
    %v997 = vld [vmem:[#allocation8 + $0x2b0] sm:$0xff]
    %v998 = vld [vmem:[#allocation8 + $0x2b8] sm:$0xff]
    %v999 = vld [vmem:[#allocation8 + $0x2c0] sm:$0xff]
    %v1000 = vld [vmem:[#allocation8 + $0x2c8] sm:$0xff]
    %v1001 = vld [vmem:[#allocation8 + $0x2d0] sm:$0xff]
    %v1002 = vld [vmem:[#allocation8 + $0x2d8] sm:$0xff]
    %v1003 = vld [vmem:[#allocation8 + $0x2e0] sm:$0xff]
    %v1004 = vld [vmem:[#allocation8 + $0x2e8] sm:$0xff]
    %v1005 = vld [vmem:[#allocation8 + $0x2f0] sm:$0xff]
    %v1006 = vld [vmem:[#allocation8 + $0x2f8] sm:$0xff]
    %v1007 = vld [vmem:[#allocation8 + $0x300] sm:$0xff]
    %v1008 = vld [vmem:[#allocation8 + $0x308] sm:$0xff]
    %v1009 = vld [vmem:[#allocation8 + $0x310] sm:$0xff]
    %v1010 = vld [vmem:[#allocation8 + $0x318] sm:$0xff]
    %v1011 = vld [vmem:[#allocation8 + $0x320] sm:$0xff]
    %v1012 = vld [vmem:[#allocation8 + $0x328] sm:$0xff]
    %v1013 = vld [vmem:[#allocation8 + $0x330] sm:$0xff]
    %v1014 = vld [vmem:[#allocation8 + $0x338] sm:$0xff]
    %v1015 = vld [vmem:[#allocation8 + $0x340] sm:$0xff]
    %v1016 = vld [vmem:[#allocation8 + $0x348] sm:$0xff]
    %v1017 = vld [vmem:[#allocation8 + $0x350] sm:$0xff]
    %v1018 = vld [vmem:[#allocation8 + $0x358] sm:$0xff]
    %v1019 = vld [vmem:[#allocation8 + $0x360] sm:$0xff]
    %v1020 = vld [vmem:[#allocation8 + $0x368] sm:$0xff]
    %v1021 = vld [vmem:[#allocation8 + $0x370] sm:$0xff]
    %v1022 = vld [vmem:[#allocation8 + $0x378] sm:$0xff]
    %v1023 = vld [vmem:[#allocation8 + $0x380] sm:$0xff]
    %v1024 = vld [vmem:[#allocation8 + $0x388] sm:$0xff]
    %v1025 = vld [vmem:[#allocation8 + $0x390] sm:$0xff]
    %v1026 = vld [vmem:[#allocation8 + $0x398] sm:$0xff]
    %v1027 = vld [vmem:[#allocation8 + $0x3a0] sm:$0xff]
    %v1028 = vld [vmem:[#allocation8 + $0x3a8] sm:$0xff]
    %v1029 = vld [vmem:[#allocation8 + $0x3b0] sm:$0xff]
    %v1030 = vld [vmem:[#allocation8 + $0x3b8] sm:$0xff]
    %v1031 = vld [vmem:[#allocation8 + $0x3c0] sm:$0xff]
    %v1032 = vld [vmem:[#allocation8 + $0x3c8] sm:$0xff]
    %v1033 = vld [vmem:[#allocation8 + $0x3d0] sm:$0xff]
    %v1034 = vld [vmem:[#allocation8 + $0x3d8] sm:$0xff]
    %v1035 = vld [vmem:[#allocation8 + $0x3e0] sm:$0xff]
    %v1036 = vld [vmem:[#allocation8 + $0x3e8] sm:$0xff]
    %v1037 = vld [vmem:[#allocation8 + $0x3f0] sm:$0xff]
    %v1038 = vld [vmem:[#allocation8 + $0x3f8] sm:$0xff]
    %v1039 = vld [vmem:[#allocation10] sm:$0xf]
    %v1041 = vlaneseq
    %v1042 = vshrl.u32 %v1041, 7
    %v1043 = vsub.s32 0, %v1042
    %v1044 = vrot.slane %v1039, %v1043
    %v1045 = vlaneseq
    %v1046 = vshrl.u32 %v1045, 7
    %v1047 = vsub.s32 1, %v1046
    %v1048 = vrot.slane %v1039, %v1047
    %v1049 = vlaneseq
    %v1050 = vshrl.u32 %v1049, 7
    %v1051 = vsub.s32 2, %v1050
    %v1052 = vrot.slane %v1039, %v1051
    %v1053 = vlaneseq
    %v1054 = vshrl.u32 %v1053, 7
    %v1055 = vsub.s32 3, %v1054
    %v1056 = vrot.slane %v1039, %v1055
    %v1189 = vunpack.c.l.b16 %v911
    %v1190 = vunpack.c.h.b16 %v911
    %v1191 = vunpack.c.l.b16 %v912
    %v1192 = vunpack.c.h.b16 %v912
    %v1193 = vunpack.c.l.b16 %v913
    %v1194 = vunpack.c.h.b16 %v913
    %v1195 = vunpack.c.l.b16 %v914
    %v1196 = vunpack.c.h.b16 %v914
    %v1197 = vunpack.c.l.b16 %v915
    %v1198 = vunpack.c.h.b16 %v915
    %v1199 = vunpack.c.l.b16 %v916
    %v1200 = vunpack.c.h.b16 %v916
    %v1201 = vunpack.c.l.b16 %v917
    %v1202 = vunpack.c.h.b16 %v917
    %v1203 = vunpack.c.l.b16 %v918
    %v1204 = vunpack.c.h.b16 %v918
    %v1205 = vunpack.c.l.b16 %v919
    %v1206 = vunpack.c.h.b16 %v919
    %v1207 = vunpack.c.l.b16 %v920
    %v1208 = vunpack.c.h.b16 %v920
    %v1209 = vunpack.c.l.b16 %v921
    %v1210 = vunpack.c.h.b16 %v921
    %v1211 = vunpack.c.l.b16 %v922
    %v1212 = vunpack.c.h.b16 %v922
    %v1213 = vunpack.c.l.b16 %v923
    %v1214 = vunpack.c.h.b16 %v923
    %v1215 = vunpack.c.l.b16 %v924
    %v1216 = vunpack.c.h.b16 %v924
    %v1217 = vunpack.c.l.b16 %v925
    %v1218 = vunpack.c.h.b16 %v925
    %v1219 = vunpack.c.l.b16 %v926
    %v1220 = vunpack.c.h.b16 %v926
    %v1221 = vunpack.c.l.b16 %v927
    %v1222 = vunpack.c.h.b16 %v927
    %v1223 = vunpack.c.l.b16 %v928
    %v1224 = vunpack.c.h.b16 %v928
    %v1225 = vunpack.c.l.b16 %v929
    %v1226 = vunpack.c.h.b16 %v929
    %v1227 = vunpack.c.l.b16 %v930
    %v1228 = vunpack.c.h.b16 %v930
    %v1229 = vunpack.c.l.b16 %v931
    %v1230 = vunpack.c.h.b16 %v931
    %v1231 = vunpack.c.l.b16 %v932
    %v1232 = vunpack.c.h.b16 %v932
    %v1233 = vunpack.c.l.b16 %v933
    %v1234 = vunpack.c.h.b16 %v933
    %v1235 = vunpack.c.l.b16 %v934
    %v1236 = vunpack.c.h.b16 %v934
    %v1237 = vunpack.c.l.b16 %v935
    %v1238 = vunpack.c.h.b16 %v935
    %v1239 = vunpack.c.l.b16 %v936
    %v1240 = vunpack.c.h.b16 %v936
    %v1241 = vunpack.c.l.b16 %v937
    %v1242 = vunpack.c.h.b16 %v937
    %v1243 = vunpack.c.l.b16 %v938
    %v1244 = vunpack.c.h.b16 %v938
    %v1245 = vunpack.c.l.b16 %v939
    %v1246 = vunpack.c.h.b16 %v939
    %v1247 = vunpack.c.l.b16 %v940
    %v1248 = vunpack.c.h.b16 %v940
    %v1249 = vunpack.c.l.b16 %v941
    %v1250 = vunpack.c.h.b16 %v941
    %v1251 = vunpack.c.l.b16 %v942
    %v1252 = vunpack.c.h.b16 %v942
    %v1253 = vunpack.c.l.b16 %v943
    %v1254 = vunpack.c.h.b16 %v943
    %v1255 = vunpack.c.l.b16 %v944
    %v1256 = vunpack.c.h.b16 %v944
    %v1257 = vunpack.c.l.b16 %v945
    %v1258 = vunpack.c.h.b16 %v945
    %v1259 = vunpack.c.l.b16 %v946
    %v1260 = vunpack.c.h.b16 %v946
    %v1261 = vunpack.c.l.b16 %v947
    %v1262 = vunpack.c.h.b16 %v947
    %v1263 = vunpack.c.l.b16 %v948
    %v1264 = vunpack.c.h.b16 %v948
    %v1265 = vunpack.c.l.b16 %v949
    %v1266 = vunpack.c.h.b16 %v949
    %v1267 = vunpack.c.l.b16 %v950
    %v1268 = vunpack.c.h.b16 %v950
    %v1269 = vunpack.c.l.b16 %v951
    %v1270 = vunpack.c.h.b16 %v951
    %v1271 = vunpack.c.l.b16 %v952
    %v1272 = vunpack.c.h.b16 %v952
    %v1273 = vunpack.c.l.b16 %v953
    %v1274 = vunpack.c.h.b16 %v953
    %v1275 = vunpack.c.l.b16 %v954
    %v1276 = vunpack.c.h.b16 %v954
    %v1277 = vunpack.c.l.b16 %v955
    %v1278 = vunpack.c.h.b16 %v955
    %v1279 = vunpack.c.l.b16 %v956
    %v1280 = vunpack.c.h.b16 %v956
    %v1281 = vunpack.c.l.b16 %v957
    %v1282 = vunpack.c.h.b16 %v957
    %v1283 = vunpack.c.l.b16 %v958
    %v1284 = vunpack.c.h.b16 %v958
    %v1285 = vunpack.c.l.b16 %v959
    %v1286 = vunpack.c.h.b16 %v959
    %v1287 = vunpack.c.l.b16 %v960
    %v1288 = vunpack.c.h.b16 %v960
    %v1289 = vunpack.c.l.b16 %v961
    %v1290 = vunpack.c.h.b16 %v961
    %v1291 = vunpack.c.l.b16 %v962
    %v1292 = vunpack.c.h.b16 %v962
    %v1293 = vunpack.c.l.b16 %v963
    %v1294 = vunpack.c.h.b16 %v963
    %v1295 = vunpack.c.l.b16 %v964
    %v1296 = vunpack.c.h.b16 %v964
    %v1297 = vunpack.c.l.b16 %v965
    %v1298 = vunpack.c.h.b16 %v965
    %v1299 = vunpack.c.l.b16 %v966
    %v1300 = vunpack.c.h.b16 %v966
    %v1301 = vunpack.c.l.b16 %v967
    %v1302 = vunpack.c.h.b16 %v967
    %v1303 = vunpack.c.l.b16 %v968
    %v1304 = vunpack.c.h.b16 %v968
    %v1305 = vunpack.c.l.b16 %v969
    %v1306 = vunpack.c.h.b16 %v969
    %v1307 = vunpack.c.l.b16 %v970
    %v1308 = vunpack.c.h.b16 %v970
    %v1309 = vunpack.c.l.b16 %v971
    %v1310 = vunpack.c.h.b16 %v971
    %v1311 = vunpack.c.l.b16 %v972
    %v1312 = vunpack.c.h.b16 %v972
    %v1313 = vunpack.c.l.b16 %v973
    %v1314 = vunpack.c.h.b16 %v973
    %v1315 = vunpack.c.l.b16 %v974
    %v1316 = vunpack.c.h.b16 %v974
    %v1317 = vunpack.c.l.b16 %v975
    %v1318 = vunpack.c.h.b16 %v975
    %v1319 = vunpack.c.l.b16 %v976
    %v1320 = vunpack.c.h.b16 %v976
    %v1321 = vunpack.c.l.b16 %v977
    %v1322 = vunpack.c.h.b16 %v977
    %v1323 = vunpack.c.l.b16 %v978
    %v1324 = vunpack.c.h.b16 %v978
    %v1325 = vunpack.c.l.b16 %v979
    %v1326 = vunpack.c.h.b16 %v979
    %v1327 = vunpack.c.l.b16 %v980
    %v1328 = vunpack.c.h.b16 %v980
    %v1329 = vunpack.c.l.b16 %v981
    %v1330 = vunpack.c.h.b16 %v981
    %v1331 = vunpack.c.l.b16 %v982
    %v1332 = vunpack.c.h.b16 %v982
    %v1333 = vunpack.c.l.b16 %v983
    %v1334 = vunpack.c.h.b16 %v983
    %v1335 = vunpack.c.l.b16 %v984
    %v1336 = vunpack.c.h.b16 %v984
    %v1337 = vunpack.c.l.b16 %v985
    %v1338 = vunpack.c.h.b16 %v985
    %v1339 = vunpack.c.l.b16 %v986
    %v1340 = vunpack.c.h.b16 %v986
    %v1341 = vunpack.c.l.b16 %v987
    %v1342 = vunpack.c.h.b16 %v987
    %v1343 = vunpack.c.l.b16 %v988
    %v1344 = vunpack.c.h.b16 %v988
    %v1345 = vunpack.c.l.b16 %v989
    %v1346 = vunpack.c.h.b16 %v989
    %v1347 = vunpack.c.l.b16 %v990
    %v1348 = vunpack.c.h.b16 %v990
    %v1349 = vunpack.c.l.b16 %v991
    %v1350 = vunpack.c.h.b16 %v991
    %v1351 = vunpack.c.l.b16 %v992
    %v1352 = vunpack.c.h.b16 %v992
    %v1353 = vunpack.c.l.b16 %v993
    %v1354 = vunpack.c.h.b16 %v993
    %v1355 = vunpack.c.l.b16 %v994
    %v1356 = vunpack.c.h.b16 %v994
    %v1357 = vunpack.c.l.b16 %v995
    %v1358 = vunpack.c.h.b16 %v995
    %v1359 = vunpack.c.l.b16 %v996
    %v1360 = vunpack.c.h.b16 %v996
    %v1361 = vunpack.c.l.b16 %v997
    %v1362 = vunpack.c.h.b16 %v997
    %v1363 = vunpack.c.l.b16 %v998
    %v1364 = vunpack.c.h.b16 %v998
    %v1365 = vunpack.c.l.b16 %v999
    %v1366 = vunpack.c.h.b16 %v999
    %v1367 = vunpack.c.l.b16 %v1000
    %v1368 = vunpack.c.h.b16 %v1000
    %v1369 = vunpack.c.l.b16 %v1001
    %v1370 = vunpack.c.h.b16 %v1001
    %v1371 = vunpack.c.l.b16 %v1002
    %v1372 = vunpack.c.h.b16 %v1002
    %v1373 = vunpack.c.l.b16 %v1003
    %v1374 = vunpack.c.h.b16 %v1003
    %v1375 = vunpack.c.l.b16 %v1004
    %v1376 = vunpack.c.h.b16 %v1004
    %v1377 = vunpack.c.l.b16 %v1005
    %v1378 = vunpack.c.h.b16 %v1005
    %v1379 = vunpack.c.l.b16 %v1006
    %v1380 = vunpack.c.h.b16 %v1006
    %v1381 = vunpack.c.l.b16 %v1007
    %v1382 = vunpack.c.h.b16 %v1007
    %v1383 = vunpack.c.l.b16 %v1008
    %v1384 = vunpack.c.h.b16 %v1008
    %v1385 = vunpack.c.l.b16 %v1009
    %v1386 = vunpack.c.h.b16 %v1009
    %v1387 = vunpack.c.l.b16 %v1010
    %v1388 = vunpack.c.h.b16 %v1010
    %v1389 = vunpack.c.l.b16 %v1011
    %v1390 = vunpack.c.h.b16 %v1011
    %v1391 = vunpack.c.l.b16 %v1012
    %v1392 = vunpack.c.h.b16 %v1012
    %v1393 = vunpack.c.l.b16 %v1013
    %v1394 = vunpack.c.h.b16 %v1013
    %v1395 = vunpack.c.l.b16 %v1014
    %v1396 = vunpack.c.h.b16 %v1014
    %v1397 = vunpack.c.l.b16 %v1015
    %v1398 = vunpack.c.h.b16 %v1015
    %v1399 = vunpack.c.l.b16 %v1016
    %v1400 = vunpack.c.h.b16 %v1016
    %v1401 = vunpack.c.l.b16 %v1017
    %v1402 = vunpack.c.h.b16 %v1017
    %v1403 = vunpack.c.l.b16 %v1018
    %v1404 = vunpack.c.h.b16 %v1018
    %v1405 = vunpack.c.l.b16 %v1019
    %v1406 = vunpack.c.h.b16 %v1019
    %v1407 = vunpack.c.l.b16 %v1020
    %v1408 = vunpack.c.h.b16 %v1020
    %v1409 = vunpack.c.l.b16 %v1021
    %v1410 = vunpack.c.h.b16 %v1021
    %v1411 = vunpack.c.l.b16 %v1022
    %v1412 = vunpack.c.h.b16 %v1022
    %v1413 = vunpack.c.l.b16 %v1023
    %v1414 = vunpack.c.h.b16 %v1023
    %v1415 = vunpack.c.l.b16 %v1024
    %v1416 = vunpack.c.h.b16 %v1024
    %v1417 = vunpack.c.l.b16 %v1025
    %v1418 = vunpack.c.h.b16 %v1025
    %v1419 = vunpack.c.l.b16 %v1026
    %v1420 = vunpack.c.h.b16 %v1026
    %v1421 = vunpack.c.l.b16 %v1027
    %v1422 = vunpack.c.h.b16 %v1027
    %v1423 = vunpack.c.l.b16 %v1028
    %v1424 = vunpack.c.h.b16 %v1028
    %v1425 = vunpack.c.l.b16 %v1029
    %v1426 = vunpack.c.h.b16 %v1029
    %v1427 = vunpack.c.l.b16 %v1030
    %v1428 = vunpack.c.h.b16 %v1030
    %v1429 = vunpack.c.l.b16 %v1031
    %v1430 = vunpack.c.h.b16 %v1031
    %v1431 = vunpack.c.l.b16 %v1032
    %v1432 = vunpack.c.h.b16 %v1032
    %v1433 = vunpack.c.l.b16 %v1033
    %v1434 = vunpack.c.h.b16 %v1033
    %v1435 = vunpack.c.l.b16 %v1034
    %v1436 = vunpack.c.h.b16 %v1034
    %v1437 = vunpack.c.l.b16 %v1035
    %v1438 = vunpack.c.h.b16 %v1035
    %v1439 = vunpack.c.l.b16 %v1036
    %v1440 = vunpack.c.h.b16 %v1036
    %v1441 = vunpack.c.l.b16 %v1037
    %v1442 = vunpack.c.h.b16 %v1037
    %v1443 = vunpack.c.l.b16 %v1038
    %v1444 = vunpack.c.h.b16 %v1038
    %v1445 = vpack.c.b16 %v1193, %v1189
    %v1446 = vpack.c.b16 %v1194, %v1190
    %v1447 = vpack.c.b16 %v1195, %v1191
    %v1448 = vpack.c.b16 %v1196, %v1192
    %v1449 = vpack.c.b16 %v1201, %v1197
    %v1450 = vpack.c.b16 %v1202, %v1198
    %v1451 = vpack.c.b16 %v1203, %v1199
    %v1452 = vpack.c.b16 %v1204, %v1200
    %v1453 = vpack.c.b16 %v1209, %v1205
    %v1454 = vpack.c.b16 %v1210, %v1206
    %v1455 = vpack.c.b16 %v1211, %v1207
    %v1456 = vpack.c.b16 %v1212, %v1208
    %v1457 = vpack.c.b16 %v1217, %v1213
    %v1458 = vpack.c.b16 %v1218, %v1214
    %v1459 = vpack.c.b16 %v1219, %v1215
    %v1460 = vpack.c.b16 %v1220, %v1216
    %v1461 = vpack.c.b16 %v1225, %v1221
    %v1462 = vpack.c.b16 %v1226, %v1222
    %v1463 = vpack.c.b16 %v1227, %v1223
    %v1464 = vpack.c.b16 %v1228, %v1224
    %v1465 = vpack.c.b16 %v1233, %v1229
    %v1466 = vpack.c.b16 %v1234, %v1230
    %v1467 = vpack.c.b16 %v1235, %v1231
    %v1468 = vpack.c.b16 %v1236, %v1232
    %v1469 = vpack.c.b16 %v1241, %v1237
    %v1470 = vpack.c.b16 %v1242, %v1238
    %v1471 = vpack.c.b16 %v1243, %v1239
    %v1472 = vpack.c.b16 %v1244, %v1240
    %v1473 = vpack.c.b16 %v1249, %v1245
    %v1474 = vpack.c.b16 %v1250, %v1246
    %v1475 = vpack.c.b16 %v1251, %v1247
    %v1476 = vpack.c.b16 %v1252, %v1248
    %v1477 = vpack.c.b16 %v1257, %v1253
    %v1478 = vpack.c.b16 %v1258, %v1254
    %v1479 = vpack.c.b16 %v1259, %v1255
    %v1480 = vpack.c.b16 %v1260, %v1256
    %v1481 = vpack.c.b16 %v1265, %v1261
    %v1482 = vpack.c.b16 %v1266, %v1262
    %v1483 = vpack.c.b16 %v1267, %v1263
    %v1484 = vpack.c.b16 %v1268, %v1264
    %v1485 = vpack.c.b16 %v1273, %v1269
    %v1486 = vpack.c.b16 %v1274, %v1270
    %v1487 = vpack.c.b16 %v1275, %v1271
    %v1488 = vpack.c.b16 %v1276, %v1272
    %v1489 = vpack.c.b16 %v1281, %v1277
    %v1490 = vpack.c.b16 %v1282, %v1278
    %v1491 = vpack.c.b16 %v1283, %v1279
    %v1492 = vpack.c.b16 %v1284, %v1280
    %v1493 = vpack.c.b16 %v1289, %v1285
    %v1494 = vpack.c.b16 %v1290, %v1286
    %v1495 = vpack.c.b16 %v1291, %v1287
    %v1496 = vpack.c.b16 %v1292, %v1288
    %v1497 = vpack.c.b16 %v1297, %v1293
    %v1498 = vpack.c.b16 %v1298, %v1294
    %v1499 = vpack.c.b16 %v1299, %v1295
    %v1500 = vpack.c.b16 %v1300, %v1296
    %v1501 = vpack.c.b16 %v1305, %v1301
    %v1502 = vpack.c.b16 %v1306, %v1302
    %v1503 = vpack.c.b16 %v1307, %v1303
    %v1504 = vpack.c.b16 %v1308, %v1304
    %v1505 = vpack.c.b16 %v1313, %v1309
    %v1506 = vpack.c.b16 %v1314, %v1310
    %v1507 = vpack.c.b16 %v1315, %v1311
    %v1508 = vpack.c.b16 %v1316, %v1312
    %v1509 = vpack.c.b16 %v1321, %v1317
    %v1510 = vpack.c.b16 %v1322, %v1318
    %v1511 = vpack.c.b16 %v1323, %v1319
    %v1512 = vpack.c.b16 %v1324, %v1320
    %v1513 = vpack.c.b16 %v1329, %v1325
    %v1514 = vpack.c.b16 %v1330, %v1326
    %v1515 = vpack.c.b16 %v1331, %v1327
    %v1516 = vpack.c.b16 %v1332, %v1328
    %v1517 = vpack.c.b16 %v1337, %v1333
    %v1518 = vpack.c.b16 %v1338, %v1334
    %v1519 = vpack.c.b16 %v1339, %v1335
    %v1520 = vpack.c.b16 %v1340, %v1336
    %v1521 = vpack.c.b16 %v1345, %v1341
    %v1522 = vpack.c.b16 %v1346, %v1342
    %v1523 = vpack.c.b16 %v1347, %v1343
    %v1524 = vpack.c.b16 %v1348, %v1344
    %v1525 = vpack.c.b16 %v1353, %v1349
    %v1526 = vpack.c.b16 %v1354, %v1350
    %v1527 = vpack.c.b16 %v1355, %v1351
    %v1528 = vpack.c.b16 %v1356, %v1352
    %v1529 = vpack.c.b16 %v1361, %v1357
    %v1530 = vpack.c.b16 %v1362, %v1358
    %v1531 = vpack.c.b16 %v1363, %v1359
    %v1532 = vpack.c.b16 %v1364, %v1360
    %v1533 = vpack.c.b16 %v1369, %v1365
    %v1534 = vpack.c.b16 %v1370, %v1366
    %v1535 = vpack.c.b16 %v1371, %v1367
    %v1536 = vpack.c.b16 %v1372, %v1368
    %v1537 = vpack.c.b16 %v1377, %v1373
    %v1538 = vpack.c.b16 %v1378, %v1374
    %v1539 = vpack.c.b16 %v1379, %v1375
    %v1540 = vpack.c.b16 %v1380, %v1376
    %v1541 = vpack.c.b16 %v1385, %v1381
    %v1542 = vpack.c.b16 %v1386, %v1382
    %v1543 = vpack.c.b16 %v1387, %v1383
    %v1544 = vpack.c.b16 %v1388, %v1384
    %v1545 = vpack.c.b16 %v1393, %v1389
    %v1546 = vpack.c.b16 %v1394, %v1390
    %v1547 = vpack.c.b16 %v1395, %v1391
    %v1548 = vpack.c.b16 %v1396, %v1392
    %v1549 = vpack.c.b16 %v1401, %v1397
    %v1550 = vpack.c.b16 %v1402, %v1398
    %v1551 = vpack.c.b16 %v1403, %v1399
    %v1552 = vpack.c.b16 %v1404, %v1400
    %v1553 = vpack.c.b16 %v1409, %v1405
    %v1554 = vpack.c.b16 %v1410, %v1406
    %v1555 = vpack.c.b16 %v1411, %v1407
    %v1556 = vpack.c.b16 %v1412, %v1408
    %v1557 = vpack.c.b16 %v1417, %v1413
    %v1558 = vpack.c.b16 %v1418, %v1414
    %v1559 = vpack.c.b16 %v1419, %v1415
    %v1560 = vpack.c.b16 %v1420, %v1416
    %v1561 = vpack.c.b16 %v1425, %v1421
    %v1562 = vpack.c.b16 %v1426, %v1422
    %v1563 = vpack.c.b16 %v1427, %v1423
    %v1564 = vpack.c.b16 %v1428, %v1424
    %v1565 = vpack.c.b16 %v1433, %v1429
    %v1566 = vpack.c.b16 %v1434, %v1430
    %v1567 = vpack.c.b16 %v1435, %v1431
    %v1568 = vpack.c.b16 %v1436, %v1432
    %v1569 = vpack.c.b16 %v1441, %v1437
    %v1570 = vpack.c.b16 %v1442, %v1438
    %v1571 = vpack.c.b16 %v1443, %v1439
    %v1572 = vpack.c.b16 %v1444, %v1440
    %1701 = vmatprep.subr.bf16.mxu0 %v1474
    %1702 = vmatpush1.bf16.msra.mxu0 %v1473
    %1703 = vmatprep.subr.bf16.mxu0 %v1470
    %1704 = vmatpush1.bf16.msra.mxu0 %v1469
    %1705 = vmatprep.subr.bf16.mxu0 %v1466
    %1706 = vmatpush1.bf16.msra.mxu0 %v1465
    %1707 = vmatprep.subr.bf16.mxu0 %v1462
    %1708 = vmatpush1.bf16.msra.mxu0 %v1461
    %1709 = vmatprep.subr.bf16.mxu0 %v1458
    %1710 = vmatpush1.bf16.msra.mxu0 %v1457
    %1711 = vmatprep.subr.bf16.mxu0 %v1454
    %1712 = vmatpush1.bf16.msra.mxu0 %v1453
    %1713 = vmatprep.subr.bf16.mxu0 %v1450
    %1714 = vmatpush1.bf16.msra.mxu0 %v1449
    %1715 = vmatprep.subr.bf16.mxu0 %v1446
    %1716 = vmatpush1.bf16.msra.mxu0 %v1445
    %1717 = vmatprep.subr.bf16.mxu0 %v1506
    %1718 = vmatpush2.bf16.msra.mxu0 %v1505
    %1719 = vmatprep.subr.bf16.mxu0 %v1502
    %1720 = vmatpush2.bf16.msra.mxu0 %v1501
    %1721 = vmatprep.subr.bf16.mxu0 %v1498
    %1722 = vmatpush2.bf16.msra.mxu0 %v1497
    %1723 = vmatprep.subr.bf16.mxu0 %v1494
    %1724 = vmatpush2.bf16.msra.mxu0 %v1493
    %1725 = vmatprep.subr.bf16.mxu0 %v1490
    %1726 = vmatpush2.bf16.msra.mxu0 %v1489
    %1727 = vmatprep.subr.bf16.mxu0 %v1486
    %1728 = vmatpush2.bf16.msra.mxu0 %v1485
    %1729 = vmatprep.subr.bf16.mxu0 %v1482
    %1730 = vmatpush2.bf16.msra.mxu0 %v1481
    %1731 = vmatprep.subr.bf16.mxu0 %v1478
    %1732 = vmatpush2.bf16.msra.mxu0 %v1477
    %1733 = vmatprep.mubr.bf16.mxu0 %v908
    %1734 = vmatmul.mubr.bf16.gmra.mxu0 %v907
    %v1735 = vpop.f32.mrf.mxu0
    %v1736 = vadd.f32 %v1044, %v1735
    %v1737 = vpop.f32.mrf.mxu0
    %v1738 = vadd.f32 %v1048, %v1737
    %v1739 = vpop.f32.mrf.mxu0
    %v1740 = vpop.f32.mrf.mxu0
    %1741 = vdwg.mxu0
    %1742 = vmatprep.subr.bf16.mxu0 %v1538
    %1743 = vmatpush1.bf16.msra.mxu0 %v1537
    %1744 = vmatprep.subr.bf16.mxu0 %v1534
    %1745 = vmatpush1.bf16.msra.mxu0 %v1533
    %1746 = vmatprep.subr.bf16.mxu0 %v1530
    %1747 = vmatpush1.bf16.msra.mxu0 %v1529
    %1748 = vmatprep.subr.bf16.mxu0 %v1526
    %1749 = vmatpush1.bf16.msra.mxu0 %v1525
    %1750 = vmatprep.subr.bf16.mxu0 %v1522
    %1751 = vmatpush1.bf16.msra.mxu0 %v1521
    %1752 = vmatprep.subr.bf16.mxu0 %v1518
    %1753 = vmatpush1.bf16.msra.mxu0 %v1517
    %1754 = vmatprep.subr.bf16.mxu0 %v1514
    %1755 = vmatpush1.bf16.msra.mxu0 %v1513
    %1756 = vmatprep.subr.bf16.mxu0 %v1510
    %1757 = vmatpush1.bf16.msra.mxu0 %v1509
    %1758 = vmatprep.subr.bf16.mxu0 %v1570
    %1759 = vmatpush2.bf16.msra.mxu0 %v1569
    %1760 = vmatprep.subr.bf16.mxu0 %v1566
    %1761 = vmatpush2.bf16.msra.mxu0 %v1565
    %1762 = vmatprep.subr.bf16.mxu0 %v1562
    %1763 = vmatpush2.bf16.msra.mxu0 %v1561
    %1764 = vmatprep.subr.bf16.mxu0 %v1558
    %1765 = vmatpush2.bf16.msra.mxu0 %v1557
    %1766 = vmatprep.subr.bf16.mxu0 %v1554
    %1767 = vmatpush2.bf16.msra.mxu0 %v1553
    %1768 = vmatprep.subr.bf16.mxu0 %v1550
    %1769 = vmatpush2.bf16.msra.mxu0 %v1549
    %1770 = vmatprep.subr.bf16.mxu0 %v1546
    %1771 = vmatpush2.bf16.msra.mxu0 %v1545
    %1772 = vmatprep.subr.bf16.mxu0 %v1542
    %1773 = vmatpush2.bf16.msra.mxu0 %v1541
    %1774 = vmatprep.mubr.bf16.mxu0 %v910
    %1775 = vmatmul.mubr.bf16.gmra.mxu0 %v909
    %v1776 = vpop.f32.mrf.mxu0
    %v1777 = vadd.f32 %v1736, %v1776
    %v1778 = vpop.f32.mrf.mxu0
    %v1779 = vadd.f32 %v1738, %v1778
    %v1780 = vpop.f32.mrf.mxu0
    %v1781 = vpop.f32.mrf.mxu0
    %1782 = vdwg.mxu0
    %1783 = vmatprep.subr.bf16.mxu0 %v1476
    %1784 = vmatpush1.bf16.msra.mxu0 %v1475
    %1785 = vmatprep.subr.bf16.mxu0 %v1472
    %1786 = vmatpush1.bf16.msra.mxu0 %v1471
    %1787 = vmatprep.subr.bf16.mxu0 %v1468
    %1788 = vmatpush1.bf16.msra.mxu0 %v1467
    %1789 = vmatprep.subr.bf16.mxu0 %v1464
    %1790 = vmatpush1.bf16.msra.mxu0 %v1463
    %1791 = vmatprep.subr.bf16.mxu0 %v1460
    %1792 = vmatpush1.bf16.msra.mxu0 %v1459
    %1793 = vmatprep.subr.bf16.mxu0 %v1456
    %1794 = vmatpush1.bf16.msra.mxu0 %v1455
    %1795 = vmatprep.subr.bf16.mxu0 %v1452
    %1796 = vmatpush1.bf16.msra.mxu0 %v1451
    %1797 = vmatprep.subr.bf16.mxu0 %v1448
    %1798 = vmatpush1.bf16.msra.mxu0 %v1447
    %1799 = vmatprep.subr.bf16.mxu0 %v1508
    %1800 = vmatpush2.bf16.msra.mxu0 %v1507
    %1801 = vmatprep.subr.bf16.mxu0 %v1504
    %1802 = vmatpush2.bf16.msra.mxu0 %v1503
    %1803 = vmatprep.subr.bf16.mxu0 %v1500
    %1804 = vmatpush2.bf16.msra.mxu0 %v1499
    %1805 = vmatprep.subr.bf16.mxu0 %v1496
    %1806 = vmatpush2.bf16.msra.mxu0 %v1495
    %1807 = vmatprep.subr.bf16.mxu0 %v1492
    %1808 = vmatpush2.bf16.msra.mxu0 %v1491
    %1809 = vmatprep.subr.bf16.mxu0 %v1488
    %1810 = vmatpush2.bf16.msra.mxu0 %v1487
    %1811 = vmatprep.subr.bf16.mxu0 %v1484
    %1812 = vmatpush2.bf16.msra.mxu0 %v1483
    %1813 = vmatprep.subr.bf16.mxu0 %v1480
    %1814 = vmatpush2.bf16.msra.mxu0 %v1479
    %1815 = vmatprep.mubr.bf16.mxu0 %v908
    %1816 = vmatmul.mubr.bf16.gmra.mxu0 %v907
    %v1817 = vpop.f32.mrf.mxu0
    %v1818 = vadd.f32 %v1052, %v1817
    %v1819 = vpop.f32.mrf.mxu0
    %v1820 = vadd.f32 %v1056, %v1819
    %v1821 = vpop.f32.mrf.mxu0
    %v1822 = vpop.f32.mrf.mxu0
    %1823 = vdwg.mxu0
    %1824 = vmatprep.subr.bf16.mxu0 %v1540
    %1825 = vmatpush1.bf16.msra.mxu0 %v1539
    %1826 = vmatprep.subr.bf16.mxu0 %v1536
    %1827 = vmatpush1.bf16.msra.mxu0 %v1535
    %1828 = vmatprep.subr.bf16.mxu0 %v1532
    %1829 = vmatpush1.bf16.msra.mxu0 %v1531
    %1830 = vmatprep.subr.bf16.mxu0 %v1528
    %1831 = vmatpush1.bf16.msra.mxu0 %v1527
    %1832 = vmatprep.subr.bf16.mxu0 %v1524
    %1833 = vmatpush1.bf16.msra.mxu0 %v1523
    %1834 = vmatprep.subr.bf16.mxu0 %v1520
    %1835 = vmatpush1.bf16.msra.mxu0 %v1519
    %1836 = vmatprep.subr.bf16.mxu0 %v1516
    %1837 = vmatpush1.bf16.msra.mxu0 %v1515
    %1838 = vmatprep.subr.bf16.mxu0 %v1512
    %1839 = vmatpush1.bf16.msra.mxu0 %v1511
    %1840 = vmatprep.subr.bf16.mxu0 %v1572
    %1841 = vmatpush2.bf16.msra.mxu0 %v1571
    %1842 = vmatprep.subr.bf16.mxu0 %v1568
    %1843 = vmatpush2.bf16.msra.mxu0 %v1567
    %1844 = vmatprep.subr.bf16.mxu0 %v1564
    %1845 = vmatpush2.bf16.msra.mxu0 %v1563
    %1846 = vmatprep.subr.bf16.mxu0 %v1560
    %1847 = vmatpush2.bf16.msra.mxu0 %v1559
    %1848 = vmatprep.subr.bf16.mxu0 %v1556
    %1849 = vmatpush2.bf16.msra.mxu0 %v1555
    %1850 = vmatprep.subr.bf16.mxu0 %v1552
    %1851 = vmatpush2.bf16.msra.mxu0 %v1551
    %1852 = vmatprep.subr.bf16.mxu0 %v1548
    %1853 = vmatpush2.bf16.msra.mxu0 %v1547
    %1854 = vmatprep.subr.bf16.mxu0 %v1544
    %1855 = vmatpush2.bf16.msra.mxu0 %v1543
    %1856 = vmatprep.mubr.bf16.mxu0 %v910
    %1857 = vmatmul.mubr.bf16.gmra.mxu0 %v909
    %v1858 = vpop.f32.mrf.mxu0
    %v1859 = vadd.f32 %v1818, %v1858
    %v1860 = vpop.f32.mrf.mxu0
    %v1861 = vadd.f32 %v1820, %v1860
    %v1862 = vpop.f32.mrf.mxu0
    %v1863 = vpop.f32.mrf.mxu0
    %1864 = vdwg.mxu0
    %v1865 = vmax.f32 %v1777, 0.0
    %v1866 = vmax.f32 %v1779, 0.0
    %v1867 = vmax.f32 %v1859, 0.0
    %v1868 = vmax.f32 %v1861, 0.0
    %v1869 = vpack.c.bf16 %v1865, %v1865
    %v1870 = vpack.c.bf16 %v1866, %v1866
    %v1871 = vpack.c.bf16 %v1867, %v1867
    %v1872 = vpack.c.bf16 %v1868, %v1868
    %v1873 = vld [vmem:[#allocation11] sm:$0xff]
    %v1874 = vld [vmem:[#allocation11 + $0x8] sm:$0xff]
    %v1875 = vld [vmem:[#allocation11 + $0x10] sm:$0xff]
    %v1876 = vld [vmem:[#allocation11 + $0x18] sm:$0xff]
    %v1877 = vld [vmem:[#allocation11 + $0x20] sm:$0xff]
    %v1878 = vld [vmem:[#allocation11 + $0x28] sm:$0xff]
    %v1879 = vld [vmem:[#allocation11 + $0x30] sm:$0xff]
    %v1880 = vld [vmem:[#allocation11 + $0x38] sm:$0xff]
    %v1881 = vld [vmem:[#allocation11 + $0x40] sm:$0xff]
    %v1882 = vld [vmem:[#allocation11 + $0x48] sm:$0xff]
    %v1883 = vld [vmem:[#allocation11 + $0x50] sm:$0xff]
    %v1884 = vld [vmem:[#allocation11 + $0x58] sm:$0xff]
    %v1885 = vld [vmem:[#allocation11 + $0x60] sm:$0xff]
    %v1886 = vld [vmem:[#allocation11 + $0x68] sm:$0xff]
    %v1887 = vld [vmem:[#allocation11 + $0x70] sm:$0xff]
    %v1888 = vld [vmem:[#allocation11 + $0x78] sm:$0xff]
    %v1889 = vld [vmem:[#allocation11 + $0x80] sm:$0xff]
    %v1890 = vld [vmem:[#allocation11 + $0x88] sm:$0xff]
    %v1891 = vld [vmem:[#allocation11 + $0x90] sm:$0xff]
    %v1892 = vld [vmem:[#allocation11 + $0x98] sm:$0xff]
    %v1893 = vld [vmem:[#allocation11 + $0xa0] sm:$0xff]
    %v1894 = vld [vmem:[#allocation11 + $0xa8] sm:$0xff]
    %v1895 = vld [vmem:[#allocation11 + $0xb0] sm:$0xff]
    %v1896 = vld [vmem:[#allocation11 + $0xb8] sm:$0xff]
    %v1897 = vld [vmem:[#allocation11 + $0xc0] sm:$0xff]
    %v1898 = vld [vmem:[#allocation11 + $0xc8] sm:$0xff]
    %v1899 = vld [vmem:[#allocation11 + $0xd0] sm:$0xff]
    %v1900 = vld [vmem:[#allocation11 + $0xd8] sm:$0xff]
    %v1901 = vld [vmem:[#allocation11 + $0xe0] sm:$0xff]
    %v1902 = vld [vmem:[#allocation11 + $0xe8] sm:$0xff]
    %v1903 = vld [vmem:[#allocation11 + $0xf0] sm:$0xff]
    %v1904 = vld [vmem:[#allocation11 + $0xf8] sm:$0xff]
    %v1905 = vld [vmem:[#allocation11 + $0x100] sm:$0xff]
    %v1906 = vld [vmem:[#allocation11 + $0x108] sm:$0xff]
    %v1907 = vld [vmem:[#allocation11 + $0x110] sm:$0xff]
    %v1908 = vld [vmem:[#allocation11 + $0x118] sm:$0xff]
    %v1909 = vld [vmem:[#allocation11 + $0x120] sm:$0xff]
    %v1910 = vld [vmem:[#allocation11 + $0x128] sm:$0xff]
    %v1911 = vld [vmem:[#allocation11 + $0x130] sm:$0xff]
    %v1912 = vld [vmem:[#allocation11 + $0x138] sm:$0xff]
    %v1913 = vld [vmem:[#allocation11 + $0x140] sm:$0xff]
    %v1914 = vld [vmem:[#allocation11 + $0x148] sm:$0xff]
    %v1915 = vld [vmem:[#allocation11 + $0x150] sm:$0xff]
    %v1916 = vld [vmem:[#allocation11 + $0x158] sm:$0xff]
    %v1917 = vld [vmem:[#allocation11 + $0x160] sm:$0xff]
    %v1918 = vld [vmem:[#allocation11 + $0x168] sm:$0xff]
    %v1919 = vld [vmem:[#allocation11 + $0x170] sm:$0xff]
    %v1920 = vld [vmem:[#allocation11 + $0x178] sm:$0xff]
    %v1921 = vld [vmem:[#allocation11 + $0x180] sm:$0xff]
    %v1922 = vld [vmem:[#allocation11 + $0x188] sm:$0xff]
    %v1923 = vld [vmem:[#allocation11 + $0x190] sm:$0xff]
    %v1924 = vld [vmem:[#allocation11 + $0x198] sm:$0xff]
    %v1925 = vld [vmem:[#allocation11 + $0x1a0] sm:$0xff]
    %v1926 = vld [vmem:[#allocation11 + $0x1a8] sm:$0xff]
    %v1927 = vld [vmem:[#allocation11 + $0x1b0] sm:$0xff]
    %v1928 = vld [vmem:[#allocation11 + $0x1b8] sm:$0xff]
    %v1929 = vld [vmem:[#allocation11 + $0x1c0] sm:$0xff]
    %v1930 = vld [vmem:[#allocation11 + $0x1c8] sm:$0xff]
    %v1931 = vld [vmem:[#allocation11 + $0x1d0] sm:$0xff]
    %v1932 = vld [vmem:[#allocation11 + $0x1d8] sm:$0xff]
    %v1933 = vld [vmem:[#allocation11 + $0x1e0] sm:$0xff]
    %v1934 = vld [vmem:[#allocation11 + $0x1e8] sm:$0xff]
    %v1935 = vld [vmem:[#allocation11 + $0x1f0] sm:$0xff]
    %v1936 = vld [vmem:[#allocation11 + $0x1f8] sm:$0xff]
    %v1937 = vld [vmem:[#allocation11 + $0x200] sm:$0xff]
    %v1938 = vld [vmem:[#allocation11 + $0x208] sm:$0xff]
    %v1939 = vld [vmem:[#allocation11 + $0x210] sm:$0xff]
    %v1940 = vld [vmem:[#allocation11 + $0x218] sm:$0xff]
    %v1941 = vld [vmem:[#allocation11 + $0x220] sm:$0xff]
    %v1942 = vld [vmem:[#allocation11 + $0x228] sm:$0xff]
    %v1943 = vld [vmem:[#allocation11 + $0x230] sm:$0xff]
    %v1944 = vld [vmem:[#allocation11 + $0x238] sm:$0xff]
    %v1945 = vld [vmem:[#allocation11 + $0x240] sm:$0xff]
    %v1946 = vld [vmem:[#allocation11 + $0x248] sm:$0xff]
    %v1947 = vld [vmem:[#allocation11 + $0x250] sm:$0xff]
    %v1948 = vld [vmem:[#allocation11 + $0x258] sm:$0xff]
    %v1949 = vld [vmem:[#allocation11 + $0x260] sm:$0xff]
    %v1950 = vld [vmem:[#allocation11 + $0x268] sm:$0xff]
    %v1951 = vld [vmem:[#allocation11 + $0x270] sm:$0xff]
    %v1952 = vld [vmem:[#allocation11 + $0x278] sm:$0xff]
    %v1953 = vld [vmem:[#allocation11 + $0x280] sm:$0xff]
    %v1954 = vld [vmem:[#allocation11 + $0x288] sm:$0xff]
    %v1955 = vld [vmem:[#allocation11 + $0x290] sm:$0xff]
    %v1956 = vld [vmem:[#allocation11 + $0x298] sm:$0xff]
    %v1957 = vld [vmem:[#allocation11 + $0x2a0] sm:$0xff]
    %v1958 = vld [vmem:[#allocation11 + $0x2a8] sm:$0xff]
    %v1959 = vld [vmem:[#allocation11 + $0x2b0] sm:$0xff]
    %v1960 = vld [vmem:[#allocation11 + $0x2b8] sm:$0xff]
    %v1961 = vld [vmem:[#allocation11 + $0x2c0] sm:$0xff]
    %v1962 = vld [vmem:[#allocation11 + $0x2c8] sm:$0xff]
    %v1963 = vld [vmem:[#allocation11 + $0x2d0] sm:$0xff]
    %v1964 = vld [vmem:[#allocation11 + $0x2d8] sm:$0xff]
    %v1965 = vld [vmem:[#allocation11 + $0x2e0] sm:$0xff]
    %v1966 = vld [vmem:[#allocation11 + $0x2e8] sm:$0xff]
    %v1967 = vld [vmem:[#allocation11 + $0x2f0] sm:$0xff]
    %v1968 = vld [vmem:[#allocation11 + $0x2f8] sm:$0xff]
    %v1969 = vld [vmem:[#allocation11 + $0x300] sm:$0xff]
    %v1970 = vld [vmem:[#allocation11 + $0x308] sm:$0xff]
    %v1971 = vld [vmem:[#allocation11 + $0x310] sm:$0xff]
    %v1972 = vld [vmem:[#allocation11 + $0x318] sm:$0xff]
    %v1973 = vld [vmem:[#allocation11 + $0x320] sm:$0xff]
    %v1974 = vld [vmem:[#allocation11 + $0x328] sm:$0xff]
    %v1975 = vld [vmem:[#allocation11 + $0x330] sm:$0xff]
    %v1976 = vld [vmem:[#allocation11 + $0x338] sm:$0xff]
    %v1977 = vld [vmem:[#allocation11 + $0x340] sm:$0xff]
    %v1978 = vld [vmem:[#allocation11 + $0x348] sm:$0xff]
    %v1979 = vld [vmem:[#allocation11 + $0x350] sm:$0xff]
    %v1980 = vld [vmem:[#allocation11 + $0x358] sm:$0xff]
    %v1981 = vld [vmem:[#allocation11 + $0x360] sm:$0xff]
    %v1982 = vld [vmem:[#allocation11 + $0x368] sm:$0xff]
    %v1983 = vld [vmem:[#allocation11 + $0x370] sm:$0xff]
    %v1984 = vld [vmem:[#allocation11 + $0x378] sm:$0xff]
    %v1985 = vld [vmem:[#allocation11 + $0x380] sm:$0xff]
    %v1986 = vld [vmem:[#allocation11 + $0x388] sm:$0xff]
    %v1987 = vld [vmem:[#allocation11 + $0x390] sm:$0xff]
    %v1988 = vld [vmem:[#allocation11 + $0x398] sm:$0xff]
    %v1989 = vld [vmem:[#allocation11 + $0x3a0] sm:$0xff]
    %v1990 = vld [vmem:[#allocation11 + $0x3a8] sm:$0xff]
    %v1991 = vld [vmem:[#allocation11 + $0x3b0] sm:$0xff]
    %v1992 = vld [vmem:[#allocation11 + $0x3b8] sm:$0xff]
    %v1993 = vld [vmem:[#allocation11 + $0x3c0] sm:$0xff]
    %v1994 = vld [vmem:[#allocation11 + $0x3c8] sm:$0xff]
    %v1995 = vld [vmem:[#allocation11 + $0x3d0] sm:$0xff]
    %v1996 = vld [vmem:[#allocation11 + $0x3d8] sm:$0xff]
    %v1997 = vld [vmem:[#allocation11 + $0x3e0] sm:$0xff]
    %v1998 = vld [vmem:[#allocation11 + $0x3e8] sm:$0xff]
    %v1999 = vld [vmem:[#allocation11 + $0x3f0] sm:$0xff]
    %v2000 = vld [vmem:[#allocation11 + $0x3f8] sm:$0xff]
    %v2001 = vld [vmem:[#allocation11 + $0x400] sm:$0xff]
    %v2002 = vld [vmem:[#allocation11 + $0x408] sm:$0xff]
    %v2003 = vld [vmem:[#allocation11 + $0x410] sm:$0xff]
    %v2004 = vld [vmem:[#allocation11 + $0x418] sm:$0xff]
    %v2005 = vld [vmem:[#allocation11 + $0x420] sm:$0xff]
    %v2006 = vld [vmem:[#allocation11 + $0x428] sm:$0xff]
    %v2007 = vld [vmem:[#allocation11 + $0x430] sm:$0xff]
    %v2008 = vld [vmem:[#allocation11 + $0x438] sm:$0xff]
    %v2009 = vld [vmem:[#allocation11 + $0x440] sm:$0xff]
    %v2010 = vld [vmem:[#allocation11 + $0x448] sm:$0xff]
    %v2011 = vld [vmem:[#allocation11 + $0x450] sm:$0xff]
    %v2012 = vld [vmem:[#allocation11 + $0x458] sm:$0xff]
    %v2013 = vld [vmem:[#allocation11 + $0x460] sm:$0xff]
    %v2014 = vld [vmem:[#allocation11 + $0x468] sm:$0xff]
    %v2015 = vld [vmem:[#allocation11 + $0x470] sm:$0xff]
    %v2016 = vld [vmem:[#allocation11 + $0x478] sm:$0xff]
    %v2017 = vld [vmem:[#allocation11 + $0x480] sm:$0xff]
    %v2018 = vld [vmem:[#allocation11 + $0x488] sm:$0xff]
    %v2019 = vld [vmem:[#allocation11 + $0x490] sm:$0xff]
    %v2020 = vld [vmem:[#allocation11 + $0x498] sm:$0xff]
    %v2021 = vld [vmem:[#allocation11 + $0x4a0] sm:$0xff]
    %v2022 = vld [vmem:[#allocation11 + $0x4a8] sm:$0xff]
    %v2023 = vld [vmem:[#allocation11 + $0x4b0] sm:$0xff]
    %v2024 = vld [vmem:[#allocation11 + $0x4b8] sm:$0xff]
    %v2025 = vld [vmem:[#allocation11 + $0x4c0] sm:$0xff]
    %v2026 = vld [vmem:[#allocation11 + $0x4c8] sm:$0xff]
    %v2027 = vld [vmem:[#allocation11 + $0x4d0] sm:$0xff]
    %v2028 = vld [vmem:[#allocation11 + $0x4d8] sm:$0xff]
    %v2029 = vld [vmem:[#allocation11 + $0x4e0] sm:$0xff]
    %v2030 = vld [vmem:[#allocation11 + $0x4e8] sm:$0xff]
    %v2031 = vld [vmem:[#allocation11 + $0x4f0] sm:$0xff]
    %v2032 = vld [vmem:[#allocation11 + $0x4f8] sm:$0xff]
    %v2033 = vld [vmem:[#allocation11 + $0x500] sm:$0xff]
    %v2034 = vld [vmem:[#allocation11 + $0x508] sm:$0xff]
    %v2035 = vld [vmem:[#allocation11 + $0x510] sm:$0xff]
    %v2036 = vld [vmem:[#allocation11 + $0x518] sm:$0xff]
    %v2037 = vld [vmem:[#allocation11 + $0x520] sm:$0xff]
    %v2038 = vld [vmem:[#allocation11 + $0x528] sm:$0xff]
    %v2039 = vld [vmem:[#allocation11 + $0x530] sm:$0xff]
    %v2040 = vld [vmem:[#allocation11 + $0x538] sm:$0xff]
    %v2041 = vld [vmem:[#allocation11 + $0x540] sm:$0xff]
    %v2042 = vld [vmem:[#allocation11 + $0x548] sm:$0xff]
    %v2043 = vld [vmem:[#allocation11 + $0x550] sm:$0xff]
    %v2044 = vld [vmem:[#allocation11 + $0x558] sm:$0xff]
    %v2045 = vld [vmem:[#allocation11 + $0x560] sm:$0xff]
    %v2046 = vld [vmem:[#allocation11 + $0x568] sm:$0xff]
    %v2047 = vld [vmem:[#allocation11 + $0x570] sm:$0xff]
    %v2048 = vld [vmem:[#allocation11 + $0x578] sm:$0xff]
    %v2049 = vld [vmem:[#allocation11 + $0x580] sm:$0xff]
    %v2050 = vld [vmem:[#allocation11 + $0x588] sm:$0xff]
    %v2051 = vld [vmem:[#allocation11 + $0x590] sm:$0xff]
    %v2052 = vld [vmem:[#allocation11 + $0x598] sm:$0xff]
    %v2053 = vld [vmem:[#allocation11 + $0x5a0] sm:$0xff]
    %v2054 = vld [vmem:[#allocation11 + $0x5a8] sm:$0xff]
    %v2055 = vld [vmem:[#allocation11 + $0x5b0] sm:$0xff]
    %v2056 = vld [vmem:[#allocation11 + $0x5b8] sm:$0xff]
    %v2057 = vld [vmem:[#allocation11 + $0x5c0] sm:$0xff]
    %v2058 = vld [vmem:[#allocation11 + $0x5c8] sm:$0xff]
    %v2059 = vld [vmem:[#allocation11 + $0x5d0] sm:$0xff]
    %v2060 = vld [vmem:[#allocation11 + $0x5d8] sm:$0xff]
    %v2061 = vld [vmem:[#allocation11 + $0x5e0] sm:$0xff]
    %v2062 = vld [vmem:[#allocation11 + $0x5e8] sm:$0xff]
    %v2063 = vld [vmem:[#allocation11 + $0x5f0] sm:$0xff]
    %v2064 = vld [vmem:[#allocation11 + $0x5f8] sm:$0xff]
    %v2065 = vld [vmem:[#allocation11 + $0x600] sm:$0xff]
    %v2066 = vld [vmem:[#allocation11 + $0x608] sm:$0xff]
    %v2067 = vld [vmem:[#allocation11 + $0x610] sm:$0xff]
    %v2068 = vld [vmem:[#allocation11 + $0x618] sm:$0xff]
    %v2069 = vld [vmem:[#allocation11 + $0x620] sm:$0xff]
    %v2070 = vld [vmem:[#allocation11 + $0x628] sm:$0xff]
    %v2071 = vld [vmem:[#allocation11 + $0x630] sm:$0xff]
    %v2072 = vld [vmem:[#allocation11 + $0x638] sm:$0xff]
    %v2073 = vld [vmem:[#allocation11 + $0x640] sm:$0xff]
    %v2074 = vld [vmem:[#allocation11 + $0x648] sm:$0xff]
    %v2075 = vld [vmem:[#allocation11 + $0x650] sm:$0xff]
    %v2076 = vld [vmem:[#allocation11 + $0x658] sm:$0xff]
    %v2077 = vld [vmem:[#allocation11 + $0x660] sm:$0xff]
    %v2078 = vld [vmem:[#allocation11 + $0x668] sm:$0xff]
    %v2079 = vld [vmem:[#allocation11 + $0x670] sm:$0xff]
    %v2080 = vld [vmem:[#allocation11 + $0x678] sm:$0xff]
    %v2081 = vld [vmem:[#allocation11 + $0x680] sm:$0xff]
    %v2082 = vld [vmem:[#allocation11 + $0x688] sm:$0xff]
    %v2083 = vld [vmem:[#allocation11 + $0x690] sm:$0xff]
    %v2084 = vld [vmem:[#allocation11 + $0x698] sm:$0xff]
    %v2085 = vld [vmem:[#allocation11 + $0x6a0] sm:$0xff]
    %v2086 = vld [vmem:[#allocation11 + $0x6a8] sm:$0xff]
    %v2087 = vld [vmem:[#allocation11 + $0x6b0] sm:$0xff]
    %v2088 = vld [vmem:[#allocation11 + $0x6b8] sm:$0xff]
    %v2089 = vld [vmem:[#allocation11 + $0x6c0] sm:$0xff]
    %v2090 = vld [vmem:[#allocation11 + $0x6c8] sm:$0xff]
    %v2091 = vld [vmem:[#allocation11 + $0x6d0] sm:$0xff]
    %v2092 = vld [vmem:[#allocation11 + $0x6d8] sm:$0xff]
    %v2093 = vld [vmem:[#allocation11 + $0x6e0] sm:$0xff]
    %v2094 = vld [vmem:[#allocation11 + $0x6e8] sm:$0xff]
    %v2095 = vld [vmem:[#allocation11 + $0x6f0] sm:$0xff]
    %v2096 = vld [vmem:[#allocation11 + $0x6f8] sm:$0xff]
    %v2097 = vld [vmem:[#allocation11 + $0x700] sm:$0xff]
    %v2098 = vld [vmem:[#allocation11 + $0x708] sm:$0xff]
    %v2099 = vld [vmem:[#allocation11 + $0x710] sm:$0xff]
    %v2100 = vld [vmem:[#allocation11 + $0x718] sm:$0xff]
    %v2101 = vld [vmem:[#allocation11 + $0x720] sm:$0xff]
    %v2102 = vld [vmem:[#allocation11 + $0x728] sm:$0xff]
    %v2103 = vld [vmem:[#allocation11 + $0x730] sm:$0xff]
    %v2104 = vld [vmem:[#allocation11 + $0x738] sm:$0xff]
    %v2105 = vld [vmem:[#allocation11 + $0x740] sm:$0xff]
    %v2106 = vld [vmem:[#allocation11 + $0x748] sm:$0xff]
    %v2107 = vld [vmem:[#allocation11 + $0x750] sm:$0xff]
    %v2108 = vld [vmem:[#allocation11 + $0x758] sm:$0xff]
    %v2109 = vld [vmem:[#allocation11 + $0x760] sm:$0xff]
    %v2110 = vld [vmem:[#allocation11 + $0x768] sm:$0xff]
    %v2111 = vld [vmem:[#allocation11 + $0x770] sm:$0xff]
    %v2112 = vld [vmem:[#allocation11 + $0x778] sm:$0xff]
    %v2113 = vld [vmem:[#allocation11 + $0x780] sm:$0xff]
    %v2114 = vld [vmem:[#allocation11 + $0x788] sm:$0xff]
    %v2115 = vld [vmem:[#allocation11 + $0x790] sm:$0xff]
    %v2116 = vld [vmem:[#allocation11 + $0x798] sm:$0xff]
    %v2117 = vld [vmem:[#allocation11 + $0x7a0] sm:$0xff]
    %v2118 = vld [vmem:[#allocation11 + $0x7a8] sm:$0xff]
    %v2119 = vld [vmem:[#allocation11 + $0x7b0] sm:$0xff]
    %v2120 = vld [vmem:[#allocation11 + $0x7b8] sm:$0xff]
    %v2121 = vld [vmem:[#allocation11 + $0x7c0] sm:$0xff]
    %v2122 = vld [vmem:[#allocation11 + $0x7c8] sm:$0xff]
    %v2123 = vld [vmem:[#allocation11 + $0x7d0] sm:$0xff]
    %v2124 = vld [vmem:[#allocation11 + $0x7d8] sm:$0xff]
    %v2125 = vld [vmem:[#allocation11 + $0x7e0] sm:$0xff]
    %v2126 = vld [vmem:[#allocation11 + $0x7e8] sm:$0xff]
    %v2127 = vld [vmem:[#allocation11 + $0x7f0] sm:$0xff]
    %v2128 = vld [vmem:[#allocation11 + $0x7f8] sm:$0xff]
    %v2129 = vld [vmem:[#allocation13] sm:$0xff]
    %v2131 = vlaneseq
    %v2132 = vshrl.u32 %v2131, 7
    %v2133 = vsub.s32 0, %v2132
    %v2134 = vrot.slane %v2129, %v2133
    %v2135 = vlaneseq
    %v2136 = vshrl.u32 %v2135, 7
    %v2137 = vsub.s32 1, %v2136
    %v2138 = vrot.slane %v2129, %v2137
    %v2139 = vlaneseq
    %v2140 = vshrl.u32 %v2139, 7
    %v2141 = vsub.s32 2, %v2140
    %v2142 = vrot.slane %v2129, %v2141
    %v2143 = vlaneseq
    %v2144 = vshrl.u32 %v2143, 7
    %v2145 = vsub.s32 3, %v2144
    %v2146 = vrot.slane %v2129, %v2145
    %v2147 = vlaneseq
    %v2148 = vshrl.u32 %v2147, 7
    %v2149 = vsub.s32 4, %v2148
    %v2150 = vrot.slane %v2129, %v2149
    %v2151 = vlaneseq
    %v2152 = vshrl.u32 %v2151, 7
    %v2153 = vsub.s32 5, %v2152
    %v2154 = vrot.slane %v2129, %v2153
    %v2155 = vlaneseq
    %v2156 = vshrl.u32 %v2155, 7
    %v2157 = vsub.s32 6, %v2156
    %v2158 = vrot.slane %v2129, %v2157
    %v2159 = vlaneseq
    %v2160 = vshrl.u32 %v2159, 7
    %v2161 = vsub.s32 7, %v2160
    %v2162 = vrot.slane %v2129, %v2161
    %v2427 = vunpack.c.l.b16 %v1873
    %v2428 = vunpack.c.h.b16 %v1873
    %v2429 = vunpack.c.l.b16 %v1874
    %v2430 = vunpack.c.h.b16 %v1874
    %v2431 = vunpack.c.l.b16 %v1875
    %v2432 = vunpack.c.h.b16 %v1875
    %v2433 = vunpack.c.l.b16 %v1876
    %v2434 = vunpack.c.h.b16 %v1876
    %v2435 = vunpack.c.l.b16 %v1877
    %v2436 = vunpack.c.h.b16 %v1877
    %v2437 = vunpack.c.l.b16 %v1878
    %v2438 = vunpack.c.h.b16 %v1878
    %v2439 = vunpack.c.l.b16 %v1879
    %v2440 = vunpack.c.h.b16 %v1879
    %v2441 = vunpack.c.l.b16 %v1880
    %v2442 = vunpack.c.h.b16 %v1880
    %v2443 = vunpack.c.l.b16 %v1881
    %v2444 = vunpack.c.h.b16 %v1881
    %v2445 = vunpack.c.l.b16 %v1882
    %v2446 = vunpack.c.h.b16 %v1882
    %v2447 = vunpack.c.l.b16 %v1883
    %v2448 = vunpack.c.h.b16 %v1883
    %v2449 = vunpack.c.l.b16 %v1884
    %v2450 = vunpack.c.h.b16 %v1884
    %v2451 = vunpack.c.l.b16 %v1885
    %v2452 = vunpack.c.h.b16 %v1885
    %v2453 = vunpack.c.l.b16 %v1886
    %v2454 = vunpack.c.h.b16 %v1886
    %v2455 = vunpack.c.l.b16 %v1887
    %v2456 = vunpack.c.h.b16 %v1887
    %v2457 = vunpack.c.l.b16 %v1888
    %v2458 = vunpack.c.h.b16 %v1888
    %v2459 = vunpack.c.l.b16 %v1889
    %v2460 = vunpack.c.h.b16 %v1889
    %v2461 = vunpack.c.l.b16 %v1890
    %v2462 = vunpack.c.h.b16 %v1890
    %v2463 = vunpack.c.l.b16 %v1891
    %v2464 = vunpack.c.h.b16 %v1891
    %v2465 = vunpack.c.l.b16 %v1892
    %v2466 = vunpack.c.h.b16 %v1892
    %v2467 = vunpack.c.l.b16 %v1893
    %v2468 = vunpack.c.h.b16 %v1893
    %v2469 = vunpack.c.l.b16 %v1894
    %v2470 = vunpack.c.h.b16 %v1894
    %v2471 = vunpack.c.l.b16 %v1895
    %v2472 = vunpack.c.h.b16 %v1895
    %v2473 = vunpack.c.l.b16 %v1896
    %v2474 = vunpack.c.h.b16 %v1896
    %v2475 = vunpack.c.l.b16 %v1897
    %v2476 = vunpack.c.h.b16 %v1897
    %v2477 = vunpack.c.l.b16 %v1898
    %v2478 = vunpack.c.h.b16 %v1898
    %v2479 = vunpack.c.l.b16 %v1899
    %v2480 = vunpack.c.h.b16 %v1899
    %v2481 = vunpack.c.l.b16 %v1900
    %v2482 = vunpack.c.h.b16 %v1900
    %v2483 = vunpack.c.l.b16 %v1901
    %v2484 = vunpack.c.h.b16 %v1901
    %v2485 = vunpack.c.l.b16 %v1902
    %v2486 = vunpack.c.h.b16 %v1902
    %v2487 = vunpack.c.l.b16 %v1903
    %v2488 = vunpack.c.h.b16 %v1903
    %v2489 = vunpack.c.l.b16 %v1904
    %v2490 = vunpack.c.h.b16 %v1904
    %v2491 = vunpack.c.l.b16 %v1905
    %v2492 = vunpack.c.h.b16 %v1905
    %v2493 = vunpack.c.l.b16 %v1906
    %v2494 = vunpack.c.h.b16 %v1906
    %v2495 = vunpack.c.l.b16 %v1907
    %v2496 = vunpack.c.h.b16 %v1907
    %v2497 = vunpack.c.l.b16 %v1908
    %v2498 = vunpack.c.h.b16 %v1908
    %v2499 = vunpack.c.l.b16 %v1909
    %v2500 = vunpack.c.h.b16 %v1909
    %v2501 = vunpack.c.l.b16 %v1910
    %v2502 = vunpack.c.h.b16 %v1910
    %v2503 = vunpack.c.l.b16 %v1911
    %v2504 = vunpack.c.h.b16 %v1911
    %v2505 = vunpack.c.l.b16 %v1912
    %v2506 = vunpack.c.h.b16 %v1912
    %v2507 = vunpack.c.l.b16 %v1913
    %v2508 = vunpack.c.h.b16 %v1913
    %v2509 = vunpack.c.l.b16 %v1914
    %v2510 = vunpack.c.h.b16 %v1914
    %v2511 = vunpack.c.l.b16 %v1915
    %v2512 = vunpack.c.h.b16 %v1915
    %v2513 = vunpack.c.l.b16 %v1916
    %v2514 = vunpack.c.h.b16 %v1916
    %v2515 = vunpack.c.l.b16 %v1917
    %v2516 = vunpack.c.h.b16 %v1917
    %v2517 = vunpack.c.l.b16 %v1918
    %v2518 = vunpack.c.h.b16 %v1918
    %v2519 = vunpack.c.l.b16 %v1919
    %v2520 = vunpack.c.h.b16 %v1919
    %v2521 = vunpack.c.l.b16 %v1920
    %v2522 = vunpack.c.h.b16 %v1920
    %v2523 = vunpack.c.l.b16 %v1921
    %v2524 = vunpack.c.h.b16 %v1921
    %v2525 = vunpack.c.l.b16 %v1922
    %v2526 = vunpack.c.h.b16 %v1922
    %v2527 = vunpack.c.l.b16 %v1923
    %v2528 = vunpack.c.h.b16 %v1923
    %v2529 = vunpack.c.l.b16 %v1924
    %v2530 = vunpack.c.h.b16 %v1924
    %v2531 = vunpack.c.l.b16 %v1925
    %v2532 = vunpack.c.h.b16 %v1925
    %v2533 = vunpack.c.l.b16 %v1926
    %v2534 = vunpack.c.h.b16 %v1926
    %v2535 = vunpack.c.l.b16 %v1927
    %v2536 = vunpack.c.h.b16 %v1927
    %v2537 = vunpack.c.l.b16 %v1928
    %v2538 = vunpack.c.h.b16 %v1928
    %v2539 = vunpack.c.l.b16 %v1929
    %v2540 = vunpack.c.h.b16 %v1929
    %v2541 = vunpack.c.l.b16 %v1930
    %v2542 = vunpack.c.h.b16 %v1930
    %v2543 = vunpack.c.l.b16 %v1931
    %v2544 = vunpack.c.h.b16 %v1931
    %v2545 = vunpack.c.l.b16 %v1932
    %v2546 = vunpack.c.h.b16 %v1932
    %v2547 = vunpack.c.l.b16 %v1933
    %v2548 = vunpack.c.h.b16 %v1933
    %v2549 = vunpack.c.l.b16 %v1934
    %v2550 = vunpack.c.h.b16 %v1934
    %v2551 = vunpack.c.l.b16 %v1935
    %v2552 = vunpack.c.h.b16 %v1935
    %v2553 = vunpack.c.l.b16 %v1936
    %v2554 = vunpack.c.h.b16 %v1936
    %v2555 = vunpack.c.l.b16 %v1937
    %v2556 = vunpack.c.h.b16 %v1937
    %v2557 = vunpack.c.l.b16 %v1938
    %v2558 = vunpack.c.h.b16 %v1938
    %v2559 = vunpack.c.l.b16 %v1939
    %v2560 = vunpack.c.h.b16 %v1939
    %v2561 = vunpack.c.l.b16 %v1940
    %v2562 = vunpack.c.h.b16 %v1940
    %v2563 = vunpack.c.l.b16 %v1941
    %v2564 = vunpack.c.h.b16 %v1941
    %v2565 = vunpack.c.l.b16 %v1942
    %v2566 = vunpack.c.h.b16 %v1942
    %v2567 = vunpack.c.l.b16 %v1943
    %v2568 = vunpack.c.h.b16 %v1943
    %v2569 = vunpack.c.l.b16 %v1944
    %v2570 = vunpack.c.h.b16 %v1944
    %v2571 = vunpack.c.l.b16 %v1945
    %v2572 = vunpack.c.h.b16 %v1945
    %v2573 = vunpack.c.l.b16 %v1946
    %v2574 = vunpack.c.h.b16 %v1946
    %v2575 = vunpack.c.l.b16 %v1947
    %v2576 = vunpack.c.h.b16 %v1947
    %v2577 = vunpack.c.l.b16 %v1948
    %v2578 = vunpack.c.h.b16 %v1948
    %v2579 = vunpack.c.l.b16 %v1949
    %v2580 = vunpack.c.h.b16 %v1949
    %v2581 = vunpack.c.l.b16 %v1950
    %v2582 = vunpack.c.h.b16 %v1950
    %v2583 = vunpack.c.l.b16 %v1951
    %v2584 = vunpack.c.h.b16 %v1951
    %v2585 = vunpack.c.l.b16 %v1952
    %v2586 = vunpack.c.h.b16 %v1952
    %v2587 = vunpack.c.l.b16 %v1953
    %v2588 = vunpack.c.h.b16 %v1953
    %v2589 = vunpack.c.l.b16 %v1954
    %v2590 = vunpack.c.h.b16 %v1954
    %v2591 = vunpack.c.l.b16 %v1955
    %v2592 = vunpack.c.h.b16 %v1955
    %v2593 = vunpack.c.l.b16 %v1956
    %v2594 = vunpack.c.h.b16 %v1956
    %v2595 = vunpack.c.l.b16 %v1957
    %v2596 = vunpack.c.h.b16 %v1957
    %v2597 = vunpack.c.l.b16 %v1958
    %v2598 = vunpack.c.h.b16 %v1958
    %v2599 = vunpack.c.l.b16 %v1959
    %v2600 = vunpack.c.h.b16 %v1959
    %v2601 = vunpack.c.l.b16 %v1960
    %v2602 = vunpack.c.h.b16 %v1960
    %v2603 = vunpack.c.l.b16 %v1961
    %v2604 = vunpack.c.h.b16 %v1961
    %v2605 = vunpack.c.l.b16 %v1962
    %v2606 = vunpack.c.h.b16 %v1962
    %v2607 = vunpack.c.l.b16 %v1963
    %v2608 = vunpack.c.h.b16 %v1963
    %v2609 = vunpack.c.l.b16 %v1964
    %v2610 = vunpack.c.h.b16 %v1964
    %v2611 = vunpack.c.l.b16 %v1965
    %v2612 = vunpack.c.h.b16 %v1965
    %v2613 = vunpack.c.l.b16 %v1966
    %v2614 = vunpack.c.h.b16 %v1966
    %v2615 = vunpack.c.l.b16 %v1967
    %v2616 = vunpack.c.h.b16 %v1967
    %v2617 = vunpack.c.l.b16 %v1968
    %v2618 = vunpack.c.h.b16 %v1968
    %v2619 = vunpack.c.l.b16 %v1969
    %v2620 = vunpack.c.h.b16 %v1969
    %v2621 = vunpack.c.l.b16 %v1970
    %v2622 = vunpack.c.h.b16 %v1970
    %v2623 = vunpack.c.l.b16 %v1971
    %v2624 = vunpack.c.h.b16 %v1971
    %v2625 = vunpack.c.l.b16 %v1972
    %v2626 = vunpack.c.h.b16 %v1972
    %v2627 = vunpack.c.l.b16 %v1973
    %v2628 = vunpack.c.h.b16 %v1973
    %v2629 = vunpack.c.l.b16 %v1974
    %v2630 = vunpack.c.h.b16 %v1974
    %v2631 = vunpack.c.l.b16 %v1975
    %v2632 = vunpack.c.h.b16 %v1975
    %v2633 = vunpack.c.l.b16 %v1976
    %v2634 = vunpack.c.h.b16 %v1976
    %v2635 = vunpack.c.l.b16 %v1977
    %v2636 = vunpack.c.h.b16 %v1977
    %v2637 = vunpack.c.l.b16 %v1978
    %v2638 = vunpack.c.h.b16 %v1978
    %v2639 = vunpack.c.l.b16 %v1979
    %v2640 = vunpack.c.h.b16 %v1979
    %v2641 = vunpack.c.l.b16 %v1980
    %v2642 = vunpack.c.h.b16 %v1980
    %v2643 = vunpack.c.l.b16 %v1981
    %v2644 = vunpack.c.h.b16 %v1981
    %v2645 = vunpack.c.l.b16 %v1982
    %v2646 = vunpack.c.h.b16 %v1982
    %v2647 = vunpack.c.l.b16 %v1983
    %v2648 = vunpack.c.h.b16 %v1983
    %v2649 = vunpack.c.l.b16 %v1984
    %v2650 = vunpack.c.h.b16 %v1984
    %v2651 = vunpack.c.l.b16 %v1985
    %v2652 = vunpack.c.h.b16 %v1985
    %v2653 = vunpack.c.l.b16 %v1986
    %v2654 = vunpack.c.h.b16 %v1986
    %v2655 = vunpack.c.l.b16 %v1987
    %v2656 = vunpack.c.h.b16 %v1987
    %v2657 = vunpack.c.l.b16 %v1988
    %v2658 = vunpack.c.h.b16 %v1988
    %v2659 = vunpack.c.l.b16 %v1989
    %v2660 = vunpack.c.h.b16 %v1989
    %v2661 = vunpack.c.l.b16 %v1990
    %v2662 = vunpack.c.h.b16 %v1990
    %v2663 = vunpack.c.l.b16 %v1991
    %v2664 = vunpack.c.h.b16 %v1991
    %v2665 = vunpack.c.l.b16 %v1992
    %v2666 = vunpack.c.h.b16 %v1992
    %v2667 = vunpack.c.l.b16 %v1993
    %v2668 = vunpack.c.h.b16 %v1993
    %v2669 = vunpack.c.l.b16 %v1994
    %v2670 = vunpack.c.h.b16 %v1994
    %v2671 = vunpack.c.l.b16 %v1995
    %v2672 = vunpack.c.h.b16 %v1995
    %v2673 = vunpack.c.l.b16 %v1996
    %v2674 = vunpack.c.h.b16 %v1996
    %v2675 = vunpack.c.l.b16 %v1997
    %v2676 = vunpack.c.h.b16 %v1997
    %v2677 = vunpack.c.l.b16 %v1998
    %v2678 = vunpack.c.h.b16 %v1998
    %v2679 = vunpack.c.l.b16 %v1999
    %v2680 = vunpack.c.h.b16 %v1999
    %v2681 = vunpack.c.l.b16 %v2000
    %v2682 = vunpack.c.h.b16 %v2000
    %v2683 = vunpack.c.l.b16 %v2001
    %v2684 = vunpack.c.h.b16 %v2001
    %v2685 = vunpack.c.l.b16 %v2002
    %v2686 = vunpack.c.h.b16 %v2002
    %v2687 = vunpack.c.l.b16 %v2003
    %v2688 = vunpack.c.h.b16 %v2003
    %v2689 = vunpack.c.l.b16 %v2004
    %v2690 = vunpack.c.h.b16 %v2004
    %v2691 = vunpack.c.l.b16 %v2005
    %v2692 = vunpack.c.h.b16 %v2005
    %v2693 = vunpack.c.l.b16 %v2006
    %v2694 = vunpack.c.h.b16 %v2006
    %v2695 = vunpack.c.l.b16 %v2007
    %v2696 = vunpack.c.h.b16 %v2007
    %v2697 = vunpack.c.l.b16 %v2008
    %v2698 = vunpack.c.h.b16 %v2008
    %v2699 = vunpack.c.l.b16 %v2009
    %v2700 = vunpack.c.h.b16 %v2009
    %v2701 = vunpack.c.l.b16 %v2010
    %v2702 = vunpack.c.h.b16 %v2010
    %v2703 = vunpack.c.l.b16 %v2011
    %v2704 = vunpack.c.h.b16 %v2011
    %v2705 = vunpack.c.l.b16 %v2012
    %v2706 = vunpack.c.h.b16 %v2012
    %v2707 = vunpack.c.l.b16 %v2013
    %v2708 = vunpack.c.h.b16 %v2013
    %v2709 = vunpack.c.l.b16 %v2014
    %v2710 = vunpack.c.h.b16 %v2014
    %v2711 = vunpack.c.l.b16 %v2015
    %v2712 = vunpack.c.h.b16 %v2015
    %v2713 = vunpack.c.l.b16 %v2016
    %v2714 = vunpack.c.h.b16 %v2016
    %v2715 = vunpack.c.l.b16 %v2017
    %v2716 = vunpack.c.h.b16 %v2017
    %v2717 = vunpack.c.l.b16 %v2018
    %v2718 = vunpack.c.h.b16 %v2018
    %v2719 = vunpack.c.l.b16 %v2019
    %v2720 = vunpack.c.h.b16 %v2019
    %v2721 = vunpack.c.l.b16 %v2020
    %v2722 = vunpack.c.h.b16 %v2020
    %v2723 = vunpack.c.l.b16 %v2021
    %v2724 = vunpack.c.h.b16 %v2021
    %v2725 = vunpack.c.l.b16 %v2022
    %v2726 = vunpack.c.h.b16 %v2022
    %v2727 = vunpack.c.l.b16 %v2023
    %v2728 = vunpack.c.h.b16 %v2023
    %v2729 = vunpack.c.l.b16 %v2024
    %v2730 = vunpack.c.h.b16 %v2024
    %v2731 = vunpack.c.l.b16 %v2025
    %v2732 = vunpack.c.h.b16 %v2025
    %v2733 = vunpack.c.l.b16 %v2026
    %v2734 = vunpack.c.h.b16 %v2026
    %v2735 = vunpack.c.l.b16 %v2027
    %v2736 = vunpack.c.h.b16 %v2027
    %v2737 = vunpack.c.l.b16 %v2028
    %v2738 = vunpack.c.h.b16 %v2028
    %v2739 = vunpack.c.l.b16 %v2029
    %v2740 = vunpack.c.h.b16 %v2029
    %v2741 = vunpack.c.l.b16 %v2030
    %v2742 = vunpack.c.h.b16 %v2030
    %v2743 = vunpack.c.l.b16 %v2031
    %v2744 = vunpack.c.h.b16 %v2031
    %v2745 = vunpack.c.l.b16 %v2032
    %v2746 = vunpack.c.h.b16 %v2032
    %v2747 = vunpack.c.l.b16 %v2033
    %v2748 = vunpack.c.h.b16 %v2033
    %v2749 = vunpack.c.l.b16 %v2034
    %v2750 = vunpack.c.h.b16 %v2034
    %v2751 = vunpack.c.l.b16 %v2035
    %v2752 = vunpack.c.h.b16 %v2035
    %v2753 = vunpack.c.l.b16 %v2036
    %v2754 = vunpack.c.h.b16 %v2036
    %v2755 = vunpack.c.l.b16 %v2037
    %v2756 = vunpack.c.h.b16 %v2037
    %v2757 = vunpack.c.l.b16 %v2038
    %v2758 = vunpack.c.h.b16 %v2038
    %v2759 = vunpack.c.l.b16 %v2039
    %v2760 = vunpack.c.h.b16 %v2039
    %v2761 = vunpack.c.l.b16 %v2040
    %v2762 = vunpack.c.h.b16 %v2040
    %v2763 = vunpack.c.l.b16 %v2041
    %v2764 = vunpack.c.h.b16 %v2041
    %v2765 = vunpack.c.l.b16 %v2042
    %v2766 = vunpack.c.h.b16 %v2042
    %v2767 = vunpack.c.l.b16 %v2043
    %v2768 = vunpack.c.h.b16 %v2043
    %v2769 = vunpack.c.l.b16 %v2044
    %v2770 = vunpack.c.h.b16 %v2044
    %v2771 = vunpack.c.l.b16 %v2045
    %v2772 = vunpack.c.h.b16 %v2045
    %v2773 = vunpack.c.l.b16 %v2046
    %v2774 = vunpack.c.h.b16 %v2046
    %v2775 = vunpack.c.l.b16 %v2047
    %v2776 = vunpack.c.h.b16 %v2047
    %v2777 = vunpack.c.l.b16 %v2048
    %v2778 = vunpack.c.h.b16 %v2048
    %v2779 = vunpack.c.l.b16 %v2049
    %v2780 = vunpack.c.h.b16 %v2049
    %v2781 = vunpack.c.l.b16 %v2050
    %v2782 = vunpack.c.h.b16 %v2050
    %v2783 = vunpack.c.l.b16 %v2051
    %v2784 = vunpack.c.h.b16 %v2051
    %v2785 = vunpack.c.l.b16 %v2052
    %v2786 = vunpack.c.h.b16 %v2052
    %v2787 = vunpack.c.l.b16 %v2053
    %v2788 = vunpack.c.h.b16 %v2053
    %v2789 = vunpack.c.l.b16 %v2054
    %v2790 = vunpack.c.h.b16 %v2054
    %v2791 = vunpack.c.l.b16 %v2055
    %v2792 = vunpack.c.h.b16 %v2055
    %v2793 = vunpack.c.l.b16 %v2056
    %v2794 = vunpack.c.h.b16 %v2056
    %v2795 = vunpack.c.l.b16 %v2057
    %v2796 = vunpack.c.h.b16 %v2057
    %v2797 = vunpack.c.l.b16 %v2058
    %v2798 = vunpack.c.h.b16 %v2058
    %v2799 = vunpack.c.l.b16 %v2059
    %v2800 = vunpack.c.h.b16 %v2059
    %v2801 = vunpack.c.l.b16 %v2060
    %v2802 = vunpack.c.h.b16 %v2060
    %v2803 = vunpack.c.l.b16 %v2061
    %v2804 = vunpack.c.h.b16 %v2061
    %v2805 = vunpack.c.l.b16 %v2062
    %v2806 = vunpack.c.h.b16 %v2062
    %v2807 = vunpack.c.l.b16 %v2063
    %v2808 = vunpack.c.h.b16 %v2063
    %v2809 = vunpack.c.l.b16 %v2064
    %v2810 = vunpack.c.h.b16 %v2064
    %v2811 = vunpack.c.l.b16 %v2065
    %v2812 = vunpack.c.h.b16 %v2065
    %v2813 = vunpack.c.l.b16 %v2066
    %v2814 = vunpack.c.h.b16 %v2066
    %v2815 = vunpack.c.l.b16 %v2067
    %v2816 = vunpack.c.h.b16 %v2067
    %v2817 = vunpack.c.l.b16 %v2068
    %v2818 = vunpack.c.h.b16 %v2068
    %v2819 = vunpack.c.l.b16 %v2069
    %v2820 = vunpack.c.h.b16 %v2069
    %v2821 = vunpack.c.l.b16 %v2070
    %v2822 = vunpack.c.h.b16 %v2070
    %v2823 = vunpack.c.l.b16 %v2071
    %v2824 = vunpack.c.h.b16 %v2071
    %v2825 = vunpack.c.l.b16 %v2072
    %v2826 = vunpack.c.h.b16 %v2072
    %v2827 = vunpack.c.l.b16 %v2073
    %v2828 = vunpack.c.h.b16 %v2073
    %v2829 = vunpack.c.l.b16 %v2074
    %v2830 = vunpack.c.h.b16 %v2074
    %v2831 = vunpack.c.l.b16 %v2075
    %v2832 = vunpack.c.h.b16 %v2075
    %v2833 = vunpack.c.l.b16 %v2076
    %v2834 = vunpack.c.h.b16 %v2076
    %v2835 = vunpack.c.l.b16 %v2077
    %v2836 = vunpack.c.h.b16 %v2077
    %v2837 = vunpack.c.l.b16 %v2078
    %v2838 = vunpack.c.h.b16 %v2078
    %v2839 = vunpack.c.l.b16 %v2079
    %v2840 = vunpack.c.h.b16 %v2079
    %v2841 = vunpack.c.l.b16 %v2080
    %v2842 = vunpack.c.h.b16 %v2080
    %v2843 = vunpack.c.l.b16 %v2081
    %v2844 = vunpack.c.h.b16 %v2081
    %v2845 = vunpack.c.l.b16 %v2082
    %v2846 = vunpack.c.h.b16 %v2082
    %v2847 = vunpack.c.l.b16 %v2083
    %v2848 = vunpack.c.h.b16 %v2083
    %v2849 = vunpack.c.l.b16 %v2084
    %v2850 = vunpack.c.h.b16 %v2084
    %v2851 = vunpack.c.l.b16 %v2085
    %v2852 = vunpack.c.h.b16 %v2085
    %v2853 = vunpack.c.l.b16 %v2086
    %v2854 = vunpack.c.h.b16 %v2086
    %v2855 = vunpack.c.l.b16 %v2087
    %v2856 = vunpack.c.h.b16 %v2087
    %v2857 = vunpack.c.l.b16 %v2088
    %v2858 = vunpack.c.h.b16 %v2088
    %v2859 = vunpack.c.l.b16 %v2089
    %v2860 = vunpack.c.h.b16 %v2089
    %v2861 = vunpack.c.l.b16 %v2090
    %v2862 = vunpack.c.h.b16 %v2090
    %v2863 = vunpack.c.l.b16 %v2091
    %v2864 = vunpack.c.h.b16 %v2091
    %v2865 = vunpack.c.l.b16 %v2092
    %v2866 = vunpack.c.h.b16 %v2092
    %v2867 = vunpack.c.l.b16 %v2093
    %v2868 = vunpack.c.h.b16 %v2093
    %v2869 = vunpack.c.l.b16 %v2094
    %v2870 = vunpack.c.h.b16 %v2094
    %v2871 = vunpack.c.l.b16 %v2095
    %v2872 = vunpack.c.h.b16 %v2095
    %v2873 = vunpack.c.l.b16 %v2096
    %v2874 = vunpack.c.h.b16 %v2096
    %v2875 = vunpack.c.l.b16 %v2097
    %v2876 = vunpack.c.h.b16 %v2097
    %v2877 = vunpack.c.l.b16 %v2098
    %v2878 = vunpack.c.h.b16 %v2098
    %v2879 = vunpack.c.l.b16 %v2099
    %v2880 = vunpack.c.h.b16 %v2099
    %v2881 = vunpack.c.l.b16 %v2100
    %v2882 = vunpack.c.h.b16 %v2100
    %v2883 = vunpack.c.l.b16 %v2101
    %v2884 = vunpack.c.h.b16 %v2101
    %v2885 = vunpack.c.l.b16 %v2102
    %v2886 = vunpack.c.h.b16 %v2102
    %v2887 = vunpack.c.l.b16 %v2103
    %v2888 = vunpack.c.h.b16 %v2103
    %v2889 = vunpack.c.l.b16 %v2104
    %v2890 = vunpack.c.h.b16 %v2104
    %v2891 = vunpack.c.l.b16 %v2105
    %v2892 = vunpack.c.h.b16 %v2105
    %v2893 = vunpack.c.l.b16 %v2106
    %v2894 = vunpack.c.h.b16 %v2106
    %v2895 = vunpack.c.l.b16 %v2107
    %v2896 = vunpack.c.h.b16 %v2107
    %v2897 = vunpack.c.l.b16 %v2108
    %v2898 = vunpack.c.h.b16 %v2108
    %v2899 = vunpack.c.l.b16 %v2109
    %v2900 = vunpack.c.h.b16 %v2109
    %v2901 = vunpack.c.l.b16 %v2110
    %v2902 = vunpack.c.h.b16 %v2110
    %v2903 = vunpack.c.l.b16 %v2111
    %v2904 = vunpack.c.h.b16 %v2111
    %v2905 = vunpack.c.l.b16 %v2112
    %v2906 = vunpack.c.h.b16 %v2112
    %v2907 = vunpack.c.l.b16 %v2113
    %v2908 = vunpack.c.h.b16 %v2113
    %v2909 = vunpack.c.l.b16 %v2114
    %v2910 = vunpack.c.h.b16 %v2114
    %v2911 = vunpack.c.l.b16 %v2115
    %v2912 = vunpack.c.h.b16 %v2115
    %v2913 = vunpack.c.l.b16 %v2116
    %v2914 = vunpack.c.h.b16 %v2116
    %v2915 = vunpack.c.l.b16 %v2117
    %v2916 = vunpack.c.h.b16 %v2117
    %v2917 = vunpack.c.l.b16 %v2118
    %v2918 = vunpack.c.h.b16 %v2118
    %v2919 = vunpack.c.l.b16 %v2119
    %v2920 = vunpack.c.h.b16 %v2119
    %v2921 = vunpack.c.l.b16 %v2120
    %v2922 = vunpack.c.h.b16 %v2120
    %v2923 = vunpack.c.l.b16 %v2121
    %v2924 = vunpack.c.h.b16 %v2121
    %v2925 = vunpack.c.l.b16 %v2122
    %v2926 = vunpack.c.h.b16 %v2122
    %v2927 = vunpack.c.l.b16 %v2123
    %v2928 = vunpack.c.h.b16 %v2123
    %v2929 = vunpack.c.l.b16 %v2124
    %v2930 = vunpack.c.h.b16 %v2124
    %v2931 = vunpack.c.l.b16 %v2125
    %v2932 = vunpack.c.h.b16 %v2125
    %v2933 = vunpack.c.l.b16 %v2126
    %v2934 = vunpack.c.h.b16 %v2126
    %v2935 = vunpack.c.l.b16 %v2127
    %v2936 = vunpack.c.h.b16 %v2127
    %v2937 = vunpack.c.l.b16 %v2128
    %v2938 = vunpack.c.h.b16 %v2128
    %v2939 = vpack.c.b16 %v2435, %v2427
    %v2940 = vpack.c.b16 %v2436, %v2428
    %v2941 = vpack.c.b16 %v2437, %v2429
    %v2942 = vpack.c.b16 %v2438, %v2430
    %v2943 = vpack.c.b16 %v2439, %v2431
    %v2944 = vpack.c.b16 %v2440, %v2432
    %v2945 = vpack.c.b16 %v2441, %v2433
    %v2946 = vpack.c.b16 %v2442, %v2434
    %v2947 = vpack.c.b16 %v2451, %v2443
    %v2948 = vpack.c.b16 %v2452, %v2444
    %v2949 = vpack.c.b16 %v2453, %v2445
    %v2950 = vpack.c.b16 %v2454, %v2446
    %v2951 = vpack.c.b16 %v2455, %v2447
    %v2952 = vpack.c.b16 %v2456, %v2448
    %v2953 = vpack.c.b16 %v2457, %v2449
    %v2954 = vpack.c.b16 %v2458, %v2450
    %v2955 = vpack.c.b16 %v2467, %v2459
    %v2956 = vpack.c.b16 %v2468, %v2460
    %v2957 = vpack.c.b16 %v2469, %v2461
    %v2958 = vpack.c.b16 %v2470, %v2462
    %v2959 = vpack.c.b16 %v2471, %v2463
    %v2960 = vpack.c.b16 %v2472, %v2464
    %v2961 = vpack.c.b16 %v2473, %v2465
    %v2962 = vpack.c.b16 %v2474, %v2466
    %v2963 = vpack.c.b16 %v2483, %v2475
    %v2964 = vpack.c.b16 %v2484, %v2476
    %v2965 = vpack.c.b16 %v2485, %v2477
    %v2966 = vpack.c.b16 %v2486, %v2478
    %v2967 = vpack.c.b16 %v2487, %v2479
    %v2968 = vpack.c.b16 %v2488, %v2480
    %v2969 = vpack.c.b16 %v2489, %v2481
    %v2970 = vpack.c.b16 %v2490, %v2482
    %v2971 = vpack.c.b16 %v2499, %v2491
    %v2972 = vpack.c.b16 %v2500, %v2492
    %v2973 = vpack.c.b16 %v2501, %v2493
    %v2974 = vpack.c.b16 %v2502, %v2494
    %v2975 = vpack.c.b16 %v2503, %v2495
    %v2976 = vpack.c.b16 %v2504, %v2496
    %v2977 = vpack.c.b16 %v2505, %v2497
    %v2978 = vpack.c.b16 %v2506, %v2498
    %v2979 = vpack.c.b16 %v2515, %v2507
    %v2980 = vpack.c.b16 %v2516, %v2508
    %v2981 = vpack.c.b16 %v2517, %v2509
    %v2982 = vpack.c.b16 %v2518, %v2510
    %v2983 = vpack.c.b16 %v2519, %v2511
    %v2984 = vpack.c.b16 %v2520, %v2512
    %v2985 = vpack.c.b16 %v2521, %v2513
    %v2986 = vpack.c.b16 %v2522, %v2514
    %v2987 = vpack.c.b16 %v2531, %v2523
    %v2988 = vpack.c.b16 %v2532, %v2524
    %v2989 = vpack.c.b16 %v2533, %v2525
    %v2990 = vpack.c.b16 %v2534, %v2526
    %v2991 = vpack.c.b16 %v2535, %v2527
    %v2992 = vpack.c.b16 %v2536, %v2528
    %v2993 = vpack.c.b16 %v2537, %v2529
    %v2994 = vpack.c.b16 %v2538, %v2530
    %v2995 = vpack.c.b16 %v2547, %v2539
    %v2996 = vpack.c.b16 %v2548, %v2540
    %v2997 = vpack.c.b16 %v2549, %v2541
    %v2998 = vpack.c.b16 %v2550, %v2542
    %v2999 = vpack.c.b16 %v2551, %v2543
    %v3000 = vpack.c.b16 %v2552, %v2544
    %v3001 = vpack.c.b16 %v2553, %v2545
    %v3002 = vpack.c.b16 %v2554, %v2546
    %v3003 = vpack.c.b16 %v2563, %v2555
    %v3004 = vpack.c.b16 %v2564, %v2556
    %v3005 = vpack.c.b16 %v2565, %v2557
    %v3006 = vpack.c.b16 %v2566, %v2558
    %v3007 = vpack.c.b16 %v2567, %v2559
    %v3008 = vpack.c.b16 %v2568, %v2560
    %v3009 = vpack.c.b16 %v2569, %v2561
    %v3010 = vpack.c.b16 %v2570, %v2562
    %v3011 = vpack.c.b16 %v2579, %v2571
    %v3012 = vpack.c.b16 %v2580, %v2572
    %v3013 = vpack.c.b16 %v2581, %v2573
    %v3014 = vpack.c.b16 %v2582, %v2574
    %v3015 = vpack.c.b16 %v2583, %v2575
    %v3016 = vpack.c.b16 %v2584, %v2576
    %v3017 = vpack.c.b16 %v2585, %v2577
    %v3018 = vpack.c.b16 %v2586, %v2578
    %v3019 = vpack.c.b16 %v2595, %v2587
    %v3020 = vpack.c.b16 %v2596, %v2588
    %v3021 = vpack.c.b16 %v2597, %v2589
    %v3022 = vpack.c.b16 %v2598, %v2590
    %v3023 = vpack.c.b16 %v2599, %v2591
    %v3024 = vpack.c.b16 %v2600, %v2592
    %v3025 = vpack.c.b16 %v2601, %v2593
    %v3026 = vpack.c.b16 %v2602, %v2594
    %v3027 = vpack.c.b16 %v2611, %v2603
    %v3028 = vpack.c.b16 %v2612, %v2604
    %v3029 = vpack.c.b16 %v2613, %v2605
    %v3030 = vpack.c.b16 %v2614, %v2606
    %v3031 = vpack.c.b16 %v2615, %v2607
    %v3032 = vpack.c.b16 %v2616, %v2608
    %v3033 = vpack.c.b16 %v2617, %v2609
    %v3034 = vpack.c.b16 %v2618, %v2610
    %v3035 = vpack.c.b16 %v2627, %v2619
    %v3036 = vpack.c.b16 %v2628, %v2620
    %v3037 = vpack.c.b16 %v2629, %v2621
    %v3038 = vpack.c.b16 %v2630, %v2622
    %v3039 = vpack.c.b16 %v2631, %v2623
    %v3040 = vpack.c.b16 %v2632, %v2624
    %v3041 = vpack.c.b16 %v2633, %v2625
    %v3042 = vpack.c.b16 %v2634, %v2626
    %v3043 = vpack.c.b16 %v2643, %v2635
    %v3044 = vpack.c.b16 %v2644, %v2636
    %v3045 = vpack.c.b16 %v2645, %v2637
    %v3046 = vpack.c.b16 %v2646, %v2638
    %v3047 = vpack.c.b16 %v2647, %v2639
    %v3048 = vpack.c.b16 %v2648, %v2640
    %v3049 = vpack.c.b16 %v2649, %v2641
    %v3050 = vpack.c.b16 %v2650, %v2642
    %v3051 = vpack.c.b16 %v2659, %v2651
    %v3052 = vpack.c.b16 %v2660, %v2652
    %v3053 = vpack.c.b16 %v2661, %v2653
    %v3054 = vpack.c.b16 %v2662, %v2654
    %v3055 = vpack.c.b16 %v2663, %v2655
    %v3056 = vpack.c.b16 %v2664, %v2656
    %v3057 = vpack.c.b16 %v2665, %v2657
    %v3058 = vpack.c.b16 %v2666, %v2658
    %v3059 = vpack.c.b16 %v2675, %v2667
    %v3060 = vpack.c.b16 %v2676, %v2668
    %v3061 = vpack.c.b16 %v2677, %v2669
    %v3062 = vpack.c.b16 %v2678, %v2670
    %v3063 = vpack.c.b16 %v2679, %v2671
    %v3064 = vpack.c.b16 %v2680, %v2672
    %v3065 = vpack.c.b16 %v2681, %v2673
    %v3066 = vpack.c.b16 %v2682, %v2674
    %v3067 = vpack.c.b16 %v2691, %v2683
    %v3068 = vpack.c.b16 %v2692, %v2684
    %v3069 = vpack.c.b16 %v2693, %v2685
    %v3070 = vpack.c.b16 %v2694, %v2686
    %v3071 = vpack.c.b16 %v2695, %v2687
    %v3072 = vpack.c.b16 %v2696, %v2688
    %v3073 = vpack.c.b16 %v2697, %v2689
    %v3074 = vpack.c.b16 %v2698, %v2690
    %v3075 = vpack.c.b16 %v2707, %v2699
    %v3076 = vpack.c.b16 %v2708, %v2700
    %v3077 = vpack.c.b16 %v2709, %v2701
    %v3078 = vpack.c.b16 %v2710, %v2702
    %v3079 = vpack.c.b16 %v2711, %v2703
    %v3080 = vpack.c.b16 %v2712, %v2704
    %v3081 = vpack.c.b16 %v2713, %v2705
    %v3082 = vpack.c.b16 %v2714, %v2706
    %v3083 = vpack.c.b16 %v2723, %v2715
    %v3084 = vpack.c.b16 %v2724, %v2716
    %v3085 = vpack.c.b16 %v2725, %v2717
    %v3086 = vpack.c.b16 %v2726, %v2718
    %v3087 = vpack.c.b16 %v2727, %v2719
    %v3088 = vpack.c.b16 %v2728, %v2720
    %v3089 = vpack.c.b16 %v2729, %v2721
    %v3090 = vpack.c.b16 %v2730, %v2722
    %v3091 = vpack.c.b16 %v2739, %v2731
    %v3092 = vpack.c.b16 %v2740, %v2732
    %v3093 = vpack.c.b16 %v2741, %v2733
    %v3094 = vpack.c.b16 %v2742, %v2734
    %v3095 = vpack.c.b16 %v2743, %v2735
    %v3096 = vpack.c.b16 %v2744, %v2736
    %v3097 = vpack.c.b16 %v2745, %v2737
    %v3098 = vpack.c.b16 %v2746, %v2738
    %v3099 = vpack.c.b16 %v2755, %v2747
    %v3100 = vpack.c.b16 %v2756, %v2748
    %v3101 = vpack.c.b16 %v2757, %v2749
    %v3102 = vpack.c.b16 %v2758, %v2750
    %v3103 = vpack.c.b16 %v2759, %v2751
    %v3104 = vpack.c.b16 %v2760, %v2752
    %v3105 = vpack.c.b16 %v2761, %v2753
    %v3106 = vpack.c.b16 %v2762, %v2754
    %v3107 = vpack.c.b16 %v2771, %v2763
    %v3108 = vpack.c.b16 %v2772, %v2764
    %v3109 = vpack.c.b16 %v2773, %v2765
    %v3110 = vpack.c.b16 %v2774, %v2766
    %v3111 = vpack.c.b16 %v2775, %v2767
    %v3112 = vpack.c.b16 %v2776, %v2768
    %v3113 = vpack.c.b16 %v2777, %v2769
    %v3114 = vpack.c.b16 %v2778, %v2770
    %v3115 = vpack.c.b16 %v2787, %v2779
    %v3116 = vpack.c.b16 %v2788, %v2780
    %v3117 = vpack.c.b16 %v2789, %v2781
    %v3118 = vpack.c.b16 %v2790, %v2782
    %v3119 = vpack.c.b16 %v2791, %v2783
    %v3120 = vpack.c.b16 %v2792, %v2784
    %v3121 = vpack.c.b16 %v2793, %v2785
    %v3122 = vpack.c.b16 %v2794, %v2786
    %v3123 = vpack.c.b16 %v2803, %v2795
    %v3124 = vpack.c.b16 %v2804, %v2796
    %v3125 = vpack.c.b16 %v2805, %v2797
    %v3126 = vpack.c.b16 %v2806, %v2798
    %v3127 = vpack.c.b16 %v2807, %v2799
    %v3128 = vpack.c.b16 %v2808, %v2800
    %v3129 = vpack.c.b16 %v2809, %v2801
    %v3130 = vpack.c.b16 %v2810, %v2802
    %v3131 = vpack.c.b16 %v2819, %v2811
    %v3132 = vpack.c.b16 %v2820, %v2812
    %v3133 = vpack.c.b16 %v2821, %v2813
    %v3134 = vpack.c.b16 %v2822, %v2814
    %v3135 = vpack.c.b16 %v2823, %v2815
    %v3136 = vpack.c.b16 %v2824, %v2816
    %v3137 = vpack.c.b16 %v2825, %v2817
    %v3138 = vpack.c.b16 %v2826, %v2818
    %v3139 = vpack.c.b16 %v2835, %v2827
    %v3140 = vpack.c.b16 %v2836, %v2828
    %v3141 = vpack.c.b16 %v2837, %v2829
    %v3142 = vpack.c.b16 %v2838, %v2830
    %v3143 = vpack.c.b16 %v2839, %v2831
    %v3144 = vpack.c.b16 %v2840, %v2832
    %v3145 = vpack.c.b16 %v2841, %v2833
    %v3146 = vpack.c.b16 %v2842, %v2834
    %v3147 = vpack.c.b16 %v2851, %v2843
    %v3148 = vpack.c.b16 %v2852, %v2844
    %v3149 = vpack.c.b16 %v2853, %v2845
    %v3150 = vpack.c.b16 %v2854, %v2846
    %v3151 = vpack.c.b16 %v2855, %v2847
    %v3152 = vpack.c.b16 %v2856, %v2848
    %v3153 = vpack.c.b16 %v2857, %v2849
    %v3154 = vpack.c.b16 %v2858, %v2850
    %v3155 = vpack.c.b16 %v2867, %v2859
    %v3156 = vpack.c.b16 %v2868, %v2860
    %v3157 = vpack.c.b16 %v2869, %v2861
    %v3158 = vpack.c.b16 %v2870, %v2862
    %v3159 = vpack.c.b16 %v2871, %v2863
    %v3160 = vpack.c.b16 %v2872, %v2864
    %v3161 = vpack.c.b16 %v2873, %v2865
    %v3162 = vpack.c.b16 %v2874, %v2866
    %v3163 = vpack.c.b16 %v2883, %v2875
    %v3164 = vpack.c.b16 %v2884, %v2876
    %v3165 = vpack.c.b16 %v2885, %v2877
    %v3166 = vpack.c.b16 %v2886, %v2878
    %v3167 = vpack.c.b16 %v2887, %v2879
    %v3168 = vpack.c.b16 %v2888, %v2880
    %v3169 = vpack.c.b16 %v2889, %v2881
    %v3170 = vpack.c.b16 %v2890, %v2882
    %v3171 = vpack.c.b16 %v2899, %v2891
    %v3172 = vpack.c.b16 %v2900, %v2892
    %v3173 = vpack.c.b16 %v2901, %v2893
    %v3174 = vpack.c.b16 %v2902, %v2894
    %v3175 = vpack.c.b16 %v2903, %v2895
    %v3176 = vpack.c.b16 %v2904, %v2896
    %v3177 = vpack.c.b16 %v2905, %v2897
    %v3178 = vpack.c.b16 %v2906, %v2898
    %v3179 = vpack.c.b16 %v2915, %v2907
    %v3180 = vpack.c.b16 %v2916, %v2908
    %v3181 = vpack.c.b16 %v2917, %v2909
    %v3182 = vpack.c.b16 %v2918, %v2910
    %v3183 = vpack.c.b16 %v2919, %v2911
    %v3184 = vpack.c.b16 %v2920, %v2912
    %v3185 = vpack.c.b16 %v2921, %v2913
    %v3186 = vpack.c.b16 %v2922, %v2914
    %v3187 = vpack.c.b16 %v2931, %v2923
    %v3188 = vpack.c.b16 %v2932, %v2924
    %v3189 = vpack.c.b16 %v2933, %v2925
    %v3190 = vpack.c.b16 %v2934, %v2926
    %v3191 = vpack.c.b16 %v2935, %v2927
    %v3192 = vpack.c.b16 %v2936, %v2928
    %v3193 = vpack.c.b16 %v2937, %v2929
    %v3194 = vpack.c.b16 %v2938, %v2930
    %3451 = vmatprep.subr.bf16.mxu0 %v2996
    %3452 = vmatpush1.bf16.msra.mxu0 %v2995
    %3453 = vmatprep.subr.bf16.mxu0 %v2988
    %3454 = vmatpush1.bf16.msra.mxu0 %v2987
    %3455 = vmatprep.subr.bf16.mxu0 %v2980
    %3456 = vmatpush1.bf16.msra.mxu0 %v2979
    %3457 = vmatprep.subr.bf16.mxu0 %v2972
    %3458 = vmatpush1.bf16.msra.mxu0 %v2971
    %3459 = vmatprep.subr.bf16.mxu0 %v2964
    %3460 = vmatpush1.bf16.msra.mxu0 %v2963
    %3461 = vmatprep.subr.bf16.mxu0 %v2956
    %3462 = vmatpush1.bf16.msra.mxu0 %v2955
    %3463 = vmatprep.subr.bf16.mxu0 %v2948
    %3464 = vmatpush1.bf16.msra.mxu0 %v2947
    %3465 = vmatprep.subr.bf16.mxu0 %v2940
    %3466 = vmatpush1.bf16.msra.mxu0 %v2939
    %3467 = vmatprep.subr.bf16.mxu0 %v3060
    %3468 = vmatpush2.bf16.msra.mxu0 %v3059
    %3469 = vmatprep.subr.bf16.mxu0 %v3052
    %3470 = vmatpush2.bf16.msra.mxu0 %v3051
    %3471 = vmatprep.subr.bf16.mxu0 %v3044
    %3472 = vmatpush2.bf16.msra.mxu0 %v3043
    %3473 = vmatprep.subr.bf16.mxu0 %v3036
    %3474 = vmatpush2.bf16.msra.mxu0 %v3035
    %3475 = vmatprep.subr.bf16.mxu0 %v3028
    %3476 = vmatpush2.bf16.msra.mxu0 %v3027
    %3477 = vmatprep.subr.bf16.mxu0 %v3020
    %3478 = vmatpush2.bf16.msra.mxu0 %v3019
    %3479 = vmatprep.subr.bf16.mxu0 %v3012
    %3480 = vmatpush2.bf16.msra.mxu0 %v3011
    %3481 = vmatprep.subr.bf16.mxu0 %v3004
    %3482 = vmatpush2.bf16.msra.mxu0 %v3003
    %3483 = vmatprep.mubr.bf16.mxu0 %v1870
    %3484 = vmatmul.mubr.bf16.gmra.mxu0 %v1869
    %v3485 = vpop.f32.mrf.mxu0
    %v3486 = vadd.f32 %v2134, %v3485
    %v3487 = vpop.f32.mrf.mxu0
    %v3488 = vadd.f32 %v2138, %v3487
    %v3489 = vpop.f32.mrf.mxu0
    %v3490 = vpop.f32.mrf.mxu0
    %3491 = vdwg.mxu0
    %3492 = vmatprep.subr.bf16.mxu0 %v3124
    %3493 = vmatpush1.bf16.msra.mxu0 %v3123
    %3494 = vmatprep.subr.bf16.mxu0 %v3116
    %3495 = vmatpush1.bf16.msra.mxu0 %v3115
    %3496 = vmatprep.subr.bf16.mxu0 %v3108
    %3497 = vmatpush1.bf16.msra.mxu0 %v3107
    %3498 = vmatprep.subr.bf16.mxu0 %v3100
    %3499 = vmatpush1.bf16.msra.mxu0 %v3099
    %3500 = vmatprep.subr.bf16.mxu0 %v3092
    %3501 = vmatpush1.bf16.msra.mxu0 %v3091
    %3502 = vmatprep.subr.bf16.mxu0 %v3084
    %3503 = vmatpush1.bf16.msra.mxu0 %v3083
    %3504 = vmatprep.subr.bf16.mxu0 %v3076
    %3505 = vmatpush1.bf16.msra.mxu0 %v3075
    %3506 = vmatprep.subr.bf16.mxu0 %v3068
    %3507 = vmatpush1.bf16.msra.mxu0 %v3067
    %3508 = vmatprep.subr.bf16.mxu0 %v3188
    %3509 = vmatpush2.bf16.msra.mxu0 %v3187
    %3510 = vmatprep.subr.bf16.mxu0 %v3180
    %3511 = vmatpush2.bf16.msra.mxu0 %v3179
    %3512 = vmatprep.subr.bf16.mxu0 %v3172
    %3513 = vmatpush2.bf16.msra.mxu0 %v3171
    %3514 = vmatprep.subr.bf16.mxu0 %v3164
    %3515 = vmatpush2.bf16.msra.mxu0 %v3163
    %3516 = vmatprep.subr.bf16.mxu0 %v3156
    %3517 = vmatpush2.bf16.msra.mxu0 %v3155
    %3518 = vmatprep.subr.bf16.mxu0 %v3148
    %3519 = vmatpush2.bf16.msra.mxu0 %v3147
    %3520 = vmatprep.subr.bf16.mxu0 %v3140
    %3521 = vmatpush2.bf16.msra.mxu0 %v3139
    %3522 = vmatprep.subr.bf16.mxu0 %v3132
    %3523 = vmatpush2.bf16.msra.mxu0 %v3131
    %3524 = vmatprep.mubr.bf16.mxu0 %v1872
    %3525 = vmatmul.mubr.bf16.gmra.mxu0 %v1871
    %v3526 = vpop.f32.mrf.mxu0
    %v3527 = vadd.f32 %v3486, %v3526
    %v3528 = vpop.f32.mrf.mxu0
    %v3529 = vadd.f32 %v3488, %v3528
    %v3530 = vpop.f32.mrf.mxu0
    %v3531 = vpop.f32.mrf.mxu0
    %3532 = vdwg.mxu0
    %3533 = vmatprep.subr.bf16.mxu0 %v2998
    %3534 = vmatpush1.bf16.msra.mxu0 %v2997
    %3535 = vmatprep.subr.bf16.mxu0 %v2990
    %3536 = vmatpush1.bf16.msra.mxu0 %v2989
    %3537 = vmatprep.subr.bf16.mxu0 %v2982
    %3538 = vmatpush1.bf16.msra.mxu0 %v2981
    %3539 = vmatprep.subr.bf16.mxu0 %v2974
    %3540 = vmatpush1.bf16.msra.mxu0 %v2973
    %3541 = vmatprep.subr.bf16.mxu0 %v2966
    %3542 = vmatpush1.bf16.msra.mxu0 %v2965
    %3543 = vmatprep.subr.bf16.mxu0 %v2958
    %3544 = vmatpush1.bf16.msra.mxu0 %v2957
    %3545 = vmatprep.subr.bf16.mxu0 %v2950
    %3546 = vmatpush1.bf16.msra.mxu0 %v2949
    %3547 = vmatprep.subr.bf16.mxu0 %v2942
    %3548 = vmatpush1.bf16.msra.mxu0 %v2941
    %3549 = vmatprep.subr.bf16.mxu0 %v3062
    %3550 = vmatpush2.bf16.msra.mxu0 %v3061
    %3551 = vmatprep.subr.bf16.mxu0 %v3054
    %3552 = vmatpush2.bf16.msra.mxu0 %v3053
    %3553 = vmatprep.subr.bf16.mxu0 %v3046
    %3554 = vmatpush2.bf16.msra.mxu0 %v3045
    %3555 = vmatprep.subr.bf16.mxu0 %v3038
    %3556 = vmatpush2.bf16.msra.mxu0 %v3037
    %3557 = vmatprep.subr.bf16.mxu0 %v3030
    %3558 = vmatpush2.bf16.msra.mxu0 %v3029
    %3559 = vmatprep.subr.bf16.mxu0 %v3022
    %3560 = vmatpush2.bf16.msra.mxu0 %v3021
    %3561 = vmatprep.subr.bf16.mxu0 %v3014
    %3562 = vmatpush2.bf16.msra.mxu0 %v3013
    %3563 = vmatprep.subr.bf16.mxu0 %v3006
    %3564 = vmatpush2.bf16.msra.mxu0 %v3005
    %3565 = vmatprep.mubr.bf16.mxu0 %v1870
    %3566 = vmatmul.mubr.bf16.gmra.mxu0 %v1869
    %v3567 = vpop.f32.mrf.mxu0
    %v3568 = vadd.f32 %v2142, %v3567
    %v3569 = vpop.f32.mrf.mxu0
    %v3570 = vadd.f32 %v2146, %v3569
    %v3571 = vpop.f32.mrf.mxu0
    %v3572 = vpop.f32.mrf.mxu0
    %3573 = vdwg.mxu0
    %3574 = vmatprep.subr.bf16.mxu0 %v3126
    %3575 = vmatpush1.bf16.msra.mxu0 %v3125
    %3576 = vmatprep.subr.bf16.mxu0 %v3118
    %3577 = vmatpush1.bf16.msra.mxu0 %v3117
    %3578 = vmatprep.subr.bf16.mxu0 %v3110
    %3579 = vmatpush1.bf16.msra.mxu0 %v3109
    %3580 = vmatprep.subr.bf16.mxu0 %v3102
    %3581 = vmatpush1.bf16.msra.mxu0 %v3101
    %3582 = vmatprep.subr.bf16.mxu0 %v3094
    %3583 = vmatpush1.bf16.msra.mxu0 %v3093
    %3584 = vmatprep.subr.bf16.mxu0 %v3086
    %3585 = vmatpush1.bf16.msra.mxu0 %v3085
    %3586 = vmatprep.subr.bf16.mxu0 %v3078
    %3587 = vmatpush1.bf16.msra.mxu0 %v3077
    %3588 = vmatprep.subr.bf16.mxu0 %v3070
    %3589 = vmatpush1.bf16.msra.mxu0 %v3069
    %3590 = vmatprep.subr.bf16.mxu0 %v3190
    %3591 = vmatpush2.bf16.msra.mxu0 %v3189
    %3592 = vmatprep.subr.bf16.mxu0 %v3182
    %3593 = vmatpush2.bf16.msra.mxu0 %v3181
    %3594 = vmatprep.subr.bf16.mxu0 %v3174
    %3595 = vmatpush2.bf16.msra.mxu0 %v3173
    %3596 = vmatprep.subr.bf16.mxu0 %v3166
    %3597 = vmatpush2.bf16.msra.mxu0 %v3165
    %3598 = vmatprep.subr.bf16.mxu0 %v3158
    %3599 = vmatpush2.bf16.msra.mxu0 %v3157
    %3600 = vmatprep.subr.bf16.mxu0 %v3150
    %3601 = vmatpush2.bf16.msra.mxu0 %v3149
    %3602 = vmatprep.subr.bf16.mxu0 %v3142
    %3603 = vmatpush2.bf16.msra.mxu0 %v3141
    %3604 = vmatprep.subr.bf16.mxu0 %v3134
    %3605 = vmatpush2.bf16.msra.mxu0 %v3133
    %3606 = vmatprep.mubr.bf16.mxu0 %v1872
    %3607 = vmatmul.mubr.bf16.gmra.mxu0 %v1871
    %v3608 = vpop.f32.mrf.mxu0
    %v3609 = vadd.f32 %v3568, %v3608
    %v3610 = vpop.f32.mrf.mxu0
    %v3611 = vadd.f32 %v3570, %v3610
    %v3612 = vpop.f32.mrf.mxu0
    %v3613 = vpop.f32.mrf.mxu0
    %3614 = vdwg.mxu0
    %3615 = vmatprep.subr.bf16.mxu0 %v3000
    %3616 = vmatpush1.bf16.msra.mxu0 %v2999
    %3617 = vmatprep.subr.bf16.mxu0 %v2992
    %3618 = vmatpush1.bf16.msra.mxu0 %v2991
    %3619 = vmatprep.subr.bf16.mxu0 %v2984
    %3620 = vmatpush1.bf16.msra.mxu0 %v2983
    %3621 = vmatprep.subr.bf16.mxu0 %v2976
    %3622 = vmatpush1.bf16.msra.mxu0 %v2975
    %3623 = vmatprep.subr.bf16.mxu0 %v2968
    %3624 = vmatpush1.bf16.msra.mxu0 %v2967
    %3625 = vmatprep.subr.bf16.mxu0 %v2960
    %3626 = vmatpush1.bf16.msra.mxu0 %v2959
    %3627 = vmatprep.subr.bf16.mxu0 %v2952
    %3628 = vmatpush1.bf16.msra.mxu0 %v2951
    %3629 = vmatprep.subr.bf16.mxu0 %v2944
    %3630 = vmatpush1.bf16.msra.mxu0 %v2943
    %3631 = vmatprep.subr.bf16.mxu0 %v3064
    %3632 = vmatpush2.bf16.msra.mxu0 %v3063
    %3633 = vmatprep.subr.bf16.mxu0 %v3056
    %3634 = vmatpush2.bf16.msra.mxu0 %v3055
    %3635 = vmatprep.subr.bf16.mxu0 %v3048
    %3636 = vmatpush2.bf16.msra.mxu0 %v3047
    %3637 = vmatprep.subr.bf16.mxu0 %v3040
    %3638 = vmatpush2.bf16.msra.mxu0 %v3039
    %3639 = vmatprep.subr.bf16.mxu0 %v3032
    %3640 = vmatpush2.bf16.msra.mxu0 %v3031
    %3641 = vmatprep.subr.bf16.mxu0 %v3024
    %3642 = vmatpush2.bf16.msra.mxu0 %v3023
    %3643 = vmatprep.subr.bf16.mxu0 %v3016
    %3644 = vmatpush2.bf16.msra.mxu0 %v3015
    %3645 = vmatprep.subr.bf16.mxu0 %v3008
    %3646 = vmatpush2.bf16.msra.mxu0 %v3007
    %3647 = vmatprep.mubr.bf16.mxu0 %v1870
    %3648 = vmatmul.mubr.bf16.gmra.mxu0 %v1869
    %v3649 = vpop.f32.mrf.mxu0
    %v3650 = vadd.f32 %v2150, %v3649
    %v3651 = vpop.f32.mrf.mxu0
    %v3652 = vadd.f32 %v2154, %v3651
    %v3653 = vpop.f32.mrf.mxu0
    %v3654 = vpop.f32.mrf.mxu0
    %3655 = vdwg.mxu0
    %3656 = vmatprep.subr.bf16.mxu0 %v3128
    %3657 = vmatpush1.bf16.msra.mxu0 %v3127
    %3658 = vmatprep.subr.bf16.mxu0 %v3120
    %3659 = vmatpush1.bf16.msra.mxu0 %v3119
    %3660 = vmatprep.subr.bf16.mxu0 %v3112
    %3661 = vmatpush1.bf16.msra.mxu0 %v3111
    %3662 = vmatprep.subr.bf16.mxu0 %v3104
    %3663 = vmatpush1.bf16.msra.mxu0 %v3103
    %3664 = vmatprep.subr.bf16.mxu0 %v3096
    %3665 = vmatpush1.bf16.msra.mxu0 %v3095
    %3666 = vmatprep.subr.bf16.mxu0 %v3088
    %3667 = vmatpush1.bf16.msra.mxu0 %v3087
    %3668 = vmatprep.subr.bf16.mxu0 %v3080
    %3669 = vmatpush1.bf16.msra.mxu0 %v3079
    %3670 = vmatprep.subr.bf16.mxu0 %v3072
    %3671 = vmatpush1.bf16.msra.mxu0 %v3071
    %3672 = vmatprep.subr.bf16.mxu0 %v3192
    %3673 = vmatpush2.bf16.msra.mxu0 %v3191
    %3674 = vmatprep.subr.bf16.mxu0 %v3184
    %3675 = vmatpush2.bf16.msra.mxu0 %v3183
    %3676 = vmatprep.subr.bf16.mxu0 %v3176
    %3677 = vmatpush2.bf16.msra.mxu0 %v3175
    %3678 = vmatprep.subr.bf16.mxu0 %v3168
    %3679 = vmatpush2.bf16.msra.mxu0 %v3167
    %3680 = vmatprep.subr.bf16.mxu0 %v3160
    %3681 = vmatpush2.bf16.msra.mxu0 %v3159
    %3682 = vmatprep.subr.bf16.mxu0 %v3152
    %3683 = vmatpush2.bf16.msra.mxu0 %v3151
    %3684 = vmatprep.subr.bf16.mxu0 %v3144
    %3685 = vmatpush2.bf16.msra.mxu0 %v3143
    %3686 = vmatprep.subr.bf16.mxu0 %v3136
    %3687 = vmatpush2.bf16.msra.mxu0 %v3135
    %3688 = vmatprep.mubr.bf16.mxu0 %v1872
    %3689 = vmatmul.mubr.bf16.gmra.mxu0 %v1871
    %v3690 = vpop.f32.mrf.mxu0
    %v3691 = vadd.f32 %v3650, %v3690
    %v3692 = vpop.f32.mrf.mxu0
    %v3693 = vadd.f32 %v3652, %v3692
    %v3694 = vpop.f32.mrf.mxu0
    %v3695 = vpop.f32.mrf.mxu0
    %3696 = vdwg.mxu0
    %3697 = vmatprep.subr.bf16.mxu0 %v3002
    %3698 = vmatpush1.bf16.msra.mxu0 %v3001
    %3699 = vmatprep.subr.bf16.mxu0 %v2994
    %3700 = vmatpush1.bf16.msra.mxu0 %v2993
    %3701 = vmatprep.subr.bf16.mxu0 %v2986
    %3702 = vmatpush1.bf16.msra.mxu0 %v2985
    %3703 = vmatprep.subr.bf16.mxu0 %v2978
    %3704 = vmatpush1.bf16.msra.mxu0 %v2977
    %3705 = vmatprep.subr.bf16.mxu0 %v2970
    %3706 = vmatpush1.bf16.msra.mxu0 %v2969
    %3707 = vmatprep.subr.bf16.mxu0 %v2962
    %3708 = vmatpush1.bf16.msra.mxu0 %v2961
    %3709 = vmatprep.subr.bf16.mxu0 %v2954
    %3710 = vmatpush1.bf16.msra.mxu0 %v2953
    %3711 = vmatprep.subr.bf16.mxu0 %v2946
    %3712 = vmatpush1.bf16.msra.mxu0 %v2945
    %3713 = vmatprep.subr.bf16.mxu0 %v3066
    %3714 = vmatpush2.bf16.msra.mxu0 %v3065
    %3715 = vmatprep.subr.bf16.mxu0 %v3058
    %3716 = vmatpush2.bf16.msra.mxu0 %v3057
    %3717 = vmatprep.subr.bf16.mxu0 %v3050
    %3718 = vmatpush2.bf16.msra.mxu0 %v3049
    %3719 = vmatprep.subr.bf16.mxu0 %v3042
    %3720 = vmatpush2.bf16.msra.mxu0 %v3041
    %3721 = vmatprep.subr.bf16.mxu0 %v3034
    %3722 = vmatpush2.bf16.msra.mxu0 %v3033
    %3723 = vmatprep.subr.bf16.mxu0 %v3026
    %3724 = vmatpush2.bf16.msra.mxu0 %v3025
    %3725 = vmatprep.subr.bf16.mxu0 %v3018
    %3726 = vmatpush2.bf16.msra.mxu0 %v3017
    %3727 = vmatprep.subr.bf16.mxu0 %v3010
    %3728 = vmatpush2.bf16.msra.mxu0 %v3009
    %3729 = vmatprep.mubr.bf16.mxu0 %v1870
    %3730 = vmatmul.mubr.bf16.gmra.mxu0 %v1869
    %v3731 = vpop.f32.mrf.mxu0
    %v3732 = vadd.f32 %v2158, %v3731
    %v3733 = vpop.f32.mrf.mxu0
    %v3734 = vadd.f32 %v2162, %v3733
    %v3735 = vpop.f32.mrf.mxu0
    %v3736 = vpop.f32.mrf.mxu0
    %3737 = vdwg.mxu0
    %3738 = vmatprep.subr.bf16.mxu0 %v3130
    %3739 = vmatpush1.bf16.msra.mxu0 %v3129
    %3740 = vmatprep.subr.bf16.mxu0 %v3122
    %3741 = vmatpush1.bf16.msra.mxu0 %v3121
    %3742 = vmatprep.subr.bf16.mxu0 %v3114
    %3743 = vmatpush1.bf16.msra.mxu0 %v3113
    %3744 = vmatprep.subr.bf16.mxu0 %v3106
    %3745 = vmatpush1.bf16.msra.mxu0 %v3105
    %3746 = vmatprep.subr.bf16.mxu0 %v3098
    %3747 = vmatpush1.bf16.msra.mxu0 %v3097
    %3748 = vmatprep.subr.bf16.mxu0 %v3090
    %3749 = vmatpush1.bf16.msra.mxu0 %v3089
    %3750 = vmatprep.subr.bf16.mxu0 %v3082
    %3751 = vmatpush1.bf16.msra.mxu0 %v3081
    %3752 = vmatprep.subr.bf16.mxu0 %v3074
    %3753 = vmatpush1.bf16.msra.mxu0 %v3073
    %3754 = vmatprep.subr.bf16.mxu0 %v3194
    %3755 = vmatpush2.bf16.msra.mxu0 %v3193
    %3756 = vmatprep.subr.bf16.mxu0 %v3186
    %3757 = vmatpush2.bf16.msra.mxu0 %v3185
    %3758 = vmatprep.subr.bf16.mxu0 %v3178
    %3759 = vmatpush2.bf16.msra.mxu0 %v3177
    %3760 = vmatprep.subr.bf16.mxu0 %v3170
    %3761 = vmatpush2.bf16.msra.mxu0 %v3169
    %3762 = vmatprep.subr.bf16.mxu0 %v3162
    %3763 = vmatpush2.bf16.msra.mxu0 %v3161
    %3764 = vmatprep.subr.bf16.mxu0 %v3154
    %3765 = vmatpush2.bf16.msra.mxu0 %v3153
    %3766 = vmatprep.subr.bf16.mxu0 %v3146
    %3767 = vmatpush2.bf16.msra.mxu0 %v3145
    %3768 = vmatprep.subr.bf16.mxu0 %v3138
    %3769 = vmatpush2.bf16.msra.mxu0 %v3137
    %3770 = vmatprep.mubr.bf16.mxu0 %v1872
    %3771 = vmatmul.mubr.bf16.gmra.mxu0 %v1871
    %v3772 = vpop.f32.mrf.mxu0
    %v3773 = vadd.f32 %v3732, %v3772
    %v3774 = vpop.f32.mrf.mxu0
    %v3775 = vadd.f32 %v3734, %v3774
    %v3776 = vpop.f32.mrf.mxu0
    %v3777 = vpop.f32.mrf.mxu0
    %3778 = vdwg.mxu0
    %v3779 = vmax.f32 %v3527, 0.0
    %v3780 = vmax.f32 %v3529, 0.0
    %v3781 = vmax.f32 %v3609, 0.0
    %v3782 = vmax.f32 %v3611, 0.0
    %v3783 = vmax.f32 %v3691, 0.0
    %v3784 = vmax.f32 %v3693, 0.0
    %v3785 = vmax.f32 %v3773, 0.0
    %v3786 = vmax.f32 %v3775, 0.0
    %v3787 = vpack.c.bf16 %v3779, %v3779
    %v3788 = vpack.c.bf16 %v3780, %v3780
    %v3789 = vpack.c.bf16 %v3781, %v3781
    %v3790 = vpack.c.bf16 %v3782, %v3782
    %v3791 = vpack.c.bf16 %v3783, %v3783
    %v3792 = vpack.c.bf16 %v3784, %v3784
    %v3793 = vpack.c.bf16 %v3785, %v3785
    %v3794 = vpack.c.bf16 %v3786, %v3786
    %v3795 = vld [vmem:[#allocation14] sm:$0xf]
    %v3796 = vld [vmem:[#allocation14 + $0x4] sm:$0xf]
    %v3797 = vld [vmem:[#allocation14 + $0x8] sm:$0xf]
    %v3798 = vld [vmem:[#allocation14 + $0xc] sm:$0xf]
    %v3799 = vld [vmem:[#allocation14 + $0x10] sm:$0xf]
    %v3800 = vld [vmem:[#allocation14 + $0x14] sm:$0xf]
    %v3801 = vld [vmem:[#allocation14 + $0x18] sm:$0xf]
    %v3802 = vld [vmem:[#allocation14 + $0x1c] sm:$0xf]
    %v3803 = vld [vmem:[#allocation14 + $0x20] sm:$0xf]
    %v3804 = vld [vmem:[#allocation14 + $0x24] sm:$0xf]
    %v3805 = vld [vmem:[#allocation14 + $0x28] sm:$0xf]
    %v3806 = vld [vmem:[#allocation14 + $0x2c] sm:$0xf]
    %v3807 = vld [vmem:[#allocation14 + $0x30] sm:$0xf]
    %v3808 = vld [vmem:[#allocation14 + $0x34] sm:$0xf]
    %v3809 = vld [vmem:[#allocation14 + $0x38] sm:$0xf]
    %v3810 = vld [vmem:[#allocation14 + $0x3c] sm:$0xf]
    %v3811 = vld [vmem:[#allocation14 + $0x40] sm:$0xf]
    %v3812 = vld [vmem:[#allocation14 + $0x44] sm:$0xf]
    %v3813 = vld [vmem:[#allocation14 + $0x48] sm:$0xf]
    %v3814 = vld [vmem:[#allocation14 + $0x4c] sm:$0xf]
    %v3815 = vld [vmem:[#allocation14 + $0x50] sm:$0xf]
    %v3816 = vld [vmem:[#allocation14 + $0x54] sm:$0xf]
    %v3817 = vld [vmem:[#allocation14 + $0x58] sm:$0xf]
    %v3818 = vld [vmem:[#allocation14 + $0x5c] sm:$0xf]
    %v3819 = vld [vmem:[#allocation14 + $0x60] sm:$0xf]
    %v3820 = vld [vmem:[#allocation14 + $0x64] sm:$0xf]
    %v3821 = vld [vmem:[#allocation14 + $0x68] sm:$0xf]
    %v3822 = vld [vmem:[#allocation14 + $0x6c] sm:$0xf]
    %v3823 = vld [vmem:[#allocation14 + $0x70] sm:$0xf]
    %v3824 = vld [vmem:[#allocation14 + $0x74] sm:$0xf]
    %v3825 = vld [vmem:[#allocation14 + $0x78] sm:$0xf]
    %v3826 = vld [vmem:[#allocation14 + $0x7c] sm:$0xf]
    %v3827 = vld [vmem:[#allocation14 + $0x80] sm:$0xf]
    %v3828 = vld [vmem:[#allocation14 + $0x84] sm:$0xf]
    %v3829 = vld [vmem:[#allocation14 + $0x88] sm:$0xf]
    %v3830 = vld [vmem:[#allocation14 + $0x8c] sm:$0xf]
    %v3831 = vld [vmem:[#allocation14 + $0x90] sm:$0xf]
    %v3832 = vld [vmem:[#allocation14 + $0x94] sm:$0xf]
    %v3833 = vld [vmem:[#allocation14 + $0x98] sm:$0xf]
    %v3834 = vld [vmem:[#allocation14 + $0x9c] sm:$0xf]
    %v3835 = vld [vmem:[#allocation14 + $0xa0] sm:$0xf]
    %v3836 = vld [vmem:[#allocation14 + $0xa4] sm:$0xf]
    %v3837 = vld [vmem:[#allocation14 + $0xa8] sm:$0xf]
    %v3838 = vld [vmem:[#allocation14 + $0xac] sm:$0xf]
    %v3839 = vld [vmem:[#allocation14 + $0xb0] sm:$0xf]
    %v3840 = vld [vmem:[#allocation14 + $0xb4] sm:$0xf]
    %v3841 = vld [vmem:[#allocation14 + $0xb8] sm:$0xf]
    %v3842 = vld [vmem:[#allocation14 + $0xbc] sm:$0xf]
    %v3843 = vld [vmem:[#allocation14 + $0xc0] sm:$0xf]
    %v3844 = vld [vmem:[#allocation14 + $0xc4] sm:$0xf]
    %v3845 = vld [vmem:[#allocation14 + $0xc8] sm:$0xf]
    %v3846 = vld [vmem:[#allocation14 + $0xcc] sm:$0xf]
    %v3847 = vld [vmem:[#allocation14 + $0xd0] sm:$0xf]
    %v3848 = vld [vmem:[#allocation14 + $0xd4] sm:$0xf]
    %v3849 = vld [vmem:[#allocation14 + $0xd8] sm:$0xf]
    %v3850 = vld [vmem:[#allocation14 + $0xdc] sm:$0xf]
    %v3851 = vld [vmem:[#allocation14 + $0xe0] sm:$0xf]
    %v3852 = vld [vmem:[#allocation14 + $0xe4] sm:$0xf]
    %v3853 = vld [vmem:[#allocation14 + $0xe8] sm:$0xf]
    %v3854 = vld [vmem:[#allocation14 + $0xec] sm:$0xf]
    %v3855 = vld [vmem:[#allocation14 + $0xf0] sm:$0xf]
    %v3856 = vld [vmem:[#allocation14 + $0xf4] sm:$0xf]
    %v3857 = vld [vmem:[#allocation14 + $0xf8] sm:$0xf]
    %v3858 = vld [vmem:[#allocation14 + $0xfc] sm:$0xf]
    %v3859 = vld [vmem:[#allocation14 + $0x100] sm:$0xf]
    %v3860 = vld [vmem:[#allocation14 + $0x104] sm:$0xf]
    %v3861 = vld [vmem:[#allocation14 + $0x108] sm:$0xf]
    %v3862 = vld [vmem:[#allocation14 + $0x10c] sm:$0xf]
    %v3863 = vld [vmem:[#allocation14 + $0x110] sm:$0xf]
    %v3864 = vld [vmem:[#allocation14 + $0x114] sm:$0xf]
    %v3865 = vld [vmem:[#allocation14 + $0x118] sm:$0xf]
    %v3866 = vld [vmem:[#allocation14 + $0x11c] sm:$0xf]
    %v3867 = vld [vmem:[#allocation14 + $0x120] sm:$0xf]
    %v3868 = vld [vmem:[#allocation14 + $0x124] sm:$0xf]
    %v3869 = vld [vmem:[#allocation14 + $0x128] sm:$0xf]
    %v3870 = vld [vmem:[#allocation14 + $0x12c] sm:$0xf]
    %v3871 = vld [vmem:[#allocation14 + $0x130] sm:$0xf]
    %v3872 = vld [vmem:[#allocation14 + $0x134] sm:$0xf]
    %v3873 = vld [vmem:[#allocation14 + $0x138] sm:$0xf]
    %v3874 = vld [vmem:[#allocation14 + $0x13c] sm:$0xf]
    %v3875 = vld [vmem:[#allocation14 + $0x140] sm:$0xf]
    %v3876 = vld [vmem:[#allocation14 + $0x144] sm:$0xf]
    %v3877 = vld [vmem:[#allocation14 + $0x148] sm:$0xf]
    %v3878 = vld [vmem:[#allocation14 + $0x14c] sm:$0xf]
    %v3879 = vld [vmem:[#allocation14 + $0x150] sm:$0xf]
    %v3880 = vld [vmem:[#allocation14 + $0x154] sm:$0xf]
    %v3881 = vld [vmem:[#allocation14 + $0x158] sm:$0xf]
    %v3882 = vld [vmem:[#allocation14 + $0x15c] sm:$0xf]
    %v3883 = vld [vmem:[#allocation14 + $0x160] sm:$0xf]
    %v3884 = vld [vmem:[#allocation14 + $0x164] sm:$0xf]
    %v3885 = vld [vmem:[#allocation14 + $0x168] sm:$0xf]
    %v3886 = vld [vmem:[#allocation14 + $0x16c] sm:$0xf]
    %v3887 = vld [vmem:[#allocation14 + $0x170] sm:$0xf]
    %v3888 = vld [vmem:[#allocation14 + $0x174] sm:$0xf]
    %v3889 = vld [vmem:[#allocation14 + $0x178] sm:$0xf]
    %v3890 = vld [vmem:[#allocation14 + $0x17c] sm:$0xf]
    %v3891 = vld [vmem:[#allocation14 + $0x180] sm:$0xf]
    %v3892 = vld [vmem:[#allocation14 + $0x184] sm:$0xf]
    %v3893 = vld [vmem:[#allocation14 + $0x188] sm:$0xf]
    %v3894 = vld [vmem:[#allocation14 + $0x18c] sm:$0xf]
    %v3895 = vld [vmem:[#allocation14 + $0x190] sm:$0xf]
    %v3896 = vld [vmem:[#allocation14 + $0x194] sm:$0xf]
    %v3897 = vld [vmem:[#allocation14 + $0x198] sm:$0xf]
    %v3898 = vld [vmem:[#allocation14 + $0x19c] sm:$0xf]
    %v3899 = vld [vmem:[#allocation14 + $0x1a0] sm:$0xf]
    %v3900 = vld [vmem:[#allocation14 + $0x1a4] sm:$0xf]
    %v3901 = vld [vmem:[#allocation14 + $0x1a8] sm:$0xf]
    %v3902 = vld [vmem:[#allocation14 + $0x1ac] sm:$0xf]
    %v3903 = vld [vmem:[#allocation14 + $0x1b0] sm:$0xf]
    %v3904 = vld [vmem:[#allocation14 + $0x1b4] sm:$0xf]
    %v3905 = vld [vmem:[#allocation14 + $0x1b8] sm:$0xf]
    %v3906 = vld [vmem:[#allocation14 + $0x1bc] sm:$0xf]
    %v3907 = vld [vmem:[#allocation14 + $0x1c0] sm:$0xf]
    %v3908 = vld [vmem:[#allocation14 + $0x1c4] sm:$0xf]
    %v3909 = vld [vmem:[#allocation14 + $0x1c8] sm:$0xf]
    %v3910 = vld [vmem:[#allocation14 + $0x1cc] sm:$0xf]
    %v3911 = vld [vmem:[#allocation14 + $0x1d0] sm:$0xf]
    %v3912 = vld [vmem:[#allocation14 + $0x1d4] sm:$0xf]
    %v3913 = vld [vmem:[#allocation14 + $0x1d8] sm:$0xf]
    %v3914 = vld [vmem:[#allocation14 + $0x1dc] sm:$0xf]
    %v3915 = vld [vmem:[#allocation14 + $0x1e0] sm:$0xf]
    %v3916 = vld [vmem:[#allocation14 + $0x1e4] sm:$0xf]
    %v3917 = vld [vmem:[#allocation14 + $0x1e8] sm:$0xf]
    %v3918 = vld [vmem:[#allocation14 + $0x1ec] sm:$0xf]
    %v3919 = vld [vmem:[#allocation14 + $0x1f0] sm:$0xf]
    %v3920 = vld [vmem:[#allocation14 + $0x1f4] sm:$0xf]
    %v3921 = vld [vmem:[#allocation14 + $0x1f8] sm:$0xf]
    %v3922 = vld [vmem:[#allocation14 + $0x1fc] sm:$0xf]
    %v3923 = vld [vmem:[%s8] sm:$0x1]
    %v3925 = vlaneseq
    %v3926 = vshrl.u32 %v3925, 7
    %v3927 = vsub.s32 0, %v3926
    %v3928 = vrot.slane %v3923, %v3927
    %v4058 = vunpack.c.l.b16 %v3795
    %v4059 = vunpack.c.l.b16 %v3796
    %v4060 = vunpack.c.l.b16 %v3797
    %v4061 = vunpack.c.l.b16 %v3798
    %v4062 = vunpack.c.l.b16 %v3799
    %v4063 = vunpack.c.l.b16 %v3800
    %v4064 = vunpack.c.l.b16 %v3801
    %v4065 = vunpack.c.l.b16 %v3802
    %v4066 = vunpack.c.l.b16 %v3803
    %v4067 = vunpack.c.l.b16 %v3804
    %v4068 = vunpack.c.l.b16 %v3805
    %v4069 = vunpack.c.l.b16 %v3806
    %v4070 = vunpack.c.l.b16 %v3807
    %v4071 = vunpack.c.l.b16 %v3808
    %v4072 = vunpack.c.l.b16 %v3809
    %v4073 = vunpack.c.l.b16 %v3810
    %v4074 = vunpack.c.l.b16 %v3811
    %v4075 = vunpack.c.l.b16 %v3812
    %v4076 = vunpack.c.l.b16 %v3813
    %v4077 = vunpack.c.l.b16 %v3814
    %v4078 = vunpack.c.l.b16 %v3815
    %v4079 = vunpack.c.l.b16 %v3816
    %v4080 = vunpack.c.l.b16 %v3817
    %v4081 = vunpack.c.l.b16 %v3818
    %v4082 = vunpack.c.l.b16 %v3819
    %v4083 = vunpack.c.l.b16 %v3820
    %v4084 = vunpack.c.l.b16 %v3821
    %v4085 = vunpack.c.l.b16 %v3822
    %v4086 = vunpack.c.l.b16 %v3823
    %v4087 = vunpack.c.l.b16 %v3824
    %v4088 = vunpack.c.l.b16 %v3825
    %v4089 = vunpack.c.l.b16 %v3826
    %v4090 = vunpack.c.l.b16 %v3827
    %v4091 = vunpack.c.l.b16 %v3828
    %v4092 = vunpack.c.l.b16 %v3829
    %v4093 = vunpack.c.l.b16 %v3830
    %v4094 = vunpack.c.l.b16 %v3831
    %v4095 = vunpack.c.l.b16 %v3832
    %v4096 = vunpack.c.l.b16 %v3833
    %v4097 = vunpack.c.l.b16 %v3834
    %v4098 = vunpack.c.l.b16 %v3835
    %v4099 = vunpack.c.l.b16 %v3836
    %v4100 = vunpack.c.l.b16 %v3837
    %v4101 = vunpack.c.l.b16 %v3838
    %v4102 = vunpack.c.l.b16 %v3839
    %v4103 = vunpack.c.l.b16 %v3840
    %v4104 = vunpack.c.l.b16 %v3841
    %v4105 = vunpack.c.l.b16 %v3842
    %v4106 = vunpack.c.l.b16 %v3843
    %v4107 = vunpack.c.l.b16 %v3844
    %v4108 = vunpack.c.l.b16 %v3845
    %v4109 = vunpack.c.l.b16 %v3846
    %v4110 = vunpack.c.l.b16 %v3847
    %v4111 = vunpack.c.l.b16 %v3848
    %v4112 = vunpack.c.l.b16 %v3849
    %v4113 = vunpack.c.l.b16 %v3850
    %v4114 = vunpack.c.l.b16 %v3851
    %v4115 = vunpack.c.l.b16 %v3852
    %v4116 = vunpack.c.l.b16 %v3853
    %v4117 = vunpack.c.l.b16 %v3854
    %v4118 = vunpack.c.l.b16 %v3855
    %v4119 = vunpack.c.l.b16 %v3856
    %v4120 = vunpack.c.l.b16 %v3857
    %v4121 = vunpack.c.l.b16 %v3858
    %v4122 = vunpack.c.l.b16 %v3859
    %v4123 = vunpack.c.l.b16 %v3860
    %v4124 = vunpack.c.l.b16 %v3861
    %v4125 = vunpack.c.l.b16 %v3862
    %v4126 = vunpack.c.l.b16 %v3863
    %v4127 = vunpack.c.l.b16 %v3864
    %v4128 = vunpack.c.l.b16 %v3865
    %v4129 = vunpack.c.l.b16 %v3866
    %v4130 = vunpack.c.l.b16 %v3867
    %v4131 = vunpack.c.l.b16 %v3868
    %v4132 = vunpack.c.l.b16 %v3869
    %v4133 = vunpack.c.l.b16 %v3870
    %v4134 = vunpack.c.l.b16 %v3871
    %v4135 = vunpack.c.l.b16 %v3872
    %v4136 = vunpack.c.l.b16 %v3873
    %v4137 = vunpack.c.l.b16 %v3874
    %v4138 = vunpack.c.l.b16 %v3875
    %v4139 = vunpack.c.l.b16 %v3876
    %v4140 = vunpack.c.l.b16 %v3877
    %v4141 = vunpack.c.l.b16 %v3878
    %v4142 = vunpack.c.l.b16 %v3879
    %v4143 = vunpack.c.l.b16 %v3880
    %v4144 = vunpack.c.l.b16 %v3881
    %v4145 = vunpack.c.l.b16 %v3882
    %v4146 = vunpack.c.l.b16 %v3883
    %v4147 = vunpack.c.l.b16 %v3884
    %v4148 = vunpack.c.l.b16 %v3885
    %v4149 = vunpack.c.l.b16 %v3886
    %v4150 = vunpack.c.l.b16 %v3887
    %v4151 = vunpack.c.l.b16 %v3888
    %v4152 = vunpack.c.l.b16 %v3889
    %v4153 = vunpack.c.l.b16 %v3890
    %v4154 = vunpack.c.l.b16 %v3891
    %v4155 = vunpack.c.l.b16 %v3892
    %v4156 = vunpack.c.l.b16 %v3893
    %v4157 = vunpack.c.l.b16 %v3894
    %v4158 = vunpack.c.l.b16 %v3895
    %v4159 = vunpack.c.l.b16 %v3896
    %v4160 = vunpack.c.l.b16 %v3897
    %v4161 = vunpack.c.l.b16 %v3898
    %v4162 = vunpack.c.l.b16 %v3899
    %v4163 = vunpack.c.l.b16 %v3900
    %v4164 = vunpack.c.l.b16 %v3901
    %v4165 = vunpack.c.l.b16 %v3902
    %v4166 = vunpack.c.l.b16 %v3903
    %v4167 = vunpack.c.l.b16 %v3904
    %v4168 = vunpack.c.l.b16 %v3905
    %v4169 = vunpack.c.l.b16 %v3906
    %v4170 = vunpack.c.l.b16 %v3907
    %v4171 = vunpack.c.l.b16 %v3908
    %v4172 = vunpack.c.l.b16 %v3909
    %v4173 = vunpack.c.l.b16 %v3910
    %v4174 = vunpack.c.l.b16 %v3911
    %v4175 = vunpack.c.l.b16 %v3912
    %v4176 = vunpack.c.l.b16 %v3913
    %v4177 = vunpack.c.l.b16 %v3914
    %v4178 = vunpack.c.l.b16 %v3915
    %v4179 = vunpack.c.l.b16 %v3916
    %v4180 = vunpack.c.l.b16 %v3917
    %v4181 = vunpack.c.l.b16 %v3918
    %v4182 = vunpack.c.l.b16 %v3919
    %v4183 = vunpack.c.l.b16 %v3920
    %v4184 = vunpack.c.l.b16 %v3921
    %v4185 = vunpack.c.l.b16 %v3922
    %v4186 = vpack.c.b16 %v4059, %v4058
    %v4187 = vpack.c.b16 %v4061, %v4060
    %v4188 = vpack.c.b16 %v4063, %v4062
    %v4189 = vpack.c.b16 %v4065, %v4064
    %v4190 = vpack.c.b16 %v4067, %v4066
    %v4191 = vpack.c.b16 %v4069, %v4068
    %v4192 = vpack.c.b16 %v4071, %v4070
    %v4193 = vpack.c.b16 %v4073, %v4072
    %v4194 = vpack.c.b16 %v4075, %v4074
    %v4195 = vpack.c.b16 %v4077, %v4076
    %v4196 = vpack.c.b16 %v4079, %v4078
    %v4197 = vpack.c.b16 %v4081, %v4080
    %v4198 = vpack.c.b16 %v4083, %v4082
    %v4199 = vpack.c.b16 %v4085, %v4084
    %v4200 = vpack.c.b16 %v4087, %v4086
    %v4201 = vpack.c.b16 %v4089, %v4088
    %v4202 = vpack.c.b16 %v4091, %v4090
    %v4203 = vpack.c.b16 %v4093, %v4092
    %v4204 = vpack.c.b16 %v4095, %v4094
    %v4205 = vpack.c.b16 %v4097, %v4096
    %v4206 = vpack.c.b16 %v4099, %v4098
    %v4207 = vpack.c.b16 %v4101, %v4100
    %v4208 = vpack.c.b16 %v4103, %v4102
    %v4209 = vpack.c.b16 %v4105, %v4104
    %v4210 = vpack.c.b16 %v4107, %v4106
    %v4211 = vpack.c.b16 %v4109, %v4108
    %v4212 = vpack.c.b16 %v4111, %v4110
    %v4213 = vpack.c.b16 %v4113, %v4112
    %v4214 = vpack.c.b16 %v4115, %v4114
    %v4215 = vpack.c.b16 %v4117, %v4116
    %v4216 = vpack.c.b16 %v4119, %v4118
    %v4217 = vpack.c.b16 %v4121, %v4120
    %v4218 = vpack.c.b16 %v4123, %v4122
    %v4219 = vpack.c.b16 %v4125, %v4124
    %v4220 = vpack.c.b16 %v4127, %v4126
    %v4221 = vpack.c.b16 %v4129, %v4128
    %v4222 = vpack.c.b16 %v4131, %v4130
    %v4223 = vpack.c.b16 %v4133, %v4132
    %v4224 = vpack.c.b16 %v4135, %v4134
    %v4225 = vpack.c.b16 %v4137, %v4136
    %v4226 = vpack.c.b16 %v4139, %v4138
    %v4227 = vpack.c.b16 %v4141, %v4140
    %v4228 = vpack.c.b16 %v4143, %v4142
    %v4229 = vpack.c.b16 %v4145, %v4144
    %v4230 = vpack.c.b16 %v4147, %v4146
    %v4231 = vpack.c.b16 %v4149, %v4148
    %v4232 = vpack.c.b16 %v4151, %v4150
    %v4233 = vpack.c.b16 %v4153, %v4152
    %v4234 = vpack.c.b16 %v4155, %v4154
    %v4235 = vpack.c.b16 %v4157, %v4156
    %v4236 = vpack.c.b16 %v4159, %v4158
    %v4237 = vpack.c.b16 %v4161, %v4160
    %v4238 = vpack.c.b16 %v4163, %v4162
    %v4239 = vpack.c.b16 %v4165, %v4164
    %v4240 = vpack.c.b16 %v4167, %v4166
    %v4241 = vpack.c.b16 %v4169, %v4168
    %v4242 = vpack.c.b16 %v4171, %v4170
    %v4243 = vpack.c.b16 %v4173, %v4172
    %v4244 = vpack.c.b16 %v4175, %v4174
    %v4245 = vpack.c.b16 %v4177, %v4176
    %v4246 = vpack.c.b16 %v4179, %v4178
    %v4247 = vpack.c.b16 %v4181, %v4180
    %v4248 = vpack.c.b16 %v4183, %v4182
    %v4249 = vpack.c.b16 %v4185, %v4184
    %4314 = vmatprep.subr.bf16.mxu0 0
    %4315 = vmatpush1.bf16.msra.mxu0 %v4193
    %4316 = vmatprep.subr.bf16.mxu0 0
    %4317 = vmatpush1.bf16.msra.mxu0 %v4192
    %4318 = vmatprep.subr.bf16.mxu0 0
    %4319 = vmatpush1.bf16.msra.mxu0 %v4191
    %4320 = vmatprep.subr.bf16.mxu0 0
    %4321 = vmatpush1.bf16.msra.mxu0 %v4190
    %4322 = vmatprep.subr.bf16.mxu0 0
    %4323 = vmatpush1.bf16.msra.mxu0 %v4189
    %4324 = vmatprep.subr.bf16.mxu0 0
    %4325 = vmatpush1.bf16.msra.mxu0 %v4188
    %4326 = vmatprep.subr.bf16.mxu0 0
    %4327 = vmatpush1.bf16.msra.mxu0 %v4187
    %4328 = vmatprep.subr.bf16.mxu0 0
    %4329 = vmatpush1.bf16.msra.mxu0 %v4186
    %4330 = vmatprep.subr.bf16.mxu0 0
    %4331 = vmatpush2.bf16.msra.mxu0 %v4201
    %4332 = vmatprep.subr.bf16.mxu0 0
    %4333 = vmatpush2.bf16.msra.mxu0 %v4200
    %4334 = vmatprep.subr.bf16.mxu0 0
    %4335 = vmatpush2.bf16.msra.mxu0 %v4199
    %4336 = vmatprep.subr.bf16.mxu0 0
    %4337 = vmatpush2.bf16.msra.mxu0 %v4198
    %4338 = vmatprep.subr.bf16.mxu0 0
    %4339 = vmatpush2.bf16.msra.mxu0 %v4197
    %4340 = vmatprep.subr.bf16.mxu0 0
    %4341 = vmatpush2.bf16.msra.mxu0 %v4196
    %4342 = vmatprep.subr.bf16.mxu0 0
    %4343 = vmatpush2.bf16.msra.mxu0 %v4195
    %4344 = vmatprep.subr.bf16.mxu0 0
    %4345 = vmatpush2.bf16.msra.mxu0 %v4194
    %4346 = vmatprep.mubr.bf16.mxu0 %v3788
    %4347 = vmatmul.mubr.bf16.gmra.mxu0 %v3787
    %v4348 = vpop.f32.mrf.mxu0
    %v4349 = vadd.f32 %v3928, %v4348
    %v4350 = vpop.f32.mrf.mxu0
    %v4351 = vpop.f32.mrf.mxu0
    %v4352 = vpop.f32.mrf.mxu0
    %4353 = vdwg.mxu0
    %4354 = vmatprep.subr.bf16.mxu0 0
    %4355 = vmatpush1.bf16.msra.mxu0 %v4209
    %4356 = vmatprep.subr.bf16.mxu0 0
    %4357 = vmatpush1.bf16.msra.mxu0 %v4208
    %4358 = vmatprep.subr.bf16.mxu0 0
    %4359 = vmatpush1.bf16.msra.mxu0 %v4207
    %4360 = vmatprep.subr.bf16.mxu0 0
    %4361 = vmatpush1.bf16.msra.mxu0 %v4206
    %4362 = vmatprep.subr.bf16.mxu0 0
    %4363 = vmatpush1.bf16.msra.mxu0 %v4205
    %4364 = vmatprep.subr.bf16.mxu0 0
    %4365 = vmatpush1.bf16.msra.mxu0 %v4204
    %4366 = vmatprep.subr.bf16.mxu0 0
    %4367 = vmatpush1.bf16.msra.mxu0 %v4203
    %4368 = vmatprep.subr.bf16.mxu0 0
    %4369 = vmatpush1.bf16.msra.mxu0 %v4202
    %4370 = vmatprep.subr.bf16.mxu0 0
    %4371 = vmatpush2.bf16.msra.mxu0 %v4217
    %4372 = vmatprep.subr.bf16.mxu0 0
    %4373 = vmatpush2.bf16.msra.mxu0 %v4216
    %4374 = vmatprep.subr.bf16.mxu0 0
    %4375 = vmatpush2.bf16.msra.mxu0 %v4215
    %4376 = vmatprep.subr.bf16.mxu0 0
    %4377 = vmatpush2.bf16.msra.mxu0 %v4214
    %4378 = vmatprep.subr.bf16.mxu0 0
    %4379 = vmatpush2.bf16.msra.mxu0 %v4213
    %4380 = vmatprep.subr.bf16.mxu0 0
    %4381 = vmatpush2.bf16.msra.mxu0 %v4212
    %4382 = vmatprep.subr.bf16.mxu0 0
    %4383 = vmatpush2.bf16.msra.mxu0 %v4211
    %4384 = vmatprep.subr.bf16.mxu0 0
    %4385 = vmatpush2.bf16.msra.mxu0 %v4210
    %4386 = vmatprep.mubr.bf16.mxu0 %v3790
    %4387 = vmatmul.mubr.bf16.gmra.mxu0 %v3789
    %v4388 = vpop.f32.mrf.mxu0
    %v4389 = vadd.f32 %v4349, %v4388
    %v4390 = vpop.f32.mrf.mxu0
    %v4391 = vpop.f32.mrf.mxu0
    %v4392 = vpop.f32.mrf.mxu0
    %4393 = vdwg.mxu0
    %4394 = vmatprep.subr.bf16.mxu0 0
    %4395 = vmatpush1.bf16.msra.mxu0 %v4225
    %4396 = vmatprep.subr.bf16.mxu0 0
    %4397 = vmatpush1.bf16.msra.mxu0 %v4224
    %4398 = vmatprep.subr.bf16.mxu0 0
    %4399 = vmatpush1.bf16.msra.mxu0 %v4223
    %4400 = vmatprep.subr.bf16.mxu0 0
    %4401 = vmatpush1.bf16.msra.mxu0 %v4222
    %4402 = vmatprep.subr.bf16.mxu0 0
    %4403 = vmatpush1.bf16.msra.mxu0 %v4221
    %4404 = vmatprep.subr.bf16.mxu0 0
    %4405 = vmatpush1.bf16.msra.mxu0 %v4220
    %4406 = vmatprep.subr.bf16.mxu0 0
    %4407 = vmatpush1.bf16.msra.mxu0 %v4219
    %4408 = vmatprep.subr.bf16.mxu0 0
    %4409 = vmatpush1.bf16.msra.mxu0 %v4218
    %4410 = vmatprep.subr.bf16.mxu0 0
    %4411 = vmatpush2.bf16.msra.mxu0 %v4233
    %4412 = vmatprep.subr.bf16.mxu0 0
    %4413 = vmatpush2.bf16.msra.mxu0 %v4232
    %4414 = vmatprep.subr.bf16.mxu0 0
    %4415 = vmatpush2.bf16.msra.mxu0 %v4231
    %4416 = vmatprep.subr.bf16.mxu0 0
    %4417 = vmatpush2.bf16.msra.mxu0 %v4230
    %4418 = vmatprep.subr.bf16.mxu0 0
    %4419 = vmatpush2.bf16.msra.mxu0 %v4229
    %4420 = vmatprep.subr.bf16.mxu0 0
    %4421 = vmatpush2.bf16.msra.mxu0 %v4228
    %4422 = vmatprep.subr.bf16.mxu0 0
    %4423 = vmatpush2.bf16.msra.mxu0 %v4227
    %4424 = vmatprep.subr.bf16.mxu0 0
    %4425 = vmatpush2.bf16.msra.mxu0 %v4226
    %4426 = vmatprep.mubr.bf16.mxu0 %v3792
    %4427 = vmatmul.mubr.bf16.gmra.mxu0 %v3791
    %v4428 = vpop.f32.mrf.mxu0
    %v4429 = vadd.f32 %v4389, %v4428
    %v4430 = vpop.f32.mrf.mxu0
    %v4431 = vpop.f32.mrf.mxu0
    %v4432 = vpop.f32.mrf.mxu0
    %4433 = vdwg.mxu0
    %4434 = vmatprep.subr.bf16.mxu0 0
    %4435 = vmatpush1.bf16.msra.mxu0 %v4241
    %4436 = vmatprep.subr.bf16.mxu0 0
    %4437 = vmatpush1.bf16.msra.mxu0 %v4240
    %4438 = vmatprep.subr.bf16.mxu0 0
    %4439 = vmatpush1.bf16.msra.mxu0 %v4239
    %4440 = vmatprep.subr.bf16.mxu0 0
    %4441 = vmatpush1.bf16.msra.mxu0 %v4238
    %4442 = vmatprep.subr.bf16.mxu0 0
    %4443 = vmatpush1.bf16.msra.mxu0 %v4237
    %4444 = vmatprep.subr.bf16.mxu0 0
    %4445 = vmatpush1.bf16.msra.mxu0 %v4236
    %4446 = vmatprep.subr.bf16.mxu0 0
    %4447 = vmatpush1.bf16.msra.mxu0 %v4235
    %4448 = vmatprep.subr.bf16.mxu0 0
    %4449 = vmatpush1.bf16.msra.mxu0 %v4234
    %4450 = vmatprep.subr.bf16.mxu0 0
    %4451 = vmatpush2.bf16.msra.mxu0 %v4249
    %4452 = vmatprep.subr.bf16.mxu0 0
    %4453 = vmatpush2.bf16.msra.mxu0 %v4248
    %4454 = vmatprep.subr.bf16.mxu0 0
    %4455 = vmatpush2.bf16.msra.mxu0 %v4247
    %4456 = vmatprep.subr.bf16.mxu0 0
    %4457 = vmatpush2.bf16.msra.mxu0 %v4246
    %4458 = vmatprep.subr.bf16.mxu0 0
    %4459 = vmatpush2.bf16.msra.mxu0 %v4245
    %4460 = vmatprep.subr.bf16.mxu0 0
    %4461 = vmatpush2.bf16.msra.mxu0 %v4244
    %4462 = vmatprep.subr.bf16.mxu0 0
    %4463 = vmatpush2.bf16.msra.mxu0 %v4243
    %4464 = vmatprep.subr.bf16.mxu0 0
    %4465 = vmatpush2.bf16.msra.mxu0 %v4242
    %4466 = vmatprep.mubr.bf16.mxu0 %v3794
    %4467 = vmatmul.mubr.bf16.gmra.mxu0 %v3793
    %v4468 = vpop.f32.mrf.mxu0
    %v4469 = vadd.f32 %v4429, %v4468
    %v4470 = vpop.f32.mrf.mxu0
    %v4471 = vpop.f32.mrf.mxu0
    %v4472 = vpop.f32.mrf.mxu0
    %4473 = vdwg.mxu0
    %vm4474 = vcmask 64512
    %v4475 = vsel %vm4474, %v4469, 0.0
    %4476 = vadd.xlane.f32.xlu0 %v4475
    %v4477 = vpop.xlane.xlu0 %4476
    %v4478 = vrcp.pop 8.0
    %v4479 = vmul.f32 %v4477, %v4478
    %v4480 = vsub.f32 %v4469, %v4479
    %4482 = vset.pattern.permute.xlu0 8
    %4483 = vperm.xlu0 %4482, %v4469
    %v4484 = vpop.permute.xlu0 %4483
    %v4486 = vadd.f32 %v4480, %v4484
    %4487 = vst.msk [vmem:[#allocation16] sm:$0xff] %vm4474, %v4486
    // Predicated region
    $region70: #{q_network_forward.1} parent=1 // pred_check
      _
    $region71: #{q_network_forward.1} parent=1 // pred_check_branch
      %4489 = sbr.rel (0) target = $region73
    $region72: #{q_network_forward.1} parent=1 // pred_region
      %s4491 = ssub.s32 128, 128
      %4492 = vsyncadd [#allocation4], %s4491
      %s4494 = sshll.u32 [#allocation16], 4
      %s4495 = int_to_ptr.vmem [resolvable:$true] %s4494
      %4497 = dma.vmem_to_hbm [thread:$0]  %s4495, 128, %s9, [#allocation4]
    $region73: #{q_network_forward.1} parent=1 // pred_fallthru
      _
    // Predicated region
    $region74: #{q_network_forward.1} parent=1 // pred_check
      _
    $region75: #{q_network_forward.1} parent=1 // pred_check_branch
      %4499 = sbr.rel (0) target = $region77
    $region76: #{q_network_forward.1} parent=1 // pred_region
      %4500 = dma.done [#allocation4], 128
    $region77: #{q_network_forward.1} parent=1 // pred_fallthru
      _
    %4501 = vsyncpa [#allocation3], 1
    %4502 = vsyncpa [#allocation6], 1
    %4503 = vsyncpa [#allocation9], 1
    %4504 = vsyncpa [#allocation12], 1
    %4505 = vsyncpa [#allocation15], 1
    %4506 = vsyncpa [#allocation4], 1

</llo_original>
